<compile_context>
chip_gen: v6e
topology: v6e:2x2x1
jax: 0.10.0
libtpu: 0.0.40
codegen_flags: <defaults>
</compile_context>

<pallas_src>
import math
import numpy as np
import jax
import jax.numpy as jnp
from jax.experimental import pallas as pl
from jax.experimental.pallas import tpu as pltpu


# ----------------------------------------------------------------------------
# Pallas kernel
# ----------------------------------------------------------------------------
def fflstm_kernel(x_ref,                       # (T*BP, I) bf16, time-major rows
                  win_ref, bin_ref,            # (I, 8*HP) bf16, (1, 8*HP) f32
                  whht_ref, whhf_ref,          # (HP, 4*HP) bf16 each
                  w1_ref, b1_ref, w2_ref, b2_ref, w3_ref, b3_ref,
                  out_ref,                     # (BP, I) f32
                  proj_ref):                   # scratch (T*BP, 8*HP) f32
    TB = x_ref.shape[0]
    BP = out_ref.shape[0]                      # batch padded to a sublane tile
    T = TB // BP
    HP = whht_ref.shape[0]                     # padded gate slab width (128-aligned)
    G = 4 * HP

    # One MXU matmul produces every per-step input projection (time + freq
    # gates for all T steps); bias added exactly once.  Parked in VMEM scratch
    # so it is not live across the unrolled recurrent loops.
    proj_ref[...] = (jnp.dot(x_ref[...], win_ref[...],
                             preferred_element_type=jnp.float32)
                     + bin_ref[...])

    whh_t = whht_ref[...]
    whh_f = whhf_ref[...]

    def sigmoid(v):
        # exp on the EUP + approx reciprocal (EUP slot); avoids the exact
        # divide on the serial chain.  Gate pre-activations are O(1), no
        # overflow risk in exp(-v).
        return pl.reciprocal(1.0 + jnp.exp(-v), approx=True)

    def cell(gx, h, c, whh):
        # gx already contains x_t @ wih + bias; only the recurrent matmul is
        # on the serial critical path.  bf16 LHS/RHS, f32 accumulate.
        gates = gx + jnp.dot(h.astype(jnp.bfloat16), whh,
                             preferred_element_type=jnp.float32)
        # PyTorch gate order (i, f, g, o); each gate lives in its own
        # 128-lane-aligned slab -> slices are free views.
        i = sigmoid(gates[:, 0 * HP:1 * HP])
        f = sigmoid(gates[:, 1 * HP:2 * HP])
        g = jnp.tanh(gates[:, 2 * HP:3 * HP])
        o = sigmoid(gates[:, 3 * HP:4 * HP])
        c_new = f * c + i * g
        h_new = o * jnp.tanh(c_new)
        return h_new, c_new

    h = jnp.zeros((BP, HP), jnp.float32)       # torch default zero init
    c = jnp.zeros((BP, HP), jnp.float32)
    # Padded-lane invariant: with zero init and zero-padded weights/bias the
    # padded lanes of h/c stay exactly 0 (g = tanh(0) = 0), and w1's padded
    # rows are zero, so padding never leaks into the head.

    # ---- time LSTM over T steps (T small & static -> unrolled;
    #      per-step slices are (8,128)-tile-aligned free views) ----
    for t in range(T):
        h, c = cell(proj_ref[t * BP:(t + 1) * BP, 0:G], h, c, whh_t)

    # ---- freq LSTM (DFT + fft_converter pre-folded into the projection),
    #      initial state = (hn_1, cn_1) carried over from the time LSTM ----
    for t in range(T):
        h, c = cell(proj_ref[t * BP:(t + 1) * BP, G:2 * G], h, c, whh_f)

    # ---- FC head applied to out_2[:, -1, :] == h (off the serial chain,
    #      exact sigmoid kept for the final outputs) ----
    z = jax.nn.sigmoid(
        jnp.dot(h.astype(jnp.bfloat16), w1_ref[...],
                preferred_element_type=jnp.float32) + b1_ref[...])
    z = jnp.tanh(
        jnp.dot(z.astype(jnp.bfloat16), w2_ref[...],
                preferred_element_type=jnp.float32) + b2_ref[...])
    z = jax.nn.sigmoid(
        jnp.dot(z.astype(jnp.bfloat16), w3_ref[...],
                preferred_element_type=jnp.float32) + b3_ref[...])
    out_ref[...] = z.astype(out_ref.dtype)


def fflstm_forward(x, fused):
    """x: (B, T, I) f32; fused: pre-folded/padded params. Returns (B, I) f32."""
    B, T, I = x.shape
    BP = -(-B // 8) * 8                         # batch padded to one sublane tile
    HP = fused["whh_t"].shape[0]

    # time-major rows, batch padded with zero rows -> step t is the contiguous,
    # tile-aligned row block [t*BP, (t+1)*BP)
    xt = jnp.transpose(x, (1, 0, 2))            # (T, B, I)
    x_pad = jnp.zeros((T, BP, I), jnp.float32).at[:, :B, :].set(xt)
    x2d = x_pad.reshape(T * BP, I).astype(jnp.bfloat16)

    args = (x2d,
            fused["w_in"], fused["b_in"],
            fused["whh_t"], fused["whh_f"],
            fused["w1"], fused["b1"],
            fused["w2"], fused["b2"],
            fused["w3"], fused["b3"])
    vmem = pl.BlockSpec(memory_space=pltpu.MemorySpace.VMEM)
    # TODO(synk): for batches beyond one sublane tile, add a leading batch grid
    # axis with dimension_semantics=("parallel",) (uses v7x's 2nd TensorCore)
    # and stream x / the proj scratch with BlockSpecs once T*B outgrows VMEM.
    out = pl.pallas_call(
        fflstm_kernel,
        out_shape=jax.ShapeDtypeStruct((BP, I), jnp.float32),
        in_specs=[vmem] * len(args),
        out_specs=vmem,
        scratch_shapes=[pltpu.VMEM((T * BP, 8 * HP), jnp.float32)],
    )(*args)
    return out[:B]


# ----------------------------------------------------------------------------
# Host-side parameter preparation (exact float64 folding + 128-lane gate
# padding + bf16 quantization of weights; biases stay f32)
# ----------------------------------------------------------------------------
def prepare_fused_params(p, input_size, hidden_size, linear_size):
    I, H, L = input_size, hidden_size, linear_size
    HP = -(-H // 128) * 128                      # gate slab width (multiple of 128)

    f64 = lambda a: np.asarray(a, np.float64)

    # Fold DFT + fft_converter into the freq-LSTM input weights (exact, f64):
    #   conv = [cos | -sin] @ Wc + bc ;  conv @ wih_f == x @ wih_f_eff + b_f_eff
    w_fold = np.concatenate([f64(p["cosm"]), -f64(p["sinm"])], axis=1) @ f64(p["wc"])
    wih_f_eff = w_fold @ f64(p["wih_f"])                                  # (I, 4H)
    b_f_eff = f64(p["bc"]) @ f64(p["wih_f"]) + f64(p["b_f"])              # (1, 4H)

    def pad_gate_cols(w):
        # (rows, 4H) -> (rows, 4*HP); gate k occupies lanes [k*HP, k*HP+H), rest 0.
        out = np.zeros((w.shape[0], 4 * HP), np.float64)
        for g in range(4):
            out[:, g * HP:g * HP + H] = w[:, g * H:(g + 1) * H]
        return out

    def pad_rows(w, rows_to):
        out = np.zeros((rows_to, w.shape[1]), np.float64)
        out[:w.shape[0]] = w
        return out

    bf16 = lambda a: jnp.asarray(a, jnp.bfloat16)
    f32 = lambda a: jnp.asarray(a, jnp.float32)

    return {
        # combined input projection: [time gates | freq gates], (I, 8*HP)
        "w_in": bf16(np.concatenate([pad_gate_cols(f64(p["wih_t"])),
                                     pad_gate_cols(wih_f_eff)], axis=1)),
        "b_in": f32(np.concatenate([pad_gate_cols(f64(p["b_t"])),
                                    pad_gate_cols(b_f_eff)], axis=1)),
        "whh_t": bf16(pad_rows(pad_gate_cols(f64(p["whh_t"])), HP)),  # (HP, 4*HP)
        "whh_f": bf16(pad_rows(pad_gate_cols(f64(p["whh_f"])), HP)),
        "w1": bf16(pad_rows(f64(p["w1"]), HP)),   # rows >= H are zero
        "b1": f32(p["b1"]),
        "w2": bf16(p["w2"]), "b2": f32(p["b2"]),
        "w3": bf16(p["w3"]), "b3": f32(p["b3"]),
    }


# ----------------------------------------------------------------------------
# Raw (torch-layout, pre-transposed) parameters + pure-JAX reference
# ----------------------------------------------------------------------------
def make_params(key, input_size, hidden_size, linear_size):
    I, H, L = input_size, hidden_size, linear_size
    ks = jax.random.split(key, 16)

    def u(k, shape, bound):
        return jax.random.uniform(k, shape, jnp.float32, -bound, bound)

    kH = 1.0 / math.sqrt(H)
    params = {
        # LSTM weights pre-transposed: (in, 4H), (H, 4H); bias = b_ih + b_hh
        "wih_t": u(ks[0], (I, 4 * H), kH),
        "whh_t": u(ks[1], (H, 4 * H), kH),
        "b_t":   u(ks[2], (1, 4 * H), kH) + u(ks[3], (1, 4 * H), kH),
        "wih_f": u(ks[4], (I, 4 * H), kH),
        "whh_f": u(ks[5], (H, 4 * H), kH),
        "b_f":   u(ks[6], (1, 4 * H), kH) + u(ks[7], (1, 4 * H), kH),
        # fft_converter: Linear(2H, I)  (requires I == H, as in the torch module)
        "wc": u(ks[8], (2 * H, I), 1.0 / math.sqrt(2 * H)),
        "bc": u(ks[9], (1, I), 1.0 / math.sqrt(2 * H)),
        # FC head: Linear(H,L)->Sigmoid->Linear(L,L)->Tanh->Linear(L,I)->Sigmoid
        "w1": u(ks[10], (H, L), 1.0 / math.sqrt(H)),
        "b1": u(ks[11], (1, L), 1.0 / math.sqrt(H)),
        "w2": u(ks[12], (L, L), 1.0 / math.sqrt(L)),
        "b2": u(ks[13], (1, L), 1.0 / math.sqrt(L)),
        "w3": u(ks[14], (L, I), 1.0 / math.sqrt(L)),
        "b3": u(ks[15], (1, I), 1.0 / math.sqrt(L)),
    }
    n = jnp.arange(I, dtype=jnp.float32)
    ang = 2.0 * math.pi * jnp.outer(n, n) / I
    params["cosm"] = jnp.cos(ang)
    params["sinm"] = jnp.sin(ang)
    return params


def fflstm_reference(x, p):
    """Pure-JAX replica of FFLSTM.forward (dropout=0 / eval), f32 HIGHEST precision."""
    B, T, I = x.shape
    H = p["whh_t"].shape[0]
    hi = jax.lax.Precision.HIGHEST
    dot = lambda a, b: jnp.dot(a, b, precision=hi)

    def cell(x_t, h, c, wih, whh, b):
        gates = dot(x_t, wih) + dot(h, whh) + b
        i = jax.nn.sigmoid(gates[:, 0 * H:1 * H])
        f = jax.nn.sigmoid(gates[:, 1 * H:2 * H])
        g = jnp.tanh(gates[:, 2 * H:3 * H])
        o = jax.nn.sigmoid(gates[:, 3 * H:4 * H])
        c2 = f * c + i * g
        return o * jnp.tanh(c2), c2

    h = jnp.zeros((B, H), jnp.float32)
    c = jnp.zeros((B, H), jnp.float32)
    for t in range(T):
        h, c = cell(x[:, t, :], h, c, p["wih_t"], p["whh_t"], p["b_t"])

    re = dot(x, p["cosm"])
    im = -dot(x, p["sinm"])
    conv = dot(jnp.concatenate([re, im], axis=-1), p["wc"]) + p["bc"]
    for t in range(T):
        h, c = cell(conv[:, t, :], h, c, p["wih_f"], p["whh_f"], p["b_f"])

    z = jax.nn.sigmoid(dot(h, p["w1"]) + p["b1"])
    z = jnp.tanh(dot(z, p["w2"]) + p["b2"])
    z = jax.nn.sigmoid(dot(z, p["w3"]) + p["b3"])
    return z


if __name__ == "__main__":
    B, T = 2, 8
    INPUT_SIZE = 32          # must equal hidden size (fft_converter shape constraint)
    HIDDEN = 32
    LINEAR = 64

    key = jax.random.PRNGKey(0)
    kx, kp = jax.random.split(key)
    x = jax.random.normal(kx, (B, T, INPUT_SIZE), jnp.float32)
    params = make_params(kp, INPUT_SIZE, HIDDEN, LINEAR)
    fused = prepare_fused_params(params, INPUT_SIZE, HIDDEN, LINEAR)

    # padded-lane invariant guard: w1 rows >= HIDDEN must be exactly zero so the
    # (identically zero) padded h lanes cannot contaminate the FC head.
    assert float(jnp.max(jnp.abs(fused["w1"][HIDDEN:].astype(jnp.float32)))) == 0.0

    out = fflstm_forward(x, fused)
    out = jax.block_until_ready(out)

    assert out.shape == (B, INPUT_SIZE), out.shape
    assert bool(jnp.all(jnp.isfinite(out)))
    # final Sigmoid -> outputs must lie in (0, 1)
    assert bool(jnp.all((out > 0.0) & (out < 1.0)))

    # correctness vs. unfolded pure-JAX f32 reference of the original module
    # (tolerance widened from 2e-2 to 3e-2 to cover bf16 weight quantization)
    ref = fflstm_reference(x, params)
    max_err = float(jnp.max(jnp.abs(out - ref)))
    assert bool(jnp.allclose(out, ref, atol=3e-2, rtol=3e-2)), max_err

    print("KERNEL_OK")
</pallas_src>

<mosaic_0001>
module attributes {stable_mosaic.version = 11 : i64} {
  func.func @fflstm_kernel(%arg0: memref<64x32xbf16, #tpu.memory_space<vmem>>, %arg1: memref<32x1024xbf16, #tpu.memory_space<vmem>>, %arg2: memref<1x1024xf32, #tpu.memory_space<vmem>>, %arg3: memref<128x512xbf16, #tpu.memory_space<vmem>>, %arg4: memref<128x512xbf16, #tpu.memory_space<vmem>>, %arg5: memref<128x64xbf16, #tpu.memory_space<vmem>>, %arg6: memref<1x64xf32, #tpu.memory_space<vmem>>, %arg7: memref<64x64xbf16, #tpu.memory_space<vmem>>, %arg8: memref<1x64xf32, #tpu.memory_space<vmem>>, %arg9: memref<64x32xbf16, #tpu.memory_space<vmem>>, %arg10: memref<1x32xf32, #tpu.memory_space<vmem>>, %arg11: memref<8x32xf32, #tpu.memory_space<vmem>>, %arg12: memref<64x1024xf32, #tpu.memory_space<vmem>>) attributes {dimension_semantics = [], scalar_prefetch = 0 : i64, scratch_operands = 1 : i64, tpu.core_type = #tpu.core_type<tc>} {
    %c0 = arith.constant 0 : index
    %c0_0 = arith.constant 0 : index
    %0 = vector.load %arg0[%c0, %c0_0] : memref<64x32xbf16, #tpu.memory_space<vmem>>, vector<64x32xbf16>
    %c0_1 = arith.constant 0 : index
    %c0_2 = arith.constant 0 : index
    %1 = vector.load %arg1[%c0_1, %c0_2] : memref<32x1024xbf16, #tpu.memory_space<vmem>>, vector<32x1024xbf16>
    %cst = arith.constant dense<0.000000e+00> : vector<64x1024xf32>
    %2 = tpu.matmul %0, %1, %cst {dimension_numbers = #tpu.dot_dimension_numbers<[1], [0], [0], [1], [0, 0, 1, 1], [], []>} : vector<64x32xbf16>, vector<32x1024xbf16>, vector<64x1024xf32> -> vector<64x1024xf32>
    %c0_3 = arith.constant 0 : index
    %c0_4 = arith.constant 0 : index
    %3 = vector.load %arg2[%c0_3, %c0_4] : memref<1x1024xf32, #tpu.memory_space<vmem>>, vector<1x1024xf32>
    %4 = vector.broadcast %3 : vector<1x1024xf32> to vector<64x1024xf32>
    %5 = arith.addf %2, %4 : vector<64x1024xf32>
    %c0_5 = arith.constant 0 : index
    %c0_6 = arith.constant 0 : index
    %6 = vector.load %arg12[%c0_5, %c0_6] : memref<64x1024xf32, #tpu.memory_space<vmem>>, vector<64x1024xf32>
    tpu.vector_store %arg12[%c0_5, %c0_6], %5 {strides = array<i32>} : memref<64x1024xf32, #tpu.memory_space<vmem>>, vector<64x1024xf32>,
    %c0_7 = arith.constant 0 : index
    %c0_8 = arith.constant 0 : index
    %7 = vector.load %arg3[%c0_7, %c0_8] : memref<128x512xbf16, #tpu.memory_space<vmem>>, vector<128x512xbf16>
    %c0_9 = arith.constant 0 : index
    %c0_10 = arith.constant 0 : index
    %8 = vector.load %arg4[%c0_9, %c0_10] : memref<128x512xbf16, #tpu.memory_space<vmem>>, vector<128x512xbf16>
    %cst_11 = arith.constant 0.000000e+00 : f32
    %9 = vector.broadcast %cst_11 : f32 to vector<8x128xf32>
    %cst_12 = arith.constant 0.000000e+00 : f32
    %10 = vector.broadcast %cst_12 : f32 to vector<8x128xf32>
    %c0_13 = arith.constant 0 : index
    %c0_14 = arith.constant 0 : index
    %11 = vector.load %arg12[%c0_13, %c0_14] : memref<64x1024xf32, #tpu.memory_space<vmem>>, vector<8x512xf32>
    %12 = arith.truncf %9 : vector<8x128xf32> to vector<8x128xbf16>
    %cst_15 = arith.constant dense<0.000000e+00> : vector<8x512xf32>
    %13 = tpu.matmul %12, %7, %cst_15 {dimension_numbers = #tpu.dot_dimension_numbers<[1], [0], [0], [1], [0, 0, 1, 1], [], []>} : vector<8x128xbf16>, vector<128x512xbf16>, vector<8x512xf32> -> vector<8x512xf32>
    %14 = arith.addf %11, %13 : vector<8x512xf32>
    %15 = vector.extract_strided_slice %14 {offsets = [0, 0], sizes = [8, 128], strides = [1, 1]} : vector<8x512xf32> to vector<8x128xf32>
    %cst_16 = arith.constant 0.000000e+00 : f32
    %16 = vector.broadcast %cst_16 : f32 to vector<8x128xf32>
    %17 = arith.subf %16, %15 : vector<8x128xf32>
    %18 = math.exp %17 : vector<8x128xf32>
    %cst_17 = arith.constant 1.000000e+00 : f32
    %19 = vector.broadcast %cst_17 : f32 to vector<8x128xf32>
    %20 = arith.addf %19, %18 : vector<8x128xf32>
    %21 = tpu.reciprocal %20 {approx = true} : vector<8x128xf32> -> vector<8x128xf32>
    %22 = vector.extract_strided_slice %14 {offsets = [0, 128], sizes = [8, 128], strides = [1, 1]} : vector<8x512xf32> to vector<8x128xf32>
    %cst_18 = arith.constant 0.000000e+00 : f32
    %23 = vector.broadcast %cst_18 : f32 to vector<8x128xf32>
    %24 = arith.subf %23, %22 : vector<8x128xf32>
    %25 = math.exp %24 : vector<8x128xf32>
    %cst_19 = arith.constant 1.000000e+00 : f32
    %26 = vector.broadcast %cst_19 : f32 to vector<8x128xf32>
    %27 = arith.addf %26, %25 : vector<8x128xf32>
    %28 = tpu.reciprocal %27 {approx = true} : vector<8x128xf32> -> vector<8x128xf32>
    %29 = vector.extract_strided_slice %14 {offsets = [0, 256], sizes = [8, 128], strides = [1, 1]} : vector<8x512xf32> to vector<8x128xf32>
    %30 = math.tanh %29 : vector<8x128xf32>
    %31 = vector.extract_strided_slice %14 {offsets = [0, 384], sizes = [8, 128], strides = [1, 1]} : vector<8x512xf32> to vector<8x128xf32>
    %cst_20 = arith.constant 0.000000e+00 : f32
    %32 = vector.broadcast %cst_20 : f32 to vector<8x128xf32>
    %33 = arith.subf %32, %31 : vector<8x128xf32>
    %34 = math.exp %33 : vector<8x128xf32>
    %cst_21 = arith.constant 1.000000e+00 : f32
    %35 = vector.broadcast %cst_21 : f32 to vector<8x128xf32>
    %36 = arith.addf %35, %34 : vector<8x128xf32>
    %37 = tpu.reciprocal %36 {approx = true} : vector<8x128xf32> -> vector<8x128xf32>
    %38 = arith.mulf %28, %10 : vector<8x128xf32>
    %39 = arith.mulf %21, %30 : vector<8x128xf32>
    %40 = arith.addf %38, %39 : vector<8x128xf32>
    %41 = math.tanh %40 : vector<8x128xf32>
    %42 = arith.mulf %37, %41 : vector<8x128xf32>
    %c8 = arith.constant 8 : index
    %c0_22 = arith.constant 0 : index
    %43 = vector.load %arg12[%c8, %c0_22] : memref<64x1024xf32, #tpu.memory_space<vmem>>, vector<8x512xf32>
    %44 = arith.truncf %42 : vector<8x128xf32> to vector<8x128xbf16>
    %cst_23 = arith.constant dense<0.000000e+00> : vector<8x512xf32>
    %45 = tpu.matmul %44, %7, %cst_23 {dimension_numbers = #tpu.dot_dimension_numbers<[1], [0], [0], [1], [0, 0, 1, 1], [], []>} : vector<8x128xbf16>, vector<128x512xbf16>, vector<8x512xf32> -> vector<8x512xf32>
    %46 = arith.addf %43, %45 : vector<8x512xf32>
    %47 = vector.extract_strided_slice %46 {offsets = [0, 0], sizes = [8, 128], strides = [1, 1]} : vector<8x512xf32> to vector<8x128xf32>
    %cst_24 = arith.constant 0.000000e+00 : f32
    %48 = vector.broadcast %cst_24 : f32 to vector<8x128xf32>
    %49 = arith.subf %48, %47 : vector<8x128xf32>
    %50 = math.exp %49 : vector<8x128xf32>
    %cst_25 = arith.constant 1.000000e+00 : f32
    %51 = vector.broadcast %cst_25 : f32 to vector<8x128xf32>
    %52 = arith.addf %51, %50 : vector<8x128xf32>
    %53 = tpu.reciprocal %52 {approx = true} : vector<8x128xf32> -> vector<8x128xf32>
    %54 = vector.extract_strided_slice %46 {offsets = [0, 128], sizes = [8, 128], strides = [1, 1]} : vector<8x512xf32> to vector<8x128xf32>
    %cst_26 = arith.constant 0.000000e+00 : f32
    %55 = vector.broadcast %cst_26 : f32 to vector<8x128xf32>
    %56 = arith.subf %55, %54 : vector<8x128xf32>
    %57 = math.exp %56 : vector<8x128xf32>
    %cst_27 = arith.constant 1.000000e+00 : f32
    %58 = vector.broadcast %cst_27 : f32 to vector<8x128xf32>
    %59 = arith.addf %58, %57 : vector<8x128xf32>
    %60 = tpu.reciprocal %59 {approx = true} : vector<8x128xf32> -> vector<8x128xf32>
    %61 = vector.extract_strided_slice %46 {offsets = [0, 256], sizes = [8, 128], strides = [1, 1]} : vector<8x512xf32> to vector<8x128xf32>
    %62 = math.tanh %61 : vector<8x128xf32>
    %63 = vector.extract_strided_slice %46 {offsets = [0, 384], sizes = [8, 128], strides = [1, 1]} : vector<8x512xf32> to vector<8x128xf32>
    %cst_28 = arith.constant 0.000000e+00 : f32
    %64 = vector.broadcast %cst_28 : f32 to vector<8x128xf32>
    %65 = arith.subf %64, %63 : vector<8x128xf32>
    %66 = math.exp %65 : vector<8x128xf32>
    %cst_29 = arith.constant 1.000000e+00 : f32
    %67 = vector.broadcast %cst_29 : f32 to vector<8x128xf32>
    %68 = arith.addf %67, %66 : vector<8x128xf32>
    %69 = tpu.reciprocal %68 {approx = true} : vector<8x128xf32> -> vector<8x128xf32>
    %70 = arith.mulf %60, %40 : vector<8x128xf32>
    %71 = arith.mulf %53, %62 : vector<8x128xf32>
    %72 = arith.addf %70, %71 : vector<8x128xf32>
    %73 = math.tanh %72 : vector<8x128xf32>
    %74 = arith.mulf %69, %73 : vector<8x128xf32>
    %c16 = arith.constant 16 : index
    %c0_30 = arith.constant 0 : index
    %75 = vector.load %arg12[%c16, %c0_30] : memref<64x1024xf32, #tpu.memory_space<vmem>>, vector<8x512xf32>
    %76 = arith.truncf %74 : vector<8x128xf32> to vector<8x128xbf16>
    %cst_31 = arith.constant dense<0.000000e+00> : vector<8x512xf32>
    %77 = tpu.matmul %76, %7, %cst_31 {dimension_numbers = #tpu.dot_dimension_numbers<[1], [0], [0], [1], [0, 0, 1, 1], [], []>} : vector<8x128xbf16>, vector<128x512xbf16>, vector<8x512xf32> -> vector<8x512xf32>
    %78 = arith.addf %75, %77 : vector<8x512xf32>
    %79 = vector.extract_strided_slice %78 {offsets = [0, 0], sizes = [8, 128], strides = [1, 1]} : vector<8x512xf32> to vector<8x128xf32>
    %cst_32 = arith.constant 0.000000e+00 : f32
    %80 = vector.broadcast %cst_32 : f32 to vector<8x128xf32>
    %81 = arith.subf %80, %79 : vector<8x128xf32>
    %82 = math.exp %81 : vector<8x128xf32>
    %cst_33 = arith.constant 1.000000e+00 : f32
    %83 = vector.broadcast %cst_33 : f32 to vector<8x128xf32>
    %84 = arith.addf %83, %82 : vector<8x128xf32>
    %85 = tpu.reciprocal %84 {approx = true} : vector<8x128xf32> -> vector<8x128xf32>
    %86 = vector.extract_strided_slice %78 {offsets = [0, 128], sizes = [8, 128], strides = [1, 1]} : vector<8x512xf32> to vector<8x128xf32>
    %cst_34 = arith.constant 0.000000e+00 : f32
    %87 = vector.broadcast %cst_34 : f32 to vector<8x128xf32>
    %88 = arith.subf %87, %86 : vector<8x128xf32>
    %89 = math.exp %88 : vector<8x128xf32>
    %cst_35 = arith.constant 1.000000e+00 : f32
    %90 = vector.broadcast %cst_35 : f32 to vector<8x128xf32>
    %91 = arith.addf %90, %89 : vector<8x128xf32>
    %92 = tpu.reciprocal %91 {approx = true} : vector<8x128xf32> -> vector<8x128xf32>
    %93 = vector.extract_strided_slice %78 {offsets = [0, 256], sizes = [8, 128], strides = [1, 1]} : vector<8x512xf32> to vector<8x128xf32>
    %94 = math.tanh %93 : vector<8x128xf32>
    %95 = vector.extract_strided_slice %78 {offsets = [0, 384], sizes = [8, 128], strides = [1, 1]} : vector<8x512xf32> to vector<8x128xf32>
    %cst_36 = arith.constant 0.000000e+00 : f32
    %96 = vector.broadcast %cst_36 : f32 to vector<8x128xf32>
    %97 = arith.subf %96, %95 : vector<8x128xf32>
    %98 = math.exp %97 : vector<8x128xf32>
    %cst_37 = arith.constant 1.000000e+00 : f32
    %99 = vector.broadcast %cst_37 : f32 to vector<8x128xf32>
    %100 = arith.addf %99, %98 : vector<8x128xf32>
    %101 = tpu.reciprocal %100 {approx = true} : vector<8x128xf32> -> vector<8x128xf32>
    %102 = arith.mulf %92, %72 : vector<8x128xf32>
    %103 = arith.mulf %85, %94 : vector<8x128xf32>
    %104 = arith.addf %102, %103 : vector<8x128xf32>
    %105 = math.tanh %104 : vector<8x128xf32>
    %106 = arith.mulf %101, %105 : vector<8x128xf32>
    %c24 = arith.constant 24 : index
    %c0_38 = arith.constant 0 : index
    %107 = vector.load %arg12[%c24, %c0_38] : memref<64x1024xf32, #tpu.memory_space<vmem>>, vector<8x512xf32>
    %108 = arith.truncf %106 : vector<8x128xf32> to vector<8x128xbf16>
    %cst_39 = arith.constant dense<0.000000e+00> : vector<8x512xf32>
    %109 = tpu.matmul %108, %7, %cst_39 {dimension_numbers = #tpu.dot_dimension_numbers<[1], [0], [0], [1], [0, 0, 1, 1], [], []>} : vector<8x128xbf16>, vector<128x512xbf16>, vector<8x512xf32> -> vector<8x512xf32>
    %110 = arith.addf %107, %109 : vector<8x512xf32>
    %111 = vector.extract_strided_slice %110 {offsets = [0, 0], sizes = [8, 128], strides = [1, 1]} : vector<8x512xf32> to vector<8x128xf32>
    %cst_40 = arith.constant 0.000000e+00 : f32
    %112 = vector.broadcast %cst_40 : f32 to vector<8x128xf32>
    %113 = arith.subf %112, %111 : vector<8x128xf32>
    %114 = math.exp %113 : vector<8x128xf32>
    %cst_41 = arith.constant 1.000000e+00 : f32
    %115 = vector.broadcast %cst_41 : f32 to vector<8x128xf32>
    %116 = arith.addf %115, %114 : vector<8x128xf32>
    %117 = tpu.reciprocal %116 {approx = true} : vector<8x128xf32> -> vector<8x128xf32>
    %118 = vector.extract_strided_slice %110 {offsets = [0, 128], sizes = [8, 128], strides = [1, 1]} : vector<8x512xf32> to vector<8x128xf32>
    %cst_42 = arith.constant 0.000000e+00 : f32
    %119 = vector.broadcast %cst_42 : f32 to vector<8x128xf32>
    %120 = arith.subf %119, %118 : vector<8x128xf32>
    %121 = math.exp %120 : vector<8x128xf32>
    %cst_43 = arith.constant 1.000000e+00 : f32
    %122 = vector.broadcast %cst_43 : f32 to vector<8x128xf32>
    %123 = arith.addf %122, %121 : vector<8x128xf32>
    %124 = tpu.reciprocal %123 {approx = true} : vector<8x128xf32> -> vector<8x128xf32>
    %125 = vector.extract_strided_slice %110 {offsets = [0, 256], sizes = [8, 128], strides = [1, 1]} : vector<8x512xf32> to vector<8x128xf32>
    %126 = math.tanh %125 : vector<8x128xf32>
    %127 = vector.extract_strided_slice %110 {offsets = [0, 384], sizes = [8, 128], strides = [1, 1]} : vector<8x512xf32> to vector<8x128xf32>
    %cst_44 = arith.constant 0.000000e+00 : f32
    %128 = vector.broadcast %cst_44 : f32 to vector<8x128xf32>
    %129 = arith.subf %128, %127 : vector<8x128xf32>
    %130 = math.exp %129 : vector<8x128xf32>
    %cst_45 = arith.constant 1.000000e+00 : f32
    %131 = vector.broadcast %cst_45 : f32 to vector<8x128xf32>
    %132 = arith.addf %131, %130 : vector<8x128xf32>
    %133 = tpu.reciprocal %132 {approx = true} : vector<8x128xf32> -> vector<8x128xf32>
    %134 = arith.mulf %124, %104 : vector<8x128xf32>
    %135 = arith.mulf %117, %126 : vector<8x128xf32>
    %136 = arith.addf %134, %135 : vector<8x128xf32>
    %137 = math.tanh %136 : vector<8x128xf32>
    %138 = arith.mulf %133, %137 : vector<8x128xf32>
    %c32 = arith.constant 32 : index
    %c0_46 = arith.constant 0 : index
    %139 = vector.load %arg12[%c32, %c0_46] : memref<64x1024xf32, #tpu.memory_space<vmem>>, vector<8x512xf32>
    %140 = arith.truncf %138 : vector<8x128xf32> to vector<8x128xbf16>
    %cst_47 = arith.constant dense<0.000000e+00> : vector<8x512xf32>
    %141 = tpu.matmul %140, %7, %cst_47 {dimension_numbers = #tpu.dot_dimension_numbers<[1], [0], [0], [1], [0, 0, 1, 1], [], []>} : vector<8x128xbf16>, vector<128x512xbf16>, vector<8x512xf32> -> vector<8x512xf32>
    %142 = arith.addf %139, %141 : vector<8x512xf32>
    %143 = vector.extract_strided_slice %142 {offsets = [0, 0], sizes = [8, 128], strides = [1, 1]} : vector<8x512xf32> to vector<8x128xf32>
    %cst_48 = arith.constant 0.000000e+00 : f32
    %144 = vector.broadcast %cst_48 : f32 to vector<8x128xf32>
    %145 = arith.subf %144, %143 : vector<8x128xf32>
    %146 = math.exp %145 : vector<8x128xf32>
    %cst_49 = arith.constant 1.000000e+00 : f32
    %147 = vector.broadcast %cst_49 : f32 to vector<8x128xf32>
    %148 = arith.addf %147, %146 : vector<8x128xf32>
    %149 = tpu.reciprocal %148 {approx = true} : vector<8x128xf32> -> vector<8x128xf32>
    %150 = vector.extract_strided_slice %142 {offsets = [0, 128], sizes = [8, 128], strides = [1, 1]} : vector<8x512xf32> to vector<8x128xf32>
    %cst_50 = arith.constant 0.000000e+00 : f32
    %151 = vector.broadcast %cst_50 : f32 to vector<8x128xf32>
    %152 = arith.subf %151, %150 : vector<8x128xf32>
    %153 = math.exp %152 : vector<8x128xf32>
    %cst_51 = arith.constant 1.000000e+00 : f32
    %154 = vector.broadcast %cst_51 : f32 to vector<8x128xf32>
    %155 = arith.addf %154, %153 : vector<8x128xf32>
    %156 = tpu.reciprocal %155 {approx = true} : vector<8x128xf32> -> vector<8x128xf32>
    %157 = vector.extract_strided_slice %142 {offsets = [0, 256], sizes = [8, 128], strides = [1, 1]} : vector<8x512xf32> to vector<8x128xf32>
    %158 = math.tanh %157 : vector<8x128xf32>
    %159 = vector.extract_strided_slice %142 {offsets = [0, 384], sizes = [8, 128], strides = [1, 1]} : vector<8x512xf32> to vector<8x128xf32>
    %cst_52 = arith.constant 0.000000e+00 : f32
    %160 = vector.broadcast %cst_52 : f32 to vector<8x128xf32>
    %161 = arith.subf %160, %159 : vector<8x128xf32>
    %162 = math.exp %161 : vector<8x128xf32>
    %cst_53 = arith.constant 1.000000e+00 : f32
    %163 = vector.broadcast %cst_53 : f32 to vector<8x128xf32>
    %164 = arith.addf %163, %162 : vector<8x128xf32>
    %165 = tpu.reciprocal %164 {approx = true} : vector<8x128xf32> -> vector<8x128xf32>
    %166 = arith.mulf %156, %136 : vector<8x128xf32>
    %167 = arith.mulf %149, %158 : vector<8x128xf32>
    %168 = arith.addf %166, %167 : vector<8x128xf32>
    %169 = math.tanh %168 : vector<8x128xf32>
    %170 = arith.mulf %165, %169 : vector<8x128xf32>
    %c40 = arith.constant 40 : index
    %c0_54 = arith.constant 0 : index
    %171 = vector.load %arg12[%c40, %c0_54] : memref<64x1024xf32, #tpu.memory_space<vmem>>, vector<8x512xf32>
    %172 = arith.truncf %170 : vector<8x128xf32> to vector<8x128xbf16>
    %cst_55 = arith.constant dense<0.000000e+00> : vector<8x512xf32>
    %173 = tpu.matmul %172, %7, %cst_55 {dimension_numbers = #tpu.dot_dimension_numbers<[1], [0], [0], [1], [0, 0, 1, 1], [], []>} : vector<8x128xbf16>, vector<128x512xbf16>, vector<8x512xf32> -> vector<8x512xf32>
    %174 = arith.addf %171, %173 : vector<8x512xf32>
    %175 = vector.extract_strided_slice %174 {offsets = [0, 0], sizes = [8, 128], strides = [1, 1]} : vector<8x512xf32> to vector<8x128xf32>
    %cst_56 = arith.constant 0.000000e+00 : f32
    %176 = vector.broadcast %cst_56 : f32 to vector<8x128xf32>
    %177 = arith.subf %176, %175 : vector<8x128xf32>
    %178 = math.exp %177 : vector<8x128xf32>
    %cst_57 = arith.constant 1.000000e+00 : f32
    %179 = vector.broadcast %cst_57 : f32 to vector<8x128xf32>
    %180 = arith.addf %179, %178 : vector<8x128xf32>
    %181 = tpu.reciprocal %180 {approx = true} : vector<8x128xf32> -> vector<8x128xf32>
    %182 = vector.extract_strided_slice %174 {offsets = [0, 128], sizes = [8, 128], strides = [1, 1]} : vector<8x512xf32> to vector<8x128xf32>
    %cst_58 = arith.constant 0.000000e+00 : f32
    %183 = vector.broadcast %cst_58 : f32 to vector<8x128xf32>
    %184 = arith.subf %183, %182 : vector<8x128xf32>
    %185 = math.exp %184 : vector<8x128xf32>
    %cst_59 = arith.constant 1.000000e+00 : f32
    %186 = vector.broadcast %cst_59 : f32 to vector<8x128xf32>
    %187 = arith.addf %186, %185 : vector<8x128xf32>
    %188 = tpu.reciprocal %187 {approx = true} : vector<8x128xf32> -> vector<8x128xf32>
    %189 = vector.extract_strided_slice %174 {offsets = [0, 256], sizes = [8, 128], strides = [1, 1]} : vector<8x512xf32> to vector<8x128xf32>
    %190 = math.tanh %189 : vector<8x128xf32>
    %191 = vector.extract_strided_slice %174 {offsets = [0, 384], sizes = [8, 128], strides = [1, 1]} : vector<8x512xf32> to vector<8x128xf32>
    %cst_60 = arith.constant 0.000000e+00 : f32
    %192 = vector.broadcast %cst_60 : f32 to vector<8x128xf32>
    %193 = arith.subf %192, %191 : vector<8x128xf32>
    %194 = math.exp %193 : vector<8x128xf32>
    %cst_61 = arith.constant 1.000000e+00 : f32
    %195 = vector.broadcast %cst_61 : f32 to vector<8x128xf32>
    %196 = arith.addf %195, %194 : vector<8x128xf32>
    %197 = tpu.reciprocal %196 {approx = true} : vector<8x128xf32> -> vector<8x128xf32>
    %198 = arith.mulf %188, %168 : vector<8x128xf32>
    %199 = arith.mulf %181, %190 : vector<8x128xf32>
    %200 = arith.addf %198, %199 : vector<8x128xf32>
    %201 = math.tanh %200 : vector<8x128xf32>
    %202 = arith.mulf %197, %201 : vector<8x128xf32>
    %c48 = arith.constant 48 : index
    %c0_62 = arith.constant 0 : index
    %203 = vector.load %arg12[%c48, %c0_62] : memref<64x1024xf32, #tpu.memory_space<vmem>>, vector<8x512xf32>
    %204 = arith.truncf %202 : vector<8x128xf32> to vector<8x128xbf16>
    %cst_63 = arith.constant dense<0.000000e+00> : vector<8x512xf32>
    %205 = tpu.matmul %204, %7, %cst_63 {dimension_numbers = #tpu.dot_dimension_numbers<[1], [0], [0], [1], [0, 0, 1, 1], [], []>} : vector<8x128xbf16>, vector<128x512xbf16>, vector<8x512xf32> -> vector<8x512xf32>
    %206 = arith.addf %203, %205 : vector<8x512xf32>
    %207 = vector.extract_strided_slice %206 {offsets = [0, 0], sizes = [8, 128], strides = [1, 1]} : vector<8x512xf32> to vector<8x128xf32>
    %cst_64 = arith.constant 0.000000e+00 : f32
    %208 = vector.broadcast %cst_64 : f32 to vector<8x128xf32>
    %209 = arith.subf %208, %207 : vector<8x128xf32>
    %210 = math.exp %209 : vector<8x128xf32>
    %cst_65 = arith.constant 1.000000e+00 : f32
    %211 = vector.broadcast %cst_65 : f32 to vector<8x128xf32>
    %212 = arith.addf %211, %210 : vector<8x128xf32>
    %213 = tpu.reciprocal %212 {approx = true} : vector<8x128xf32> -> vector<8x128xf32>
    %214 = vector.extract_strided_slice %206 {offsets = [0, 128], sizes = [8, 128], strides = [1, 1]} : vector<8x512xf32> to vector<8x128xf32>
    %cst_66 = arith.constant 0.000000e+00 : f32
    %215 = vector.broadcast %cst_66 : f32 to vector<8x128xf32>
    %216 = arith.subf %215, %214 : vector<8x128xf32>
    %217 = math.exp %216 : vector<8x128xf32>
    %cst_67 = arith.constant 1.000000e+00 : f32
    %218 = vector.broadcast %cst_67 : f32 to vector<8x128xf32>
    %219 = arith.addf %218, %217 : vector<8x128xf32>
    %220 = tpu.reciprocal %219 {approx = true} : vector<8x128xf32> -> vector<8x128xf32>
    %221 = vector.extract_strided_slice %206 {offsets = [0, 256], sizes = [8, 128], strides = [1, 1]} : vector<8x512xf32> to vector<8x128xf32>
    %222 = math.tanh %221 : vector<8x128xf32>
    %223 = vector.extract_strided_slice %206 {offsets = [0, 384], sizes = [8, 128], strides = [1, 1]} : vector<8x512xf32> to vector<8x128xf32>
    %cst_68 = arith.constant 0.000000e+00 : f32
    %224 = vector.broadcast %cst_68 : f32 to vector<8x128xf32>
    %225 = arith.subf %224, %223 : vector<8x128xf32>
    %226 = math.exp %225 : vector<8x128xf32>
    %cst_69 = arith.constant 1.000000e+00 : f32
    %227 = vector.broadcast %cst_69 : f32 to vector<8x128xf32>
    %228 = arith.addf %227, %226 : vector<8x128xf32>
    %229 = tpu.reciprocal %228 {approx = true} : vector<8x128xf32> -> vector<8x128xf32>
    %230 = arith.mulf %220, %200 : vector<8x128xf32>
    %231 = arith.mulf %213, %222 : vector<8x128xf32>
    %232 = arith.addf %230, %231 : vector<8x128xf32>
    %233 = math.tanh %232 : vector<8x128xf32>
    %234 = arith.mulf %229, %233 : vector<8x128xf32>
    %c56 = arith.constant 56 : index
    %c0_70 = arith.constant 0 : index
    %235 = vector.load %arg12[%c56, %c0_70] : memref<64x1024xf32, #tpu.memory_space<vmem>>, vector<8x512xf32>
    %236 = arith.truncf %234 : vector<8x128xf32> to vector<8x128xbf16>
    %cst_71 = arith.constant dense<0.000000e+00> : vector<8x512xf32>
    %237 = tpu.matmul %236, %7, %cst_71 {dimension_numbers = #tpu.dot_dimension_numbers<[1], [0], [0], [1], [0, 0, 1, 1], [], []>} : vector<8x128xbf16>, vector<128x512xbf16>, vector<8x512xf32> -> vector<8x512xf32>
    %238 = arith.addf %235, %237 : vector<8x512xf32>
    %239 = vector.extract_strided_slice %238 {offsets = [0, 0], sizes = [8, 128], strides = [1, 1]} : vector<8x512xf32> to vector<8x128xf32>
    %cst_72 = arith.constant 0.000000e+00 : f32
    %240 = vector.broadcast %cst_72 : f32 to vector<8x128xf32>
    %241 = arith.subf %240, %239 : vector<8x128xf32>
    %242 = math.exp %241 : vector<8x128xf32>
    %cst_73 = arith.constant 1.000000e+00 : f32
    %243 = vector.broadcast %cst_73 : f32 to vector<8x128xf32>
    %244 = arith.addf %243, %242 : vector<8x128xf32>
    %245 = tpu.reciprocal %244 {approx = true} : vector<8x128xf32> -> vector<8x128xf32>
    %246 = vector.extract_strided_slice %238 {offsets = [0, 128], sizes = [8, 128], strides = [1, 1]} : vector<8x512xf32> to vector<8x128xf32>
    %cst_74 = arith.constant 0.000000e+00 : f32
    %247 = vector.broadcast %cst_74 : f32 to vector<8x128xf32>
    %248 = arith.subf %247, %246 : vector<8x128xf32>
    %249 = math.exp %248 : vector<8x128xf32>
    %cst_75 = arith.constant 1.000000e+00 : f32
    %250 = vector.broadcast %cst_75 : f32 to vector<8x128xf32>
    %251 = arith.addf %250, %249 : vector<8x128xf32>
    %252 = tpu.reciprocal %251 {approx = true} : vector<8x128xf32> -> vector<8x128xf32>
    %253 = vector.extract_strided_slice %238 {offsets = [0, 256], sizes = [8, 128], strides = [1, 1]} : vector<8x512xf32> to vector<8x128xf32>
    %254 = math.tanh %253 : vector<8x128xf32>
    %255 = vector.extract_strided_slice %238 {offsets = [0, 384], sizes = [8, 128], strides = [1, 1]} : vector<8x512xf32> to vector<8x128xf32>
    %cst_76 = arith.constant 0.000000e+00 : f32
    %256 = vector.broadcast %cst_76 : f32 to vector<8x128xf32>
    %257 = arith.subf %256, %255 : vector<8x128xf32>
    %258 = math.exp %257 : vector<8x128xf32>
    %cst_77 = arith.constant 1.000000e+00 : f32
    %259 = vector.broadcast %cst_77 : f32 to vector<8x128xf32>
    %260 = arith.addf %259, %258 : vector<8x128xf32>
    %261 = tpu.reciprocal %260 {approx = true} : vector<8x128xf32> -> vector<8x128xf32>
    %262 = arith.mulf %252, %232 : vector<8x128xf32>
    %263 = arith.mulf %245, %254 : vector<8x128xf32>
    %264 = arith.addf %262, %263 : vector<8x128xf32>
    %265 = math.tanh %264 : vector<8x128xf32>
    %266 = arith.mulf %261, %265 : vector<8x128xf32>
    %c0_78 = arith.constant 0 : index
    %c512 = arith.constant 512 : index
    %267 = vector.load %arg12[%c0_78, %c512] : memref<64x1024xf32, #tpu.memory_space<vmem>>, vector<8x512xf32>
    %268 = arith.truncf %266 : vector<8x128xf32> to vector<8x128xbf16>
    %cst_79 = arith.constant dense<0.000000e+00> : vector<8x512xf32>
    %269 = tpu.matmul %268, %8, %cst_79 {dimension_numbers = #tpu.dot_dimension_numbers<[1], [0], [0], [1], [0, 0, 1, 1], [], []>} : vector<8x128xbf16>, vector<128x512xbf16>, vector<8x512xf32> -> vector<8x512xf32>
    %270 = arith.addf %267, %269 : vector<8x512xf32>
    %271 = vector.extract_strided_slice %270 {offsets = [0, 0], sizes = [8, 128], strides = [1, 1]} : vector<8x512xf32> to vector<8x128xf32>
    %cst_80 = arith.constant 0.000000e+00 : f32
    %272 = vector.broadcast %cst_80 : f32 to vector<8x128xf32>
    %273 = arith.subf %272, %271 : vector<8x128xf32>
    %274 = math.exp %273 : vector<8x128xf32>
    %cst_81 = arith.constant 1.000000e+00 : f32
    %275 = vector.broadcast %cst_81 : f32 to vector<8x128xf32>
    %276 = arith.addf %275, %274 : vector<8x128xf32>
    %277 = tpu.reciprocal %276 {approx = true} : vector<8x128xf32> -> vector<8x128xf32>
    %278 = vector.extract_strided_slice %270 {offsets = [0, 128], sizes = [8, 128], strides = [1, 1]} : vector<8x512xf32> to vector<8x128xf32>
    %cst_82 = arith.constant 0.000000e+00 : f32
    %279 = vector.broadcast %cst_82 : f32 to vector<8x128xf32>
    %280 = arith.subf %279, %278 : vector<8x128xf32>
    %281 = math.exp %280 : vector<8x128xf32>
    %cst_83 = arith.constant 1.000000e+00 : f32
    %282 = vector.broadcast %cst_83 : f32 to vector<8x128xf32>
    %283 = arith.addf %282, %281 : vector<8x128xf32>
    %284 = tpu.reciprocal %283 {approx = true} : vector<8x128xf32> -> vector<8x128xf32>
    %285 = vector.extract_strided_slice %270 {offsets = [0, 256], sizes = [8, 128], strides = [1, 1]} : vector<8x512xf32> to vector<8x128xf32>
    %286 = math.tanh %285 : vector<8x128xf32>
    %287 = vector.extract_strided_slice %270 {offsets = [0, 384], sizes = [8, 128], strides = [1, 1]} : vector<8x512xf32> to vector<8x128xf32>
    %cst_84 = arith.constant 0.000000e+00 : f32
    %288 = vector.broadcast %cst_84 : f32 to vector<8x128xf32>
    %289 = arith.subf %288, %287 : vector<8x128xf32>
    %290 = math.exp %289 : vector<8x128xf32>
    %cst_85 = arith.constant 1.000000e+00 : f32
    %291 = vector.broadcast %cst_85 : f32 to vector<8x128xf32>
    %292 = arith.addf %291, %290 : vector<8x128xf32>
    %293 = tpu.reciprocal %292 {approx = true} : vector<8x128xf32> -> vector<8x128xf32>
    %294 = arith.mulf %284, %264 : vector<8x128xf32>
    %295 = arith.mulf %277, %286 : vector<8x128xf32>
    %296 = arith.addf %294, %295 : vector<8x128xf32>
    %297 = math.tanh %296 : vector<8x128xf32>
    %298 = arith.mulf %293, %297 : vector<8x128xf32>
    %c8_86 = arith.constant 8 : index
    %c512_87 = arith.constant 512 : index
    %299 = vector.load %arg12[%c8_86, %c512_87] : memref<64x1024xf32, #tpu.memory_space<vmem>>, vector<8x512xf32>
    %300 = arith.truncf %298 : vector<8x128xf32> to vector<8x128xbf16>
    %cst_88 = arith.constant dense<0.000000e+00> : vector<8x512xf32>
    %301 = tpu.matmul %300, %8, %cst_88 {dimension_numbers = #tpu.dot_dimension_numbers<[1], [0], [0], [1], [0, 0, 1, 1], [], []>} : vector<8x128xbf16>, vector<128x512xbf16>, vector<8x512xf32> -> vector<8x512xf32>
    %302 = arith.addf %299, %301 : vector<8x512xf32>
    %303 = vector.extract_strided_slice %302 {offsets = [0, 0], sizes = [8, 128], strides = [1, 1]} : vector<8x512xf32> to vector<8x128xf32>
    %cst_89 = arith.constant 0.000000e+00 : f32
    %304 = vector.broadcast %cst_89 : f32 to vector<8x128xf32>
    %305 = arith.subf %304, %303 : vector<8x128xf32>
    %306 = math.exp %305 : vector<8x128xf32>
    %cst_90 = arith.constant 1.000000e+00 : f32
    %307 = vector.broadcast %cst_90 : f32 to vector<8x128xf32>
    %308 = arith.addf %307, %306 : vector<8x128xf32>
    %309 = tpu.reciprocal %308 {approx = true} : vector<8x128xf32> -> vector<8x128xf32>
    %310 = vector.extract_strided_slice %302 {offsets = [0, 128], sizes = [8, 128], strides = [1, 1]} : vector<8x512xf32> to vector<8x128xf32>
    %cst_91 = arith.constant 0.000000e+00 : f32
    %311 = vector.broadcast %cst_91 : f32 to vector<8x128xf32>
    %312 = arith.subf %311, %310 : vector<8x128xf32>
    %313 = math.exp %312 : vector<8x128xf32>
    %cst_92 = arith.constant 1.000000e+00 : f32
    %314 = vector.broadcast %cst_92 : f32 to vector<8x128xf32>
    %315 = arith.addf %314, %313 : vector<8x128xf32>
    %316 = tpu.reciprocal %315 {approx = true} : vector<8x128xf32> -> vector<8x128xf32>
    %317 = vector.extract_strided_slice %302 {offsets = [0, 256], sizes = [8, 128], strides = [1, 1]} : vector<8x512xf32> to vector<8x128xf32>
    %318 = math.tanh %317 : vector<8x128xf32>
    %319 = vector.extract_strided_slice %302 {offsets = [0, 384], sizes = [8, 128], strides = [1, 1]} : vector<8x512xf32> to vector<8x128xf32>
    %cst_93 = arith.constant 0.000000e+00 : f32
    %320 = vector.broadcast %cst_93 : f32 to vector<8x128xf32>
    %321 = arith.subf %320, %319 : vector<8x128xf32>
    %322 = math.exp %321 : vector<8x128xf32>
    %cst_94 = arith.constant 1.000000e+00 : f32
    %323 = vector.broadcast %cst_94 : f32 to vector<8x128xf32>
    %324 = arith.addf %323, %322 : vector<8x128xf32>
    %325 = tpu.reciprocal %324 {approx = true} : vector<8x128xf32> -> vector<8x128xf32>
    %326 = arith.mulf %316, %296 : vector<8x128xf32>
    %327 = arith.mulf %309, %318 : vector<8x128xf32>
    %328 = arith.addf %326, %327 : vector<8x128xf32>
    %329 = math.tanh %328 : vector<8x128xf32>
    %330 = arith.mulf %325, %329 : vector<8x128xf32>
    %c16_95 = arith.constant 16 : index
    %c512_96 = arith.constant 512 : index
    %331 = vector.load %arg12[%c16_95, %c512_96] : memref<64x1024xf32, #tpu.memory_space<vmem>>, vector<8x512xf32>
    %332 = arith.truncf %330 : vector<8x128xf32> to vector<8x128xbf16>
    %cst_97 = arith.constant dense<0.000000e+00> : vector<8x512xf32>
    %333 = tpu.matmul %332, %8, %cst_97 {dimension_numbers = #tpu.dot_dimension_numbers<[1], [0], [0], [1], [0, 0, 1, 1], [], []>} : vector<8x128xbf16>, vector<128x512xbf16>, vector<8x512xf32> -> vector<8x512xf32>
    %334 = arith.addf %331, %333 : vector<8x512xf32>
    %335 = vector.extract_strided_slice %334 {offsets = [0, 0], sizes = [8, 128], strides = [1, 1]} : vector<8x512xf32> to vector<8x128xf32>
    %cst_98 = arith.constant 0.000000e+00 : f32
    %336 = vector.broadcast %cst_98 : f32 to vector<8x128xf32>
    %337 = arith.subf %336, %335 : vector<8x128xf32>
    %338 = math.exp %337 : vector<8x128xf32>
    %cst_99 = arith.constant 1.000000e+00 : f32
    %339 = vector.broadcast %cst_99 : f32 to vector<8x128xf32>
    %340 = arith.addf %339, %338 : vector<8x128xf32>
    %341 = tpu.reciprocal %340 {approx = true} : vector<8x128xf32> -> vector<8x128xf32>
    %342 = vector.extract_strided_slice %334 {offsets = [0, 128], sizes = [8, 128], strides = [1, 1]} : vector<8x512xf32> to vector<8x128xf32>
    %cst_100 = arith.constant 0.000000e+00 : f32
    %343 = vector.broadcast %cst_100 : f32 to vector<8x128xf32>
    %344 = arith.subf %343, %342 : vector<8x128xf32>
    %345 = math.exp %344 : vector<8x128xf32>
    %cst_101 = arith.constant 1.000000e+00 : f32
    %346 = vector.broadcast %cst_101 : f32 to vector<8x128xf32>
    %347 = arith.addf %346, %345 : vector<8x128xf32>
    %348 = tpu.reciprocal %347 {approx = true} : vector<8x128xf32> -> vector<8x128xf32>
    %349 = vector.extract_strided_slice %334 {offsets = [0, 256], sizes = [8, 128], strides = [1, 1]} : vector<8x512xf32> to vector<8x128xf32>
    %350 = math.tanh %349 : vector<8x128xf32>
    %351 = vector.extract_strided_slice %334 {offsets = [0, 384], sizes = [8, 128], strides = [1, 1]} : vector<8x512xf32> to vector<8x128xf32>
    %cst_102 = arith.constant 0.000000e+00 : f32
    %352 = vector.broadcast %cst_102 : f32 to vector<8x128xf32>
    %353 = arith.subf %352, %351 : vector<8x128xf32>
    %354 = math.exp %353 : vector<8x128xf32>
    %cst_103 = arith.constant 1.000000e+00 : f32
    %355 = vector.broadcast %cst_103 : f32 to vector<8x128xf32>
    %356 = arith.addf %355, %354 : vector<8x128xf32>
    %357 = tpu.reciprocal %356 {approx = true} : vector<8x128xf32> -> vector<8x128xf32>
    %358 = arith.mulf %348, %328 : vector<8x128xf32>
    %359 = arith.mulf %341, %350 : vector<8x128xf32>
    %360 = arith.addf %358, %359 : vector<8x128xf32>
    %361 = math.tanh %360 : vector<8x128xf32>
    %362 = arith.mulf %357, %361 : vector<8x128xf32>
    %c24_104 = arith.constant 24 : index
    %c512_105 = arith.constant 512 : index
    %363 = vector.load %arg12[%c24_104, %c512_105] : memref<64x1024xf32, #tpu.memory_space<vmem>>, vector<8x512xf32>
    %364 = arith.truncf %362 : vector<8x128xf32> to vector<8x128xbf16>
    %cst_106 = arith.constant dense<0.000000e+00> : vector<8x512xf32>
    %365 = tpu.matmul %364, %8, %cst_106 {dimension_numbers = #tpu.dot_dimension_numbers<[1], [0], [0], [1], [0, 0, 1, 1], [], []>} : vector<8x128xbf16>, vector<128x512xbf16>, vector<8x512xf32> -> vector<8x512xf32>
    %366 = arith.addf %363, %365 : vector<8x512xf32>
    %367 = vector.extract_strided_slice %366 {offsets = [0, 0], sizes = [8, 128], strides = [1, 1]} : vector<8x512xf32> to vector<8x128xf32>
    %cst_107 = arith.constant 0.000000e+00 : f32
    %368 = vector.broadcast %cst_107 : f32 to vector<8x128xf32>
    %369 = arith.subf %368, %367 : vector<8x128xf32>
    %370 = math.exp %369 : vector<8x128xf32>
    %cst_108 = arith.constant 1.000000e+00 : f32
    %371 = vector.broadcast %cst_108 : f32 to vector<8x128xf32>
    %372 = arith.addf %371, %370 : vector<8x128xf32>
    %373 = tpu.reciprocal %372 {approx = true} : vector<8x128xf32> -> vector<8x128xf32>
    %374 = vector.extract_strided_slice %366 {offsets = [0, 128], sizes = [8, 128], strides = [1, 1]} : vector<8x512xf32> to vector<8x128xf32>
    %cst_109 = arith.constant 0.000000e+00 : f32
    %375 = vector.broadcast %cst_109 : f32 to vector<8x128xf32>
    %376 = arith.subf %375, %374 : vector<8x128xf32>
    %377 = math.exp %376 : vector<8x128xf32>
    %cst_110 = arith.constant 1.000000e+00 : f32
    %378 = vector.broadcast %cst_110 : f32 to vector<8x128xf32>
    %379 = arith.addf %378, %377 : vector<8x128xf32>
    %380 = tpu.reciprocal %379 {approx = true} : vector<8x128xf32> -> vector<8x128xf32>
    %381 = vector.extract_strided_slice %366 {offsets = [0, 256], sizes = [8, 128], strides = [1, 1]} : vector<8x512xf32> to vector<8x128xf32>
    %382 = math.tanh %381 : vector<8x128xf32>
    %383 = vector.extract_strided_slice %366 {offsets = [0, 384], sizes = [8, 128], strides = [1, 1]} : vector<8x512xf32> to vector<8x128xf32>
    %cst_111 = arith.constant 0.000000e+00 : f32
    %384 = vector.broadcast %cst_111 : f32 to vector<8x128xf32>
    %385 = arith.subf %384, %383 : vector<8x128xf32>
    %386 = math.exp %385 : vector<8x128xf32>
    %cst_112 = arith.constant 1.000000e+00 : f32
    %387 = vector.broadcast %cst_112 : f32 to vector<8x128xf32>
    %388 = arith.addf %387, %386 : vector<8x128xf32>
    %389 = tpu.reciprocal %388 {approx = true} : vector<8x128xf32> -> vector<8x128xf32>
    %390 = arith.mulf %380, %360 : vector<8x128xf32>
    %391 = arith.mulf %373, %382 : vector<8x128xf32>
    %392 = arith.addf %390, %391 : vector<8x128xf32>
    %393 = math.tanh %392 : vector<8x128xf32>
    %394 = arith.mulf %389, %393 : vector<8x128xf32>
    %c32_113 = arith.constant 32 : index
    %c512_114 = arith.constant 512 : index
    %395 = vector.load %arg12[%c32_113, %c512_114] : memref<64x1024xf32, #tpu.memory_space<vmem>>, vector<8x512xf32>
    %396 = arith.truncf %394 : vector<8x128xf32> to vector<8x128xbf16>
    %cst_115 = arith.constant dense<0.000000e+00> : vector<8x512xf32>
    %397 = tpu.matmul %396, %8, %cst_115 {dimension_numbers = #tpu.dot_dimension_numbers<[1], [0], [0], [1], [0, 0, 1, 1], [], []>} : vector<8x128xbf16>, vector<128x512xbf16>, vector<8x512xf32> -> vector<8x512xf32>
    %398 = arith.addf %395, %397 : vector<8x512xf32>
    %399 = vector.extract_strided_slice %398 {offsets = [0, 0], sizes = [8, 128], strides = [1, 1]} : vector<8x512xf32> to vector<8x128xf32>
    %cst_116 = arith.constant 0.000000e+00 : f32
    %400 = vector.broadcast %cst_116 : f32 to vector<8x128xf32>
    %401 = arith.subf %400, %399 : vector<8x128xf32>
    %402 = math.exp %401 : vector<8x128xf32>
    %cst_117 = arith.constant 1.000000e+00 : f32
    %403 = vector.broadcast %cst_117 : f32 to vector<8x128xf32>
    %404 = arith.addf %403, %402 : vector<8x128xf32>
    %405 = tpu.reciprocal %404 {approx = true} : vector<8x128xf32> -> vector<8x128xf32>
    %406 = vector.extract_strided_slice %398 {offsets = [0, 128], sizes = [8, 128], strides = [1, 1]} : vector<8x512xf32> to vector<8x128xf32>
    %cst_118 = arith.constant 0.000000e+00 : f32
    %407 = vector.broadcast %cst_118 : f32 to vector<8x128xf32>
    %408 = arith.subf %407, %406 : vector<8x128xf32>
    %409 = math.exp %408 : vector<8x128xf32>
    %cst_119 = arith.constant 1.000000e+00 : f32
    %410 = vector.broadcast %cst_119 : f32 to vector<8x128xf32>
    %411 = arith.addf %410, %409 : vector<8x128xf32>
    %412 = tpu.reciprocal %411 {approx = true} : vector<8x128xf32> -> vector<8x128xf32>
    %413 = vector.extract_strided_slice %398 {offsets = [0, 256], sizes = [8, 128], strides = [1, 1]} : vector<8x512xf32> to vector<8x128xf32>
    %414 = math.tanh %413 : vector<8x128xf32>
    %415 = vector.extract_strided_slice %398 {offsets = [0, 384], sizes = [8, 128], strides = [1, 1]} : vector<8x512xf32> to vector<8x128xf32>
    %cst_120 = arith.constant 0.000000e+00 : f32
    %416 = vector.broadcast %cst_120 : f32 to vector<8x128xf32>
    %417 = arith.subf %416, %415 : vector<8x128xf32>
    %418 = math.exp %417 : vector<8x128xf32>
    %cst_121 = arith.constant 1.000000e+00 : f32
    %419 = vector.broadcast %cst_121 : f32 to vector<8x128xf32>
    %420 = arith.addf %419, %418 : vector<8x128xf32>
    %421 = tpu.reciprocal %420 {approx = true} : vector<8x128xf32> -> vector<8x128xf32>
    %422 = arith.mulf %412, %392 : vector<8x128xf32>
    %423 = arith.mulf %405, %414 : vector<8x128xf32>
    %424 = arith.addf %422, %423 : vector<8x128xf32>
    %425 = math.tanh %424 : vector<8x128xf32>
    %426 = arith.mulf %421, %425 : vector<8x128xf32>
    %c40_122 = arith.constant 40 : index
    %c512_123 = arith.constant 512 : index
    %427 = vector.load %arg12[%c40_122, %c512_123] : memref<64x1024xf32, #tpu.memory_space<vmem>>, vector<8x512xf32>
    %428 = arith.truncf %426 : vector<8x128xf32> to vector<8x128xbf16>
    %cst_124 = arith.constant dense<0.000000e+00> : vector<8x512xf32>
    %429 = tpu.matmul %428, %8, %cst_124 {dimension_numbers = #tpu.dot_dimension_numbers<[1], [0], [0], [1], [0, 0, 1, 1], [], []>} : vector<8x128xbf16>, vector<128x512xbf16>, vector<8x512xf32> -> vector<8x512xf32>
    %430 = arith.addf %427, %429 : vector<8x512xf32>
    %431 = vector.extract_strided_slice %430 {offsets = [0, 0], sizes = [8, 128], strides = [1, 1]} : vector<8x512xf32> to vector<8x128xf32>
    %cst_125 = arith.constant 0.000000e+00 : f32
    %432 = vector.broadcast %cst_125 : f32 to vector<8x128xf32>
    %433 = arith.subf %432, %431 : vector<8x128xf32>
    %434 = math.exp %433 : vector<8x128xf32>
    %cst_126 = arith.constant 1.000000e+00 : f32
    %435 = vector.broadcast %cst_126 : f32 to vector<8x128xf32>
    %436 = arith.addf %435, %434 : vector<8x128xf32>
    %437 = tpu.reciprocal %436 {approx = true} : vector<8x128xf32> -> vector<8x128xf32>
    %438 = vector.extract_strided_slice %430 {offsets = [0, 128], sizes = [8, 128], strides = [1, 1]} : vector<8x512xf32> to vector<8x128xf32>
    %cst_127 = arith.constant 0.000000e+00 : f32
    %439 = vector.broadcast %cst_127 : f32 to vector<8x128xf32>
    %440 = arith.subf %439, %438 : vector<8x128xf32>
    %441 = math.exp %440 : vector<8x128xf32>
    %cst_128 = arith.constant 1.000000e+00 : f32
    %442 = vector.broadcast %cst_128 : f32 to vector<8x128xf32>
    %443 = arith.addf %442, %441 : vector<8x128xf32>
    %444 = tpu.reciprocal %443 {approx = true} : vector<8x128xf32> -> vector<8x128xf32>
    %445 = vector.extract_strided_slice %430 {offsets = [0, 256], sizes = [8, 128], strides = [1, 1]} : vector<8x512xf32> to vector<8x128xf32>
    %446 = math.tanh %445 : vector<8x128xf32>
    %447 = vector.extract_strided_slice %430 {offsets = [0, 384], sizes = [8, 128], strides = [1, 1]} : vector<8x512xf32> to vector<8x128xf32>
    %cst_129 = arith.constant 0.000000e+00 : f32
    %448 = vector.broadcast %cst_129 : f32 to vector<8x128xf32>
    %449 = arith.subf %448, %447 : vector<8x128xf32>
    %450 = math.exp %449 : vector<8x128xf32>
    %cst_130 = arith.constant 1.000000e+00 : f32
    %451 = vector.broadcast %cst_130 : f32 to vector<8x128xf32>
    %452 = arith.addf %451, %450 : vector<8x128xf32>
    %453 = tpu.reciprocal %452 {approx = true} : vector<8x128xf32> -> vector<8x128xf32>
    %454 = arith.mulf %444, %424 : vector<8x128xf32>
    %455 = arith.mulf %437, %446 : vector<8x128xf32>
    %456 = arith.addf %454, %455 : vector<8x128xf32>
    %457 = math.tanh %456 : vector<8x128xf32>
    %458 = arith.mulf %453, %457 : vector<8x128xf32>
    %c48_131 = arith.constant 48 : index
    %c512_132 = arith.constant 512 : index
    %459 = vector.load %arg12[%c48_131, %c512_132] : memref<64x1024xf32, #tpu.memory_space<vmem>>, vector<8x512xf32>
    %460 = arith.truncf %458 : vector<8x128xf32> to vector<8x128xbf16>
    %cst_133 = arith.constant dense<0.000000e+00> : vector<8x512xf32>
    %461 = tpu.matmul %460, %8, %cst_133 {dimension_numbers = #tpu.dot_dimension_numbers<[1], [0], [0], [1], [0, 0, 1, 1], [], []>} : vector<8x128xbf16>, vector<128x512xbf16>, vector<8x512xf32> -> vector<8x512xf32>
    %462 = arith.addf %459, %461 : vector<8x512xf32>
    %463 = vector.extract_strided_slice %462 {offsets = [0, 0], sizes = [8, 128], strides = [1, 1]} : vector<8x512xf32> to vector<8x128xf32>
    %cst_134 = arith.constant 0.000000e+00 : f32
    %464 = vector.broadcast %cst_134 : f32 to vector<8x128xf32>
    %465 = arith.subf %464, %463 : vector<8x128xf32>
    %466 = math.exp %465 : vector<8x128xf32>
    %cst_135 = arith.constant 1.000000e+00 : f32
    %467 = vector.broadcast %cst_135 : f32 to vector<8x128xf32>
    %468 = arith.addf %467, %466 : vector<8x128xf32>
    %469 = tpu.reciprocal %468 {approx = true} : vector<8x128xf32> -> vector<8x128xf32>
    %470 = vector.extract_strided_slice %462 {offsets = [0, 128], sizes = [8, 128], strides = [1, 1]} : vector<8x512xf32> to vector<8x128xf32>
    %cst_136 = arith.constant 0.000000e+00 : f32
    %471 = vector.broadcast %cst_136 : f32 to vector<8x128xf32>
    %472 = arith.subf %471, %470 : vector<8x128xf32>
    %473 = math.exp %472 : vector<8x128xf32>
    %cst_137 = arith.constant 1.000000e+00 : f32
    %474 = vector.broadcast %cst_137 : f32 to vector<8x128xf32>
    %475 = arith.addf %474, %473 : vector<8x128xf32>
    %476 = tpu.reciprocal %475 {approx = true} : vector<8x128xf32> -> vector<8x128xf32>
    %477 = vector.extract_strided_slice %462 {offsets = [0, 256], sizes = [8, 128], strides = [1, 1]} : vector<8x512xf32> to vector<8x128xf32>
    %478 = math.tanh %477 : vector<8x128xf32>
    %479 = vector.extract_strided_slice %462 {offsets = [0, 384], sizes = [8, 128], strides = [1, 1]} : vector<8x512xf32> to vector<8x128xf32>
    %cst_138 = arith.constant 0.000000e+00 : f32
    %480 = vector.broadcast %cst_138 : f32 to vector<8x128xf32>
    %481 = arith.subf %480, %479 : vector<8x128xf32>
    %482 = math.exp %481 : vector<8x128xf32>
    %cst_139 = arith.constant 1.000000e+00 : f32
    %483 = vector.broadcast %cst_139 : f32 to vector<8x128xf32>
    %484 = arith.addf %483, %482 : vector<8x128xf32>
    %485 = tpu.reciprocal %484 {approx = true} : vector<8x128xf32> -> vector<8x128xf32>
    %486 = arith.mulf %476, %456 : vector<8x128xf32>
    %487 = arith.mulf %469, %478 : vector<8x128xf32>
    %488 = arith.addf %486, %487 : vector<8x128xf32>
    %489 = math.tanh %488 : vector<8x128xf32>
    %490 = arith.mulf %485, %489 : vector<8x128xf32>
    %c56_140 = arith.constant 56 : index
    %c512_141 = arith.constant 512 : index
    %491 = vector.load %arg12[%c56_140, %c512_141] : memref<64x1024xf32, #tpu.memory_space<vmem>>, vector<8x512xf32>
    %492 = arith.truncf %490 : vector<8x128xf32> to vector<8x128xbf16>
    %cst_142 = arith.constant dense<0.000000e+00> : vector<8x512xf32>
    %493 = tpu.matmul %492, %8, %cst_142 {dimension_numbers = #tpu.dot_dimension_numbers<[1], [0], [0], [1], [0, 0, 1, 1], [], []>} : vector<8x128xbf16>, vector<128x512xbf16>, vector<8x512xf32> -> vector<8x512xf32>
    %494 = arith.addf %491, %493 : vector<8x512xf32>
    %495 = vector.extract_strided_slice %494 {offsets = [0, 0], sizes = [8, 128], strides = [1, 1]} : vector<8x512xf32> to vector<8x128xf32>
    %cst_143 = arith.constant 0.000000e+00 : f32
    %496 = vector.broadcast %cst_143 : f32 to vector<8x128xf32>
    %497 = arith.subf %496, %495 : vector<8x128xf32>
    %498 = math.exp %497 : vector<8x128xf32>
    %cst_144 = arith.constant 1.000000e+00 : f32
    %499 = vector.broadcast %cst_144 : f32 to vector<8x128xf32>
    %500 = arith.addf %499, %498 : vector<8x128xf32>
    %501 = tpu.reciprocal %500 {approx = true} : vector<8x128xf32> -> vector<8x128xf32>
    %502 = vector.extract_strided_slice %494 {offsets = [0, 128], sizes = [8, 128], strides = [1, 1]} : vector<8x512xf32> to vector<8x128xf32>
    %cst_145 = arith.constant 0.000000e+00 : f32
    %503 = vector.broadcast %cst_145 : f32 to vector<8x128xf32>
    %504 = arith.subf %503, %502 : vector<8x128xf32>
    %505 = math.exp %504 : vector<8x128xf32>
    %cst_146 = arith.constant 1.000000e+00 : f32
    %506 = vector.broadcast %cst_146 : f32 to vector<8x128xf32>
    %507 = arith.addf %506, %505 : vector<8x128xf32>
    %508 = tpu.reciprocal %507 {approx = true} : vector<8x128xf32> -> vector<8x128xf32>
    %509 = vector.extract_strided_slice %494 {offsets = [0, 256], sizes = [8, 128], strides = [1, 1]} : vector<8x512xf32> to vector<8x128xf32>
    %510 = math.tanh %509 : vector<8x128xf32>
    %511 = vector.extract_strided_slice %494 {offsets = [0, 384], sizes = [8, 128], strides = [1, 1]} : vector<8x512xf32> to vector<8x128xf32>
    %cst_147 = arith.constant 0.000000e+00 : f32
    %512 = vector.broadcast %cst_147 : f32 to vector<8x128xf32>
    %513 = arith.subf %512, %511 : vector<8x128xf32>
    %514 = math.exp %513 : vector<8x128xf32>
    %cst_148 = arith.constant 1.000000e+00 : f32
    %515 = vector.broadcast %cst_148 : f32 to vector<8x128xf32>
    %516 = arith.addf %515, %514 : vector<8x128xf32>
    %517 = tpu.reciprocal %516 {approx = true} : vector<8x128xf32> -> vector<8x128xf32>
    %518 = arith.mulf %508, %488 : vector<8x128xf32>
    %519 = arith.mulf %501, %510 : vector<8x128xf32>
    %520 = arith.addf %518, %519 : vector<8x128xf32>
    %521 = math.tanh %520 : vector<8x128xf32>
    %522 = arith.mulf %517, %521 : vector<8x128xf32>
    %523 = arith.truncf %522 : vector<8x128xf32> to vector<8x128xbf16>
    %c0_149 = arith.constant 0 : index
    %c0_150 = arith.constant 0 : index
    %524 = vector.load %arg5[%c0_149, %c0_150] : memref<128x64xbf16, #tpu.memory_space<vmem>>, vector<128x64xbf16>
    %cst_151 = arith.constant dense<0.000000e+00> : vector<8x64xf32>
    %525 = tpu.matmul %523, %524, %cst_151 {dimension_numbers = #tpu.dot_dimension_numbers<[1], [0], [0], [1], [0, 0, 1, 1], [], []>} : vector<8x128xbf16>, vector<128x64xbf16>, vector<8x64xf32> -> vector<8x64xf32>
    %c0_152 = arith.constant 0 : index
    %c0_153 = arith.constant 0 : index
    %526 = vector.load %arg6[%c0_152, %c0_153] : memref<1x64xf32, #tpu.memory_space<vmem>>, vector<1x64xf32>
    %527 = vector.broadcast %526 : vector<1x64xf32> to vector<8x64xf32>
    %528 = arith.addf %525, %527 : vector<8x64xf32>
    %529 = arith.negf %528 : vector<8x64xf32>
    %530 = math.exp %529 : vector<8x64xf32>
    %cst_154 = arith.constant 1.000000e+00 : f32
    %531 = vector.broadcast %cst_154 : f32 to vector<8x64xf32>
    %532 = arith.addf %531, %530 : vector<8x64xf32>
    %533 = arith.divf %531, %532 : vector<8x64xf32>
    %534 = arith.truncf %533 : vector<8x64xf32> to vector<8x64xbf16>
    %c0_155 = arith.constant 0 : index
    %c0_156 = arith.constant 0 : index
    %535 = vector.load %arg7[%c0_155, %c0_156] : memref<64x64xbf16, #tpu.memory_space<vmem>>, vector<64x64xbf16>
    %cst_157 = arith.constant dense<0.000000e+00> : vector<8x64xf32>
    %536 = tpu.matmul %534, %535, %cst_157 {dimension_numbers = #tpu.dot_dimension_numbers<[1], [0], [0], [1], [0, 0, 1, 1], [], []>} : vector<8x64xbf16>, vector<64x64xbf16>, vector<8x64xf32> -> vector<8x64xf32>
    %c0_158 = arith.constant 0 : index
    %c0_159 = arith.constant 0 : index
    %537 = vector.load %arg8[%c0_158, %c0_159] : memref<1x64xf32, #tpu.memory_space<vmem>>, vector<1x64xf32>
    %538 = vector.broadcast %537 : vector<1x64xf32> to vector<8x64xf32>
    %539 = arith.addf %536, %538 : vector<8x64xf32>
    %540 = math.tanh %539 : vector<8x64xf32>
    %541 = arith.truncf %540 : vector<8x64xf32> to vector<8x64xbf16>
    %c0_160 = arith.constant 0 : index
    %c0_161 = arith.constant 0 : index
    %542 = vector.load %arg9[%c0_160, %c0_161] : memref<64x32xbf16, #tpu.memory_space<vmem>>, vector<64x32xbf16>
    %cst_162 = arith.constant dense<0.000000e+00> : vector<8x32xf32>
    %543 = tpu.matmul %541, %542, %cst_162 {dimension_numbers = #tpu.dot_dimension_numbers<[1], [0], [0], [1], [0, 0, 1, 1], [], []>} : vector<8x64xbf16>, vector<64x32xbf16>, vector<8x32xf32> -> vector<8x32xf32>
    %c0_163 = arith.constant 0 : index
    %c0_164 = arith.constant 0 : index
    %544 = vector.load %arg10[%c0_163, %c0_164] : memref<1x32xf32, #tpu.memory_space<vmem>>, vector<1x32xf32>
    %545 = vector.broadcast %544 : vector<1x32xf32> to vector<8x32xf32>
    %546 = arith.addf %543, %545 : vector<8x32xf32>
    %547 = arith.negf %546 : vector<8x32xf32>
    %548 = math.exp %547 : vector<8x32xf32>
    %cst_165 = arith.constant 1.000000e+00 : f32
    %549 = vector.broadcast %cst_165 : f32 to vector<8x32xf32>
    %550 = arith.addf %549, %548 : vector<8x32xf32>
    %551 = arith.divf %549, %550 : vector<8x32xf32>
    %c0_166 = arith.constant 0 : index
    %c0_167 = arith.constant 0 : index
    %552 = vector.load %arg11[%c0_166, %c0_167] : memref<8x32xf32, #tpu.memory_space<vmem>>, vector<8x32xf32>
    tpu.vector_store %arg11[%c0_166, %c0_167], %551 {strides = array<i32>} : memref<8x32xf32, #tpu.memory_space<vmem>>, vector<8x32xf32>,
    return
  }
}

</mosaic_0001>

<llo_original>
// kernel: tpu_custom_call.1
$region0: #{tpu_custom_call.1}
  #allocation0 [shape = 'u32[]', space=smem, size = 0x4, offset = 0x4, fixed_abs, tag = 'smem constant byte address 0x4 - core index']
  #allocation1 [shape = 'u32[144,128]{1,0:T(1,128)}', space=vmem, size = 0x12000, scoped, tag = 'internal scratch']
  #allocation2 [shape = 'f32[64,1024]{1,0:T(8,128)}', space=vmem, size = 0x40000, scoped, tag = 'scratch operand']
  %s0 = inlined_call_operand.vmem [shape: bf16[64,32], index: 0, kind: input, shape index: {}]
  %s1 = inlined_call_operand.vmem [shape: bf16[32,1024], index: 1, kind: input, shape index: {}]
  %s2 = inlined_call_operand.hbm [shape: f32[1,1024], index: 2, kind: input, shape index: {}]
  %s3 = inlined_call_operand.hbm [shape: bf16[128,512], index: 3, kind: input, shape index: {}]
  %s4 = inlined_call_operand.hbm [shape: bf16[128,512], index: 4, kind: input, shape index: {}]
  %s5 = inlined_call_operand.vmem [shape: bf16[128,64], index: 5, kind: input, shape index: {}]
  %s6 = inlined_call_operand.hbm [shape: f32[1,64], index: 6, kind: input, shape index: {}]
  %s7 = inlined_call_operand.vmem [shape: bf16[64,64], index: 7, kind: input, shape index: {}]
  %s8 = inlined_call_operand.hbm [shape: f32[1,64], index: 8, kind: input, shape index: {}]
  %s9 = inlined_call_operand.vmem [shape: bf16[64,32], index: 9, kind: input, shape index: {}]
  %s10 = inlined_call_operand.vmem [shape: f32[1,32], index: 10, kind: input, shape index: {}]
  %s11 = inlined_call_operand.hbm [shape: f32[8,32], index: 11, kind: output, shape index: {}]
  %s12 = sld [smem:[#allocation0]]
  $region74: #{tpu_custom_call.1} parent=0
    _
  %s14 = ssub.s32 1, %s12
  %s15 = scalar_select 0, %s14, %s12
  $region1: #{tpu_custom_call.1} parent=0
    #allocation3 [shape = 'u8[4096]{0}', space=vmem, size = 0x1000, scoped, tag = 'input window, operand 2, single buffered']
    #allocation4 [shape = 's32[1]{0}', space=sflag, size = 0x4, scoped, tag = 'scoped memory for tpu_custom_call.1']
    #allocation5 [shape = 's32[1]{0}', space=sflag, size = 0x4, scoped, tag = 'scoped memory for tpu_custom_call.1']
    #allocation6 [shape = 'u8[131072]{0}', space=vmem, size = 0x20000, scoped, tag = 'input window, operand 3, single buffered']
    #allocation7 [shape = 's32[1]{0}', space=sflag, size = 0x4, scoped, tag = 'scoped memory for tpu_custom_call.1']
    #allocation8 [shape = 'u8[131072]{0}', space=vmem, size = 0x20000, scoped, tag = 'input window, operand 4, single buffered']
    #allocation9 [shape = 'u8[512]{0}', space=vmem, size = 0x400, scoped, tag = 'input window, operand 6, single buffered']
    #allocation10 [shape = 's32[1]{0}', space=sflag, size = 0x4, scoped, tag = 'scoped memory for tpu_custom_call.1']
    #allocation11 [shape = 'u8[512]{0}', space=vmem, size = 0x400, scoped, tag = 'input window, operand 8, single buffered']
    #allocation12 [shape = 'u8[4096]{0}', space=vmem, size = 0x1000, scoped, tag = 'output window, operand 0, single buffered']
    %16 = vsyncpa [#allocation4], 0
    %17 = vsyncpa [#allocation7], 0
    %18 = vsyncpa [#allocation10], 0
    %19 = vsyncpa [#allocation5], 0
    // Predicated region
    $region2: #{tpu_custom_call.1} parent=1 // pred_check
      _
    $region3: #{tpu_custom_call.1} parent=1 // pred_check_branch
      %21 = sbr.rel (0) target = $region5
    $region4: #{tpu_custom_call.1} parent=1 // pred_region
      _
    $region5: #{tpu_custom_call.1} parent=1 // pred_fallthru
      _
    // Predicated region
    $region6: #{tpu_custom_call.1} parent=1 // pred_check
      _
    $region7: #{tpu_custom_call.1} parent=1 // pred_check_branch
      %23 = sbr.rel (0) target = $region9
    $region8: #{tpu_custom_call.1} parent=1 // pred_region
      _
    $region9: #{tpu_custom_call.1} parent=1 // pred_fallthru
      _
    // Predicated region
    $region10: #{tpu_custom_call.1} parent=1 // pred_check
      _
    $region11: #{tpu_custom_call.1} parent=1 // pred_check_branch
      %25 = sbr.rel (0) target = $region13
    $region12: #{tpu_custom_call.1} parent=1 // pred_region
      %s27 = ssub.s32 128, 128
      %28 = vsyncadd [#allocation4], %s27
      %s30 = sshll.u32 [#allocation3], 4
      %s31 = int_to_ptr.vmem [resolvable:$true] %s30
      %33 = dma.hbm_to_vmem [thread:$0]  %s2, 128, %s31, [#allocation4]
    $region13: #{tpu_custom_call.1} parent=1 // pred_fallthru
      _
    // Predicated region
    $region14: #{tpu_custom_call.1} parent=1 // pred_check
      _
    $region15: #{tpu_custom_call.1} parent=1 // pred_check_branch
      %35 = sbr.rel (0) target = $region17
    $region16: #{tpu_custom_call.1} parent=1 // pred_region
      %s37 = ssub.s32 4096, 4096
      %38 = vsyncadd [#allocation7], %s37
      %s39 = sshll.u32 [#allocation6], 4
      %s40 = int_to_ptr.vmem [resolvable:$true] %s39
      %45 = dma.hbm_to_vmem [thread:$0]  %s3, 4096, %s40, [#allocation7], 256, 256, 16
    $region17: #{tpu_custom_call.1} parent=1 // pred_fallthru
      _
    // Predicated region
    $region18: #{tpu_custom_call.1} parent=1 // pred_check
      _
    $region19: #{tpu_custom_call.1} parent=1 // pred_check_branch
      %47 = sbr.rel (0) target = $region21
    $region20: #{tpu_custom_call.1} parent=1 // pred_region
      %s49 = ssub.s32 4096, 4096
      %50 = vsyncadd [#allocation7], %s49
      %s51 = sshll.u32 [#allocation8], 4
      %s52 = int_to_ptr.vmem [resolvable:$true] %s51
      %57 = dma.hbm_to_vmem [thread:$0]  %s4, 4096, %s52, [#allocation7], 256, 256, 16
    $region21: #{tpu_custom_call.1} parent=1 // pred_fallthru
      _
    // Predicated region
    $region22: #{tpu_custom_call.1} parent=1 // pred_check
      _
    $region23: #{tpu_custom_call.1} parent=1 // pred_check_branch
      %59 = sbr.rel (0) target = $region25
    $region24: #{tpu_custom_call.1} parent=1 // pred_region
      _
    $region25: #{tpu_custom_call.1} parent=1 // pred_fallthru
      _
    // Predicated region
    $region26: #{tpu_custom_call.1} parent=1 // pred_check
      _
    $region27: #{tpu_custom_call.1} parent=1 // pred_check_branch
      %61 = sbr.rel (0) target = $region29
    $region28: #{tpu_custom_call.1} parent=1 // pred_region
      %s63 = ssub.s32 16, 16
      %64 = vsyncadd [#allocation10], %s63
      %s66 = sshll.u32 [#allocation9], 4
      %s67 = int_to_ptr.vmem [resolvable:$true] %s66
      %69 = dma.hbm_to_vmem [thread:$0]  %s6, 16, %s67, [#allocation10]
    $region29: #{tpu_custom_call.1} parent=1 // pred_fallthru
      _
    // Predicated region
    $region30: #{tpu_custom_call.1} parent=1 // pred_check
      _
    $region31: #{tpu_custom_call.1} parent=1 // pred_check_branch
      %71 = sbr.rel (0) target = $region33
    $region32: #{tpu_custom_call.1} parent=1 // pred_region
      _
    $region33: #{tpu_custom_call.1} parent=1 // pred_fallthru
      _
    // Predicated region
    $region34: #{tpu_custom_call.1} parent=1 // pred_check
      _
    $region35: #{tpu_custom_call.1} parent=1 // pred_check_branch
      %73 = sbr.rel (0) target = $region37
    $region36: #{tpu_custom_call.1} parent=1 // pred_region
      %s75 = ssub.s32 16, 16
      %76 = vsyncadd [#allocation10], %s75
      %s78 = sshll.u32 [#allocation11], 4
      %s79 = int_to_ptr.vmem [resolvable:$true] %s78
      %81 = dma.hbm_to_vmem [thread:$0]  %s8, 16, %s79, [#allocation10]
    $region37: #{tpu_custom_call.1} parent=1 // pred_fallthru
      _
    // Predicated region
    $region38: #{tpu_custom_call.1} parent=1 // pred_check
      _
    $region39: #{tpu_custom_call.1} parent=1 // pred_check_branch
      %83 = sbr.rel (0) target = $region41
    $region40: #{tpu_custom_call.1} parent=1 // pred_region
      _
    $region41: #{tpu_custom_call.1} parent=1 // pred_fallthru
      _
    // Predicated region
    $region42: #{tpu_custom_call.1} parent=1 // pred_check
      _
    $region43: #{tpu_custom_call.1} parent=1 // pred_check_branch
      %85 = sbr.rel (0) target = $region45
    $region44: #{tpu_custom_call.1} parent=1 // pred_region
      _
    $region45: #{tpu_custom_call.1} parent=1 // pred_fallthru
      _
    // Predicated region
    $region46: #{tpu_custom_call.1} parent=1 // pred_check
      _
    $region47: #{tpu_custom_call.1} parent=1 // pred_check_branch
      %87 = sbr.rel (0) target = $region49
    $region48: #{tpu_custom_call.1} parent=1 // pred_region
      %88 = dma.done [#allocation4], 128
    $region49: #{tpu_custom_call.1} parent=1 // pred_fallthru
      _
    // Predicated region
    $region50: #{tpu_custom_call.1} parent=1 // pred_check
      _
    $region51: #{tpu_custom_call.1} parent=1 // pred_check_branch
      %90 = sbr.rel (0) target = $region53
    $region52: #{tpu_custom_call.1} parent=1 // pred_region
      %91 = dma.done [#allocation7], 4096
    $region53: #{tpu_custom_call.1} parent=1 // pred_fallthru
      _
    // Predicated region
    $region54: #{tpu_custom_call.1} parent=1 // pred_check
      _
    $region55: #{tpu_custom_call.1} parent=1 // pred_check_branch
      %93 = sbr.rel (0) target = $region57
    $region56: #{tpu_custom_call.1} parent=1 // pred_region
      %94 = dma.done [#allocation7], 4096
    $region57: #{tpu_custom_call.1} parent=1 // pred_fallthru
      _
    // Predicated region
    $region58: #{tpu_custom_call.1} parent=1 // pred_check
      _
    $region59: #{tpu_custom_call.1} parent=1 // pred_check_branch
      %96 = sbr.rel (0) target = $region61
    $region60: #{tpu_custom_call.1} parent=1 // pred_region
      %97 = dma.done [#allocation10], 16
    $region61: #{tpu_custom_call.1} parent=1 // pred_fallthru
      _
    // Predicated region
    $region62: #{tpu_custom_call.1} parent=1 // pred_check
      _
    $region63: #{tpu_custom_call.1} parent=1 // pred_check_branch
      %99 = sbr.rel (0) target = $region65
    $region64: #{tpu_custom_call.1} parent=1 // pred_region
      %100 = dma.done [#allocation10], 16
    $region65: #{tpu_custom_call.1} parent=1 // pred_fallthru
      _
    %v102 = vld [vmem:[%s0] sm:$0xf]
    %v103 = vld [vmem:[%s0 + $0x4] sm:$0xf]
    %v104 = vld [vmem:[%s0 + $0x8] sm:$0xf]
    %v105 = vld [vmem:[%s0 + $0xc] sm:$0xf]
    %v106 = vld [vmem:[%s0 + $0x10] sm:$0xf]
    %v107 = vld [vmem:[%s0 + $0x14] sm:$0xf]
    %v108 = vld [vmem:[%s0 + $0x18] sm:$0xf]
    %v109 = vld [vmem:[%s0 + $0x1c] sm:$0xf]
    %v110 = vld [vmem:[%s1] sm:$0xff]
    %v111 = vld [vmem:[%s1 + $0x8] sm:$0xff]
    %v112 = vld [vmem:[%s1 + $0x10] sm:$0xff]
    %v113 = vld [vmem:[%s1 + $0x18] sm:$0xff]
    %v114 = vld [vmem:[%s1 + $0x20] sm:$0xff]
    %v115 = vld [vmem:[%s1 + $0x28] sm:$0xff]
    %v116 = vld [vmem:[%s1 + $0x30] sm:$0xff]
    %v117 = vld [vmem:[%s1 + $0x38] sm:$0xff]
    %v118 = vld [vmem:[%s1 + $0x40] sm:$0xff]
    %v119 = vld [vmem:[%s1 + $0x48] sm:$0xff]
    %v120 = vld [vmem:[%s1 + $0x50] sm:$0xff]
    %v121 = vld [vmem:[%s1 + $0x58] sm:$0xff]
    %v122 = vld [vmem:[%s1 + $0x60] sm:$0xff]
    %v123 = vld [vmem:[%s1 + $0x68] sm:$0xff]
    %v124 = vld [vmem:[%s1 + $0x70] sm:$0xff]
    %v125 = vld [vmem:[%s1 + $0x78] sm:$0xff]
    %v126 = vld [vmem:[#allocation3] sm:$0xff]
    %v128 = vlaneseq
    %v129 = vshrl.u32 %v128, 7
    %v130 = vsub.s32 0, %v129
    %v131 = vrot.slane %v126, %v130
    %v132 = vlaneseq
    %v133 = vshrl.u32 %v132, 7
    %v134 = vsub.s32 1, %v133
    %v135 = vrot.slane %v126, %v134
    %v136 = vlaneseq
    %v137 = vshrl.u32 %v136, 7
    %v138 = vsub.s32 2, %v137
    %v139 = vrot.slane %v126, %v138
    %v140 = vlaneseq
    %v141 = vshrl.u32 %v140, 7
    %v142 = vsub.s32 3, %v141
    %v143 = vrot.slane %v126, %v142
    %v144 = vlaneseq
    %v145 = vshrl.u32 %v144, 7
    %v146 = vsub.s32 4, %v145
    %v147 = vrot.slane %v126, %v146
    %v148 = vlaneseq
    %v149 = vshrl.u32 %v148, 7
    %v150 = vsub.s32 5, %v149
    %v151 = vrot.slane %v126, %v150
    %v152 = vlaneseq
    %v153 = vshrl.u32 %v152, 7
    %v154 = vsub.s32 6, %v153
    %v155 = vrot.slane %v126, %v154
    %v156 = vlaneseq
    %v157 = vshrl.u32 %v156, 7
    %v158 = vsub.s32 7, %v157
    %v159 = vrot.slane %v126, %v158
    %v176 = vunpack.c.l.b16 %v102
    %v177 = vunpack.c.l.b16 %v103
    %v178 = vunpack.c.l.b16 %v104
    %v179 = vunpack.c.l.b16 %v105
    %v180 = vunpack.c.l.b16 %v106
    %v181 = vunpack.c.l.b16 %v107
    %v182 = vunpack.c.l.b16 %v108
    %v183 = vunpack.c.l.b16 %v109
    %v184 = vpack.c.b16 %v177, %v176
    %v185 = vpack.c.b16 %v179, %v178
    %v186 = vpack.c.b16 %v181, %v180
    %v187 = vpack.c.b16 %v183, %v182
    %v204 = vunpack.c.l.b16 %v110
    %v205 = vunpack.c.h.b16 %v110
    %v206 = vunpack.c.l.b16 %v111
    %v207 = vunpack.c.h.b16 %v111
    %v208 = vunpack.c.l.b16 %v112
    %v209 = vunpack.c.h.b16 %v112
    %v210 = vunpack.c.l.b16 %v113
    %v211 = vunpack.c.h.b16 %v113
    %v212 = vunpack.c.l.b16 %v114
    %v213 = vunpack.c.h.b16 %v114
    %v214 = vunpack.c.l.b16 %v115
    %v215 = vunpack.c.h.b16 %v115
    %v216 = vunpack.c.l.b16 %v116
    %v217 = vunpack.c.h.b16 %v116
    %v218 = vunpack.c.l.b16 %v117
    %v219 = vunpack.c.h.b16 %v117
    %v220 = vunpack.c.l.b16 %v118
    %v221 = vunpack.c.h.b16 %v118
    %v222 = vunpack.c.l.b16 %v119
    %v223 = vunpack.c.h.b16 %v119
    %v224 = vunpack.c.l.b16 %v120
    %v225 = vunpack.c.h.b16 %v120
    %v226 = vunpack.c.l.b16 %v121
    %v227 = vunpack.c.h.b16 %v121
    %v228 = vunpack.c.l.b16 %v122
    %v229 = vunpack.c.h.b16 %v122
    %v230 = vunpack.c.l.b16 %v123
    %v231 = vunpack.c.h.b16 %v123
    %v232 = vunpack.c.l.b16 %v124
    %v233 = vunpack.c.h.b16 %v124
    %v234 = vunpack.c.l.b16 %v125
    %v235 = vunpack.c.h.b16 %v125
    %v236 = vpack.c.b16 %v212, %v204
    %v237 = vpack.c.b16 %v213, %v205
    %v238 = vpack.c.b16 %v214, %v206
    %v239 = vpack.c.b16 %v215, %v207
    %v240 = vpack.c.b16 %v216, %v208
    %v241 = vpack.c.b16 %v217, %v209
    %v242 = vpack.c.b16 %v218, %v210
    %v243 = vpack.c.b16 %v219, %v211
    %v244 = vpack.c.b16 %v228, %v220
    %v245 = vpack.c.b16 %v229, %v221
    %v246 = vpack.c.b16 %v230, %v222
    %v247 = vpack.c.b16 %v231, %v223
    %v248 = vpack.c.b16 %v232, %v224
    %v249 = vpack.c.b16 %v233, %v225
    %v250 = vpack.c.b16 %v234, %v226
    %v251 = vpack.c.b16 %v235, %v227
    %vm268 = vcmask 261120
    %v270 = vsel %vm268, %v184, 0
    %v273 = vsel %vm268, %v185, 0
    %v276 = vsel %vm268, %v186, 0
    %v279 = vsel %vm268, %v187, 0
    %281 = vmatprep.subr.bf16.mxu0 0
    %282 = vmatpush1.bf16.msra.mxu0 0
    %283 = vmatprep.subr.bf16.mxu0 0
    %284 = vmatpush1.bf16.msra.mxu0 0
    %285 = vmatprep.subr.bf16.mxu0 0
    %286 = vmatpush1.bf16.msra.mxu0 0
    %287 = vmatprep.subr.bf16.mxu0 0
    %288 = vmatpush1.bf16.msra.mxu0 0
    %289 = vmatprep.subr.bf16.mxu0 0
    %290 = vmatpush1.bf16.msra.mxu0 0
    %291 = vmatprep.subr.bf16.mxu0 0
    %292 = vmatpush1.bf16.msra.mxu0 0
    %293 = vmatprep.subr.bf16.mxu0 %v245
    %294 = vmatpush1.bf16.msra.mxu0 %v244
    %295 = vmatprep.subr.bf16.mxu0 %v237
    %296 = vmatpush1.bf16.msra.mxu0 %v236
    %297 = vmatprep.subr.bf16.mxu0 0
    %298 = vmatpush2.bf16.msra.mxu0 0
    %299 = vmatprep.subr.bf16.mxu0 0
    %300 = vmatpush2.bf16.msra.mxu0 0
    %301 = vmatprep.subr.bf16.mxu0 0
    %302 = vmatpush2.bf16.msra.mxu0 0
    %303 = vmatprep.subr.bf16.mxu0 0
    %304 = vmatpush2.bf16.msra.mxu0 0
    %305 = vmatprep.subr.bf16.mxu0 0
    %306 = vmatpush2.bf16.msra.mxu0 0
    %307 = vmatprep.subr.bf16.mxu0 0
    %308 = vmatpush2.bf16.msra.mxu0 0
    %309 = vmatprep.subr.bf16.mxu0 0
    %310 = vmatpush2.bf16.msra.mxu0 0
    %311 = vmatprep.subr.bf16.mxu0 0
    %312 = vmatpush2.bf16.msra.mxu0 0
    %313 = vmatprep.mubr.bf16.mxu0 0
    %314 = vmatmul.mubr.bf16.gmra.mxu0 %v270
    %v315 = vpop.f32.mrf.mxu0
    %v316 = vadd.f32 %v131, %v315
    %v317 = vpop.f32.mrf.mxu0
    %v318 = vadd.f32 %v135, %v317
    %v319 = vpop.f32.mrf.mxu0
    %v320 = vadd.f32 %v131, %v319
    %v321 = vpop.f32.mrf.mxu0
    %v322 = vadd.f32 %v135, %v321
    %323 = vmatprep.mubr.bf16.mxu0 0
    %324 = vmatmul.mubr.bf16.gmra.mxu0 %v273
    %v325 = vpop.f32.mrf.mxu0
    %v326 = vadd.f32 %v131, %v325
    %v327 = vpop.f32.mrf.mxu0
    %v328 = vadd.f32 %v135, %v327
    %v329 = vpop.f32.mrf.mxu0
    %v330 = vadd.f32 %v131, %v329
    %v331 = vpop.f32.mrf.mxu0
    %v332 = vadd.f32 %v135, %v331
    %333 = vmatprep.mubr.bf16.mxu0 0
    %334 = vmatmul.mubr.bf16.gmra.mxu0 %v276
    %v335 = vpop.f32.mrf.mxu0
    %v336 = vadd.f32 %v131, %v335
    %v337 = vpop.f32.mrf.mxu0
    %v338 = vadd.f32 %v135, %v337
    %v339 = vpop.f32.mrf.mxu0
    %v340 = vadd.f32 %v131, %v339
    %v341 = vpop.f32.mrf.mxu0
    %v342 = vadd.f32 %v135, %v341
    %343 = vmatprep.mubr.bf16.mxu0 0
    %344 = vmatmul.mubr.bf16.gmra.mxu0 %v279
    %v345 = vpop.f32.mrf.mxu0
    %v346 = vadd.f32 %v131, %v345
    %v347 = vpop.f32.mrf.mxu0
    %v348 = vadd.f32 %v135, %v347
    %v349 = vpop.f32.mrf.mxu0
    %v350 = vadd.f32 %v131, %v349
    %v351 = vpop.f32.mrf.mxu0
    %v352 = vadd.f32 %v135, %v351
    %353 = vdwg.mxu0
    %354 = vmatprep.subr.bf16.mxu0 0
    %355 = vmatpush1.bf16.msra.mxu0 0
    %356 = vmatprep.subr.bf16.mxu0 0
    %357 = vmatpush1.bf16.msra.mxu0 0
    %358 = vmatprep.subr.bf16.mxu0 0
    %359 = vmatpush1.bf16.msra.mxu0 0
    %360 = vmatprep.subr.bf16.mxu0 0
    %361 = vmatpush1.bf16.msra.mxu0 0
    %362 = vmatprep.subr.bf16.mxu0 0
    %363 = vmatpush1.bf16.msra.mxu0 0
    %364 = vmatprep.subr.bf16.mxu0 0
    %365 = vmatpush1.bf16.msra.mxu0 0
    %366 = vmatprep.subr.bf16.mxu0 %v247
    %367 = vmatpush1.bf16.msra.mxu0 %v246
    %368 = vmatprep.subr.bf16.mxu0 %v239
    %369 = vmatpush1.bf16.msra.mxu0 %v238
    %370 = vmatprep.subr.bf16.mxu0 0
    %371 = vmatpush2.bf16.msra.mxu0 0
    %372 = vmatprep.subr.bf16.mxu0 0
    %373 = vmatpush2.bf16.msra.mxu0 0
    %374 = vmatprep.subr.bf16.mxu0 0
    %375 = vmatpush2.bf16.msra.mxu0 0
    %376 = vmatprep.subr.bf16.mxu0 0
    %377 = vmatpush2.bf16.msra.mxu0 0
    %378 = vmatprep.subr.bf16.mxu0 0
    %379 = vmatpush2.bf16.msra.mxu0 0
    %380 = vmatprep.subr.bf16.mxu0 0
    %381 = vmatpush2.bf16.msra.mxu0 0
    %382 = vmatprep.subr.bf16.mxu0 0
    %383 = vmatpush2.bf16.msra.mxu0 0
    %384 = vmatprep.subr.bf16.mxu0 0
    %385 = vmatpush2.bf16.msra.mxu0 0
    %386 = vmatprep.mubr.bf16.mxu0 0
    %387 = vmatmul.mubr.bf16.gmra.mxu0 %v270
    %v388 = vpop.f32.mrf.mxu0
    %v389 = vadd.f32 %v139, %v388
    %v390 = vpop.f32.mrf.mxu0
    %v391 = vadd.f32 %v143, %v390
    %v392 = vpop.f32.mrf.mxu0
    %v393 = vadd.f32 %v139, %v392
    %v394 = vpop.f32.mrf.mxu0
    %v395 = vadd.f32 %v143, %v394
    %396 = vmatprep.mubr.bf16.mxu0 0
    %397 = vmatmul.mubr.bf16.gmra.mxu0 %v273
    %v398 = vpop.f32.mrf.mxu0
    %v399 = vadd.f32 %v139, %v398
    %v400 = vpop.f32.mrf.mxu0
    %v401 = vadd.f32 %v143, %v400
    %v402 = vpop.f32.mrf.mxu0
    %v403 = vadd.f32 %v139, %v402
    %v404 = vpop.f32.mrf.mxu0
    %v405 = vadd.f32 %v143, %v404
    %406 = vmatprep.mubr.bf16.mxu0 0
    %407 = vmatmul.mubr.bf16.gmra.mxu0 %v276
    %v408 = vpop.f32.mrf.mxu0
    %v409 = vadd.f32 %v139, %v408
    %v410 = vpop.f32.mrf.mxu0
    %v411 = vadd.f32 %v143, %v410
    %v412 = vpop.f32.mrf.mxu0
    %v413 = vadd.f32 %v139, %v412
    %v414 = vpop.f32.mrf.mxu0
    %v415 = vadd.f32 %v143, %v414
    %416 = vmatprep.mubr.bf16.mxu0 0
    %417 = vmatmul.mubr.bf16.gmra.mxu0 %v279
    %v418 = vpop.f32.mrf.mxu0
    %v419 = vadd.f32 %v139, %v418
    %v420 = vpop.f32.mrf.mxu0
    %v421 = vadd.f32 %v143, %v420
    %v422 = vpop.f32.mrf.mxu0
    %v423 = vadd.f32 %v139, %v422
    %v424 = vpop.f32.mrf.mxu0
    %v425 = vadd.f32 %v143, %v424
    %426 = vdwg.mxu0
    %427 = vmatprep.subr.bf16.mxu0 0
    %428 = vmatpush1.bf16.msra.mxu0 0
    %429 = vmatprep.subr.bf16.mxu0 0
    %430 = vmatpush1.bf16.msra.mxu0 0
    %431 = vmatprep.subr.bf16.mxu0 0
    %432 = vmatpush1.bf16.msra.mxu0 0
    %433 = vmatprep.subr.bf16.mxu0 0
    %434 = vmatpush1.bf16.msra.mxu0 0
    %435 = vmatprep.subr.bf16.mxu0 0
    %436 = vmatpush1.bf16.msra.mxu0 0
    %437 = vmatprep.subr.bf16.mxu0 0
    %438 = vmatpush1.bf16.msra.mxu0 0
    %439 = vmatprep.subr.bf16.mxu0 %v249
    %440 = vmatpush1.bf16.msra.mxu0 %v248
    %441 = vmatprep.subr.bf16.mxu0 %v241
    %442 = vmatpush1.bf16.msra.mxu0 %v240
    %443 = vmatprep.subr.bf16.mxu0 0
    %444 = vmatpush2.bf16.msra.mxu0 0
    %445 = vmatprep.subr.bf16.mxu0 0
    %446 = vmatpush2.bf16.msra.mxu0 0
    %447 = vmatprep.subr.bf16.mxu0 0
    %448 = vmatpush2.bf16.msra.mxu0 0
    %449 = vmatprep.subr.bf16.mxu0 0
    %450 = vmatpush2.bf16.msra.mxu0 0
    %451 = vmatprep.subr.bf16.mxu0 0
    %452 = vmatpush2.bf16.msra.mxu0 0
    %453 = vmatprep.subr.bf16.mxu0 0
    %454 = vmatpush2.bf16.msra.mxu0 0
    %455 = vmatprep.subr.bf16.mxu0 0
    %456 = vmatpush2.bf16.msra.mxu0 0
    %457 = vmatprep.subr.bf16.mxu0 0
    %458 = vmatpush2.bf16.msra.mxu0 0
    %459 = vmatprep.mubr.bf16.mxu0 0
    %460 = vmatmul.mubr.bf16.gmra.mxu0 %v270
    %v461 = vpop.f32.mrf.mxu0
    %v462 = vadd.f32 %v147, %v461
    %v463 = vpop.f32.mrf.mxu0
    %v464 = vadd.f32 %v151, %v463
    %v465 = vpop.f32.mrf.mxu0
    %v466 = vadd.f32 %v147, %v465
    %v467 = vpop.f32.mrf.mxu0
    %v468 = vadd.f32 %v151, %v467
    %469 = vmatprep.mubr.bf16.mxu0 0
    %470 = vmatmul.mubr.bf16.gmra.mxu0 %v273
    %v471 = vpop.f32.mrf.mxu0
    %v472 = vadd.f32 %v147, %v471
    %v473 = vpop.f32.mrf.mxu0
    %v474 = vadd.f32 %v151, %v473
    %v475 = vpop.f32.mrf.mxu0
    %v476 = vadd.f32 %v147, %v475
    %v477 = vpop.f32.mrf.mxu0
    %v478 = vadd.f32 %v151, %v477
    %479 = vmatprep.mubr.bf16.mxu0 0
    %480 = vmatmul.mubr.bf16.gmra.mxu0 %v276
    %v481 = vpop.f32.mrf.mxu0
    %v482 = vadd.f32 %v147, %v481
    %v483 = vpop.f32.mrf.mxu0
    %v484 = vadd.f32 %v151, %v483
    %v485 = vpop.f32.mrf.mxu0
    %v486 = vadd.f32 %v147, %v485
    %v487 = vpop.f32.mrf.mxu0
    %v488 = vadd.f32 %v151, %v487
    %489 = vmatprep.mubr.bf16.mxu0 0
    %490 = vmatmul.mubr.bf16.gmra.mxu0 %v279
    %v491 = vpop.f32.mrf.mxu0
    %v492 = vadd.f32 %v147, %v491
    %v493 = vpop.f32.mrf.mxu0
    %v494 = vadd.f32 %v151, %v493
    %v495 = vpop.f32.mrf.mxu0
    %v496 = vadd.f32 %v147, %v495
    %v497 = vpop.f32.mrf.mxu0
    %v498 = vadd.f32 %v151, %v497
    %499 = vdwg.mxu0
    %500 = vmatprep.subr.bf16.mxu0 0
    %501 = vmatpush1.bf16.msra.mxu0 0
    %502 = vmatprep.subr.bf16.mxu0 0
    %503 = vmatpush1.bf16.msra.mxu0 0
    %504 = vmatprep.subr.bf16.mxu0 0
    %505 = vmatpush1.bf16.msra.mxu0 0
    %506 = vmatprep.subr.bf16.mxu0 0
    %507 = vmatpush1.bf16.msra.mxu0 0
    %508 = vmatprep.subr.bf16.mxu0 0
    %509 = vmatpush1.bf16.msra.mxu0 0
    %510 = vmatprep.subr.bf16.mxu0 0
    %511 = vmatpush1.bf16.msra.mxu0 0
    %512 = vmatprep.subr.bf16.mxu0 %v251
    %513 = vmatpush1.bf16.msra.mxu0 %v250
    %514 = vmatprep.subr.bf16.mxu0 %v243
    %515 = vmatpush1.bf16.msra.mxu0 %v242
    %516 = vmatprep.subr.bf16.mxu0 0
    %517 = vmatpush2.bf16.msra.mxu0 0
    %518 = vmatprep.subr.bf16.mxu0 0
    %519 = vmatpush2.bf16.msra.mxu0 0
    %520 = vmatprep.subr.bf16.mxu0 0
    %521 = vmatpush2.bf16.msra.mxu0 0
    %522 = vmatprep.subr.bf16.mxu0 0
    %523 = vmatpush2.bf16.msra.mxu0 0
    %524 = vmatprep.subr.bf16.mxu0 0
    %525 = vmatpush2.bf16.msra.mxu0 0
    %526 = vmatprep.subr.bf16.mxu0 0
    %527 = vmatpush2.bf16.msra.mxu0 0
    %528 = vmatprep.subr.bf16.mxu0 0
    %529 = vmatpush2.bf16.msra.mxu0 0
    %530 = vmatprep.subr.bf16.mxu0 0
    %531 = vmatpush2.bf16.msra.mxu0 0
    %532 = vmatprep.mubr.bf16.mxu0 0
    %533 = vmatmul.mubr.bf16.gmra.mxu0 %v270
    %v534 = vpop.f32.mrf.mxu0
    %v535 = vadd.f32 %v155, %v534
    %v536 = vpop.f32.mrf.mxu0
    %v537 = vadd.f32 %v159, %v536
    %v538 = vpop.f32.mrf.mxu0
    %v539 = vadd.f32 %v155, %v538
    %v540 = vpop.f32.mrf.mxu0
    %v541 = vadd.f32 %v159, %v540
    %542 = vmatprep.mubr.bf16.mxu0 0
    %543 = vmatmul.mubr.bf16.gmra.mxu0 %v273
    %v544 = vpop.f32.mrf.mxu0
    %v545 = vadd.f32 %v155, %v544
    %v546 = vpop.f32.mrf.mxu0
    %v547 = vadd.f32 %v159, %v546
    %v548 = vpop.f32.mrf.mxu0
    %v549 = vadd.f32 %v155, %v548
    %v550 = vpop.f32.mrf.mxu0
    %v551 = vadd.f32 %v159, %v550
    %552 = vmatprep.mubr.bf16.mxu0 0
    %553 = vmatmul.mubr.bf16.gmra.mxu0 %v276
    %v554 = vpop.f32.mrf.mxu0
    %v555 = vadd.f32 %v155, %v554
    %v556 = vpop.f32.mrf.mxu0
    %v557 = vadd.f32 %v159, %v556
    %v558 = vpop.f32.mrf.mxu0
    %v559 = vadd.f32 %v155, %v558
    %v560 = vpop.f32.mrf.mxu0
    %v561 = vadd.f32 %v159, %v560
    %562 = vmatprep.mubr.bf16.mxu0 0
    %563 = vmatmul.mubr.bf16.gmra.mxu0 %v279
    %v564 = vpop.f32.mrf.mxu0
    %v565 = vadd.f32 %v155, %v564
    %v566 = vpop.f32.mrf.mxu0
    %v567 = vadd.f32 %v159, %v566
    %v568 = vpop.f32.mrf.mxu0
    %v569 = vadd.f32 %v155, %v568
    %v570 = vpop.f32.mrf.mxu0
    %v571 = vadd.f32 %v159, %v570
    %572 = vdwg.mxu0
    %573 = vst [vmem:[#allocation2] sm:$0xff] %v316
    %574 = vst [vmem:[#allocation2 + $0x8] sm:$0xff] %v318
    %575 = vst [vmem:[#allocation2 + $0x10] sm:$0xff] %v389
    %576 = vst [vmem:[#allocation2 + $0x18] sm:$0xff] %v391
    %577 = vst [vmem:[#allocation2 + $0x20] sm:$0xff] %v462
    %578 = vst [vmem:[#allocation2 + $0x28] sm:$0xff] %v464
    %579 = vst [vmem:[#allocation2 + $0x30] sm:$0xff] %v535
    %580 = vst [vmem:[#allocation2 + $0x38] sm:$0xff] %v537
    %581 = vst [vmem:[#allocation2 + $0x40] sm:$0xff] %v320
    %582 = vst [vmem:[#allocation2 + $0x48] sm:$0xff] %v322
    %583 = vst [vmem:[#allocation2 + $0x50] sm:$0xff] %v393
    %584 = vst [vmem:[#allocation2 + $0x58] sm:$0xff] %v395
    %585 = vst [vmem:[#allocation2 + $0x60] sm:$0xff] %v466
    %586 = vst [vmem:[#allocation2 + $0x68] sm:$0xff] %v468
    %587 = vst [vmem:[#allocation2 + $0x70] sm:$0xff] %v539
    %588 = vst [vmem:[#allocation2 + $0x78] sm:$0xff] %v541
    %589 = vst [vmem:[#allocation2 + $0x80] sm:$0xff] %v326
    %590 = vst [vmem:[#allocation2 + $0x88] sm:$0xff] %v328
    %591 = vst [vmem:[#allocation2 + $0x90] sm:$0xff] %v399
    %592 = vst [vmem:[#allocation2 + $0x98] sm:$0xff] %v401
    %593 = vst [vmem:[#allocation2 + $0xa0] sm:$0xff] %v472
    %594 = vst [vmem:[#allocation2 + $0xa8] sm:$0xff] %v474
    %595 = vst [vmem:[#allocation2 + $0xb0] sm:$0xff] %v545
    %596 = vst [vmem:[#allocation2 + $0xb8] sm:$0xff] %v547
    %597 = vst [vmem:[#allocation2 + $0xc0] sm:$0xff] %v330
    %598 = vst [vmem:[#allocation2 + $0xc8] sm:$0xff] %v332
    %599 = vst [vmem:[#allocation2 + $0xd0] sm:$0xff] %v403
    %600 = vst [vmem:[#allocation2 + $0xd8] sm:$0xff] %v405
    %601 = vst [vmem:[#allocation2 + $0xe0] sm:$0xff] %v476
    %602 = vst [vmem:[#allocation2 + $0xe8] sm:$0xff] %v478
    %603 = vst [vmem:[#allocation2 + $0xf0] sm:$0xff] %v549
    %604 = vst [vmem:[#allocation2 + $0xf8] sm:$0xff] %v551
    %605 = vst [vmem:[#allocation2 + $0x100] sm:$0xff] %v336
    %606 = vst [vmem:[#allocation2 + $0x108] sm:$0xff] %v338
    %607 = vst [vmem:[#allocation2 + $0x110] sm:$0xff] %v409
    %608 = vst [vmem:[#allocation2 + $0x118] sm:$0xff] %v411
    %609 = vst [vmem:[#allocation2 + $0x120] sm:$0xff] %v482
    %610 = vst [vmem:[#allocation2 + $0x128] sm:$0xff] %v484
    %611 = vst [vmem:[#allocation2 + $0x130] sm:$0xff] %v555
    %612 = vst [vmem:[#allocation2 + $0x138] sm:$0xff] %v557
    %613 = vst [vmem:[#allocation2 + $0x140] sm:$0xff] %v340
    %614 = vst [vmem:[#allocation2 + $0x148] sm:$0xff] %v342
    %615 = vst [vmem:[#allocation2 + $0x150] sm:$0xff] %v413
    %616 = vst [vmem:[#allocation2 + $0x158] sm:$0xff] %v415
    %617 = vst [vmem:[#allocation2 + $0x160] sm:$0xff] %v486
    %618 = vst [vmem:[#allocation2 + $0x168] sm:$0xff] %v488
    %619 = vst [vmem:[#allocation2 + $0x170] sm:$0xff] %v559
    %620 = vst [vmem:[#allocation2 + $0x178] sm:$0xff] %v561
    %621 = vst [vmem:[#allocation2 + $0x180] sm:$0xff] %v346
    %622 = vst [vmem:[#allocation2 + $0x188] sm:$0xff] %v348
    %623 = vst [vmem:[#allocation2 + $0x190] sm:$0xff] %v419
    %624 = vst [vmem:[#allocation2 + $0x198] sm:$0xff] %v421
    %625 = vst [vmem:[#allocation2 + $0x1a0] sm:$0xff] %v492
    %626 = vst [vmem:[#allocation2 + $0x1a8] sm:$0xff] %v494
    %627 = vst [vmem:[#allocation2 + $0x1b0] sm:$0xff] %v565
    %628 = vst [vmem:[#allocation2 + $0x1b8] sm:$0xff] %v567
    %629 = vst [vmem:[#allocation2 + $0x1c0] sm:$0xff] %v350
    %630 = vst [vmem:[#allocation2 + $0x1c8] sm:$0xff] %v352
    %631 = vst [vmem:[#allocation2 + $0x1d0] sm:$0xff] %v423
    %632 = vst [vmem:[#allocation2 + $0x1d8] sm:$0xff] %v425
    %633 = vst [vmem:[#allocation2 + $0x1e0] sm:$0xff] %v496
    %634 = vst [vmem:[#allocation2 + $0x1e8] sm:$0xff] %v498
    %635 = vst [vmem:[#allocation2 + $0x1f0] sm:$0xff] %v569
    %636 = vst [vmem:[#allocation2 + $0x1f8] sm:$0xff] %v571
    %v637 = vld [vmem:[#allocation6] sm:$0xff]
    %v638 = vld [vmem:[#allocation6 + $0x8] sm:$0xff]
    %v639 = vld [vmem:[#allocation6 + $0x10] sm:$0xff]
    %v640 = vld [vmem:[#allocation6 + $0x18] sm:$0xff]
    %v641 = vld [vmem:[#allocation6 + $0x20] sm:$0xff]
    %v642 = vld [vmem:[#allocation6 + $0x28] sm:$0xff]
    %v643 = vld [vmem:[#allocation6 + $0x30] sm:$0xff]
    %v644 = vld [vmem:[#allocation6 + $0x38] sm:$0xff]
    %v645 = vld [vmem:[#allocation6 + $0x40] sm:$0xff]
    %v646 = vld [vmem:[#allocation6 + $0x48] sm:$0xff]
    %v647 = vld [vmem:[#allocation6 + $0x50] sm:$0xff]
    %v648 = vld [vmem:[#allocation6 + $0x58] sm:$0xff]
    %v649 = vld [vmem:[#allocation6 + $0x60] sm:$0xff]
    %v650 = vld [vmem:[#allocation6 + $0x68] sm:$0xff]
    %v651 = vld [vmem:[#allocation6 + $0x70] sm:$0xff]
    %v652 = vld [vmem:[#allocation6 + $0x78] sm:$0xff]
    %v653 = vld [vmem:[#allocation6 + $0x80] sm:$0xff]
    %v654 = vld [vmem:[#allocation6 + $0x88] sm:$0xff]
    %v655 = vld [vmem:[#allocation6 + $0x90] sm:$0xff]
    %v656 = vld [vmem:[#allocation6 + $0x98] sm:$0xff]
    %v657 = vld [vmem:[#allocation6 + $0xa0] sm:$0xff]
    %v658 = vld [vmem:[#allocation6 + $0xa8] sm:$0xff]
    %v659 = vld [vmem:[#allocation6 + $0xb0] sm:$0xff]
    %v660 = vld [vmem:[#allocation6 + $0xb8] sm:$0xff]
    %v661 = vld [vmem:[#allocation6 + $0xc0] sm:$0xff]
    %v662 = vld [vmem:[#allocation6 + $0xc8] sm:$0xff]
    %v663 = vld [vmem:[#allocation6 + $0xd0] sm:$0xff]
    %v664 = vld [vmem:[#allocation6 + $0xd8] sm:$0xff]
    %v665 = vld [vmem:[#allocation6 + $0xe0] sm:$0xff]
    %v666 = vld [vmem:[#allocation6 + $0xe8] sm:$0xff]
    %v667 = vld [vmem:[#allocation6 + $0xf0] sm:$0xff]
    %v668 = vld [vmem:[#allocation6 + $0xf8] sm:$0xff]
    %v669 = vld [vmem:[#allocation8] sm:$0xff]
    %v670 = vld [vmem:[#allocation8 + $0x8] sm:$0xff]
    %v671 = vld [vmem:[#allocation8 + $0x10] sm:$0xff]
    %v672 = vld [vmem:[#allocation8 + $0x18] sm:$0xff]
    %v673 = vld [vmem:[#allocation8 + $0x20] sm:$0xff]
    %v674 = vld [vmem:[#allocation8 + $0x28] sm:$0xff]
    %v675 = vld [vmem:[#allocation8 + $0x30] sm:$0xff]
    %v676 = vld [vmem:[#allocation8 + $0x38] sm:$0xff]
    %v677 = vld [vmem:[#allocation8 + $0x40] sm:$0xff]
    %v678 = vld [vmem:[#allocation8 + $0x48] sm:$0xff]
    %v679 = vld [vmem:[#allocation8 + $0x50] sm:$0xff]
    %v680 = vld [vmem:[#allocation8 + $0x58] sm:$0xff]
    %v681 = vld [vmem:[#allocation8 + $0x60] sm:$0xff]
    %v682 = vld [vmem:[#allocation8 + $0x68] sm:$0xff]
    %v683 = vld [vmem:[#allocation8 + $0x70] sm:$0xff]
    %v684 = vld [vmem:[#allocation8 + $0x78] sm:$0xff]
    %v685 = vld [vmem:[#allocation8 + $0x80] sm:$0xff]
    %v686 = vld [vmem:[#allocation8 + $0x88] sm:$0xff]
    %v687 = vld [vmem:[#allocation8 + $0x90] sm:$0xff]
    %v688 = vld [vmem:[#allocation8 + $0x98] sm:$0xff]
    %v689 = vld [vmem:[#allocation8 + $0xa0] sm:$0xff]
    %v690 = vld [vmem:[#allocation8 + $0xa8] sm:$0xff]
    %v691 = vld [vmem:[#allocation8 + $0xb0] sm:$0xff]
    %v692 = vld [vmem:[#allocation8 + $0xb8] sm:$0xff]
    %v693 = vld [vmem:[#allocation8 + $0xc0] sm:$0xff]
    %v694 = vld [vmem:[#allocation8 + $0xc8] sm:$0xff]
    %v695 = vld [vmem:[#allocation8 + $0xd0] sm:$0xff]
    %v696 = vld [vmem:[#allocation8 + $0xd8] sm:$0xff]
    %v697 = vld [vmem:[#allocation8 + $0xe0] sm:$0xff]
    %v698 = vld [vmem:[#allocation8 + $0xe8] sm:$0xff]
    %v699 = vld [vmem:[#allocation8 + $0xf0] sm:$0xff]
    %v700 = vld [vmem:[#allocation8 + $0xf8] sm:$0xff]
    %v701 = vld [vmem:[#allocation2] sm:$0xff]
    %v702 = vld [vmem:[#allocation2 + $0x8] sm:$0xff]
    %v703 = vld [vmem:[#allocation2 + $0x10] sm:$0xff]
    %v704 = vld [vmem:[#allocation2 + $0x18] sm:$0xff]
    %v737 = vunpack.c.l.b16 %v637
    %v738 = vunpack.c.h.b16 %v637
    %v739 = vunpack.c.l.b16 %v638
    %v740 = vunpack.c.h.b16 %v638
    %v741 = vunpack.c.l.b16 %v639
    %v742 = vunpack.c.h.b16 %v639
    %v743 = vunpack.c.l.b16 %v640
    %v744 = vunpack.c.h.b16 %v640
    %v745 = vunpack.c.l.b16 %v641
    %v746 = vunpack.c.h.b16 %v641
    %v747 = vunpack.c.l.b16 %v642
    %v748 = vunpack.c.h.b16 %v642
    %v749 = vunpack.c.l.b16 %v643
    %v750 = vunpack.c.h.b16 %v643
    %v751 = vunpack.c.l.b16 %v644
    %v752 = vunpack.c.h.b16 %v644
    %v753 = vunpack.c.l.b16 %v645
    %v754 = vunpack.c.h.b16 %v645
    %v755 = vunpack.c.l.b16 %v646
    %v756 = vunpack.c.h.b16 %v646
    %v757 = vunpack.c.l.b16 %v647
    %v758 = vunpack.c.h.b16 %v647
    %v759 = vunpack.c.l.b16 %v648
    %v760 = vunpack.c.h.b16 %v648
    %v761 = vunpack.c.l.b16 %v649
    %v762 = vunpack.c.h.b16 %v649
    %v763 = vunpack.c.l.b16 %v650
    %v764 = vunpack.c.h.b16 %v650
    %v765 = vunpack.c.l.b16 %v651
    %v766 = vunpack.c.h.b16 %v651
    %v767 = vunpack.c.l.b16 %v652
    %v768 = vunpack.c.h.b16 %v652
    %v769 = vunpack.c.l.b16 %v653
    %v770 = vunpack.c.h.b16 %v653
    %v771 = vunpack.c.l.b16 %v654
    %v772 = vunpack.c.h.b16 %v654
    %v773 = vunpack.c.l.b16 %v655
    %v774 = vunpack.c.h.b16 %v655
    %v775 = vunpack.c.l.b16 %v656
    %v776 = vunpack.c.h.b16 %v656
    %v777 = vunpack.c.l.b16 %v657
    %v778 = vunpack.c.h.b16 %v657
    %v779 = vunpack.c.l.b16 %v658
    %v780 = vunpack.c.h.b16 %v658
    %v781 = vunpack.c.l.b16 %v659
    %v782 = vunpack.c.h.b16 %v659
    %v783 = vunpack.c.l.b16 %v660
    %v784 = vunpack.c.h.b16 %v660
    %v785 = vunpack.c.l.b16 %v661
    %v786 = vunpack.c.h.b16 %v661
    %v787 = vunpack.c.l.b16 %v662
    %v788 = vunpack.c.h.b16 %v662
    %v789 = vunpack.c.l.b16 %v663
    %v790 = vunpack.c.h.b16 %v663
    %v791 = vunpack.c.l.b16 %v664
    %v792 = vunpack.c.h.b16 %v664
    %v793 = vunpack.c.l.b16 %v665
    %v794 = vunpack.c.h.b16 %v665
    %v795 = vunpack.c.l.b16 %v666
    %v796 = vunpack.c.h.b16 %v666
    %v797 = vunpack.c.l.b16 %v667
    %v798 = vunpack.c.h.b16 %v667
    %v799 = vunpack.c.l.b16 %v668
    %v800 = vunpack.c.h.b16 %v668
    %v801 = vpack.c.b16 %v741, %v737
    %v802 = vpack.c.b16 %v742, %v738
    %v803 = vpack.c.b16 %v743, %v739
    %v804 = vpack.c.b16 %v744, %v740
    %v805 = vpack.c.b16 %v749, %v745
    %v806 = vpack.c.b16 %v750, %v746
    %v807 = vpack.c.b16 %v751, %v747
    %v808 = vpack.c.b16 %v752, %v748
    %v809 = vpack.c.b16 %v757, %v753
    %v810 = vpack.c.b16 %v758, %v754
    %v811 = vpack.c.b16 %v759, %v755
    %v812 = vpack.c.b16 %v760, %v756
    %v813 = vpack.c.b16 %v765, %v761
    %v814 = vpack.c.b16 %v766, %v762
    %v815 = vpack.c.b16 %v767, %v763
    %v816 = vpack.c.b16 %v768, %v764
    %v817 = vpack.c.b16 %v773, %v769
    %v818 = vpack.c.b16 %v774, %v770
    %v819 = vpack.c.b16 %v775, %v771
    %v820 = vpack.c.b16 %v776, %v772
    %v821 = vpack.c.b16 %v781, %v777
    %v822 = vpack.c.b16 %v782, %v778
    %v823 = vpack.c.b16 %v783, %v779
    %v824 = vpack.c.b16 %v784, %v780
    %v825 = vpack.c.b16 %v789, %v785
    %v826 = vpack.c.b16 %v790, %v786
    %v827 = vpack.c.b16 %v791, %v787
    %v828 = vpack.c.b16 %v792, %v788
    %v829 = vpack.c.b16 %v797, %v793
    %v830 = vpack.c.b16 %v798, %v794
    %v831 = vpack.c.b16 %v799, %v795
    %v832 = vpack.c.b16 %v800, %v796
    %865 = vmatprep.subr.bf16.mxu0 %v830
    %866 = vmatpush1.bf16.msra.mxu0 %v829
    %867 = vmatprep.subr.bf16.mxu0 %v826
    %868 = vmatpush1.bf16.msra.mxu0 %v825
    %869 = vmatprep.subr.bf16.mxu0 %v822
    %870 = vmatpush1.bf16.msra.mxu0 %v821
    %871 = vmatprep.subr.bf16.mxu0 %v818
    %872 = vmatpush1.bf16.msra.mxu0 %v817
    %873 = vmatprep.subr.bf16.mxu0 %v814
    %874 = vmatpush1.bf16.msra.mxu0 %v813
    %875 = vmatprep.subr.bf16.mxu0 %v810
    %876 = vmatpush1.bf16.msra.mxu0 %v809
    %877 = vmatprep.subr.bf16.mxu0 %v806
    %878 = vmatpush1.bf16.msra.mxu0 %v805
    %879 = vmatprep.subr.bf16.mxu0 %v802
    %880 = vmatpush1.bf16.msra.mxu0 %v801
    %881 = vmatprep.subr.bf16.mxu0 0
    %882 = vmatpush2.bf16.msra.mxu0 0
    %883 = vmatprep.subr.bf16.mxu0 0
    %884 = vmatpush2.bf16.msra.mxu0 0
    %885 = vmatprep.subr.bf16.mxu0 0
    %886 = vmatpush2.bf16.msra.mxu0 0
    %887 = vmatprep.subr.bf16.mxu0 0
    %888 = vmatpush2.bf16.msra.mxu0 0
    %889 = vmatprep.subr.bf16.mxu0 0
    %890 = vmatpush2.bf16.msra.mxu0 0
    %891 = vmatprep.subr.bf16.mxu0 0
    %892 = vmatpush2.bf16.msra.mxu0 0
    %893 = vmatprep.subr.bf16.mxu0 0
    %894 = vmatpush2.bf16.msra.mxu0 0
    %895 = vmatprep.subr.bf16.mxu0 0
    %896 = vmatpush2.bf16.msra.mxu0 0
    %897 = vmatprep.mubr.bf16.mxu0 0
    %898 = vmatmul.mubr.bf16.gmra.mxu0 0
    %v899 = vpop.f32.mrf.mxu0
    %v900 = vadd.f32 0.0, %v899
    %v901 = vpop.f32.mrf.mxu0
    %v902 = vadd.f32 0.0, %v901
    %v903 = vpop.f32.mrf.mxu0
    %v904 = vpop.f32.mrf.mxu0
    %905 = vdwg.mxu0
    %906 = vmatprep.subr.bf16.mxu0 %v832
    %907 = vmatpush1.bf16.msra.mxu0 %v831
    %908 = vmatprep.subr.bf16.mxu0 %v828
    %909 = vmatpush1.bf16.msra.mxu0 %v827
    %910 = vmatprep.subr.bf16.mxu0 %v824
    %911 = vmatpush1.bf16.msra.mxu0 %v823
    %912 = vmatprep.subr.bf16.mxu0 %v820
    %913 = vmatpush1.bf16.msra.mxu0 %v819
    %914 = vmatprep.subr.bf16.mxu0 %v816
    %915 = vmatpush1.bf16.msra.mxu0 %v815
    %916 = vmatprep.subr.bf16.mxu0 %v812
    %917 = vmatpush1.bf16.msra.mxu0 %v811
    %918 = vmatprep.subr.bf16.mxu0 %v808
    %919 = vmatpush1.bf16.msra.mxu0 %v807
    %920 = vmatprep.subr.bf16.mxu0 %v804
    %921 = vmatpush1.bf16.msra.mxu0 %v803
    %922 = vmatprep.subr.bf16.mxu0 0
    %923 = vmatpush2.bf16.msra.mxu0 0
    %924 = vmatprep.subr.bf16.mxu0 0
    %925 = vmatpush2.bf16.msra.mxu0 0
    %926 = vmatprep.subr.bf16.mxu0 0
    %927 = vmatpush2.bf16.msra.mxu0 0
    %928 = vmatprep.subr.bf16.mxu0 0
    %929 = vmatpush2.bf16.msra.mxu0 0
    %930 = vmatprep.subr.bf16.mxu0 0
    %931 = vmatpush2.bf16.msra.mxu0 0
    %932 = vmatprep.subr.bf16.mxu0 0
    %933 = vmatpush2.bf16.msra.mxu0 0
    %934 = vmatprep.subr.bf16.mxu0 0
    %935 = vmatpush2.bf16.msra.mxu0 0
    %936 = vmatprep.subr.bf16.mxu0 0
    %937 = vmatpush2.bf16.msra.mxu0 0
    %938 = vmatprep.mubr.bf16.mxu0 0
    %939 = vmatmul.mubr.bf16.gmra.mxu0 0
    %v940 = vpop.f32.mrf.mxu0
    %v941 = vadd.f32 0.0, %v940
    %v942 = vpop.f32.mrf.mxu0
    %v943 = vadd.f32 0.0, %v942
    %v944 = vpop.f32.mrf.mxu0
    %v945 = vpop.f32.mrf.mxu0
    %946 = vdwg.mxu0
    %v947 = vadd.f32 %v701, %v900
    %v948 = vadd.f32 %v702, %v902
    %v949 = vadd.f32 %v703, %v941
    %v950 = vadd.f32 %v704, %v943
    %v951 = vsub.f32 0.0, %v947
    %v952 = vmul.f32 %v951, 1.442695
    %v953 = vpow.pop %v952
    %v954 = vadd.f32 %v953, 1.0
    %v955 = vrcp.pop %v954
    %v956 = vsub.f32 0.0, %v948
    %v957 = vmul.f32 %v956, 1.442695
    %v958 = vpow.pop %v957
    %v959 = vadd.f32 %v958, 1.0
    %v960 = vrcp.pop %v959
    %v961 = vtanh.pop %v949
    %v962 = vsub.f32 0.0, %v950
    %v963 = vmul.f32 %v962, 1.442695
    %v964 = vpow.pop %v963
    %v965 = vadd.f32 %v964, 1.0
    %v966 = vrcp.pop %v965
    %v967 = vmul.f32 %v960, 0.0
    %v968 = vmul.f32 %v955, %v961
    %v969 = vadd.f32 %v967, %v968
    %v970 = vtanh.pop %v969
    %v971 = vmul.f32 %v966, %v970
    %v972 = vld [vmem:[#allocation2 + $0x40] sm:$0xff]
    %v973 = vld [vmem:[#allocation2 + $0x48] sm:$0xff]
    %v974 = vld [vmem:[#allocation2 + $0x50] sm:$0xff]
    %v975 = vld [vmem:[#allocation2 + $0x58] sm:$0xff]
    %v976 = vpack.c.bf16 %v971, %v971
    %977 = vmatprep.subr.bf16.mxu0 %v830
    %978 = vmatpush1.bf16.msra.mxu0 %v829
    %979 = vmatprep.subr.bf16.mxu0 %v826
    %980 = vmatpush1.bf16.msra.mxu0 %v825
    %981 = vmatprep.subr.bf16.mxu0 %v822
    %982 = vmatpush1.bf16.msra.mxu0 %v821
    %983 = vmatprep.subr.bf16.mxu0 %v818
    %984 = vmatpush1.bf16.msra.mxu0 %v817
    %985 = vmatprep.subr.bf16.mxu0 %v814
    %986 = vmatpush1.bf16.msra.mxu0 %v813
    %987 = vmatprep.subr.bf16.mxu0 %v810
    %988 = vmatpush1.bf16.msra.mxu0 %v809
    %989 = vmatprep.subr.bf16.mxu0 %v806
    %990 = vmatpush1.bf16.msra.mxu0 %v805
    %991 = vmatprep.subr.bf16.mxu0 %v802
    %992 = vmatpush1.bf16.msra.mxu0 %v801
    %993 = vmatprep.subr.bf16.mxu0 0
    %994 = vmatpush2.bf16.msra.mxu0 0
    %995 = vmatprep.subr.bf16.mxu0 0
    %996 = vmatpush2.bf16.msra.mxu0 0
    %997 = vmatprep.subr.bf16.mxu0 0
    %998 = vmatpush2.bf16.msra.mxu0 0
    %999 = vmatprep.subr.bf16.mxu0 0
    %1000 = vmatpush2.bf16.msra.mxu0 0
    %1001 = vmatprep.subr.bf16.mxu0 0
    %1002 = vmatpush2.bf16.msra.mxu0 0
    %1003 = vmatprep.subr.bf16.mxu0 0
    %1004 = vmatpush2.bf16.msra.mxu0 0
    %1005 = vmatprep.subr.bf16.mxu0 0
    %1006 = vmatpush2.bf16.msra.mxu0 0
    %1007 = vmatprep.subr.bf16.mxu0 0
    %1008 = vmatpush2.bf16.msra.mxu0 0
    %1009 = vmatprep.mubr.bf16.mxu0 0
    %1010 = vmatmul.mubr.bf16.gmra.mxu0 %v976
    %v1011 = vpop.f32.mrf.mxu0
    %v1012 = vadd.f32 0.0, %v1011
    %v1013 = vpop.f32.mrf.mxu0
    %v1014 = vadd.f32 0.0, %v1013
    %v1015 = vpop.f32.mrf.mxu0
    %v1016 = vpop.f32.mrf.mxu0
    %1017 = vdwg.mxu0
    %1018 = vmatprep.subr.bf16.mxu0 %v832
    %1019 = vmatpush1.bf16.msra.mxu0 %v831
    %1020 = vmatprep.subr.bf16.mxu0 %v828
    %1021 = vmatpush1.bf16.msra.mxu0 %v827
    %1022 = vmatprep.subr.bf16.mxu0 %v824
    %1023 = vmatpush1.bf16.msra.mxu0 %v823
    %1024 = vmatprep.subr.bf16.mxu0 %v820
    %1025 = vmatpush1.bf16.msra.mxu0 %v819
    %1026 = vmatprep.subr.bf16.mxu0 %v816
    %1027 = vmatpush1.bf16.msra.mxu0 %v815
    %1028 = vmatprep.subr.bf16.mxu0 %v812
    %1029 = vmatpush1.bf16.msra.mxu0 %v811
    %1030 = vmatprep.subr.bf16.mxu0 %v808
    %1031 = vmatpush1.bf16.msra.mxu0 %v807
    %1032 = vmatprep.subr.bf16.mxu0 %v804
    %1033 = vmatpush1.bf16.msra.mxu0 %v803
    %1034 = vmatprep.subr.bf16.mxu0 0
    %1035 = vmatpush2.bf16.msra.mxu0 0
    %1036 = vmatprep.subr.bf16.mxu0 0
    %1037 = vmatpush2.bf16.msra.mxu0 0
    %1038 = vmatprep.subr.bf16.mxu0 0
    %1039 = vmatpush2.bf16.msra.mxu0 0
    %1040 = vmatprep.subr.bf16.mxu0 0
    %1041 = vmatpush2.bf16.msra.mxu0 0
    %1042 = vmatprep.subr.bf16.mxu0 0
    %1043 = vmatpush2.bf16.msra.mxu0 0
    %1044 = vmatprep.subr.bf16.mxu0 0
    %1045 = vmatpush2.bf16.msra.mxu0 0
    %1046 = vmatprep.subr.bf16.mxu0 0
    %1047 = vmatpush2.bf16.msra.mxu0 0
    %1048 = vmatprep.subr.bf16.mxu0 0
    %1049 = vmatpush2.bf16.msra.mxu0 0
    %1050 = vmatprep.mubr.bf16.mxu0 0
    %1051 = vmatmul.mubr.bf16.gmra.mxu0 %v976
    %v1052 = vpop.f32.mrf.mxu0
    %v1053 = vadd.f32 0.0, %v1052
    %v1054 = vpop.f32.mrf.mxu0
    %v1055 = vadd.f32 0.0, %v1054
    %v1056 = vpop.f32.mrf.mxu0
    %v1057 = vpop.f32.mrf.mxu0
    %1058 = vdwg.mxu0
    %v1059 = vadd.f32 %v972, %v1012
    %v1060 = vadd.f32 %v973, %v1014
    %v1061 = vadd.f32 %v974, %v1053
    %v1062 = vadd.f32 %v975, %v1055
    %v1063 = vsub.f32 0.0, %v1059
    %v1064 = vmul.f32 %v1063, 1.442695
    %v1065 = vpow.pop %v1064
    %v1066 = vadd.f32 %v1065, 1.0
    %v1067 = vrcp.pop %v1066
    %v1068 = vsub.f32 0.0, %v1060
    %v1069 = vmul.f32 %v1068, 1.442695
    %v1070 = vpow.pop %v1069
    %v1071 = vadd.f32 %v1070, 1.0
    %v1072 = vrcp.pop %v1071
    %v1073 = vtanh.pop %v1061
    %v1074 = vsub.f32 0.0, %v1062
    %v1075 = vmul.f32 %v1074, 1.442695
    %v1076 = vpow.pop %v1075
    %v1077 = vadd.f32 %v1076, 1.0
    %v1078 = vrcp.pop %v1077
    %v1079 = vmul.f32 %v1072, %v969
    %v1080 = vmul.f32 %v1067, %v1073
    %v1081 = vadd.f32 %v1079, %v1080
    %v1082 = vtanh.pop %v1081
    %v1083 = vmul.f32 %v1078, %v1082
    %v1084 = vld [vmem:[#allocation2 + $0x80] sm:$0xff]
    %v1085 = vld [vmem:[#allocation2 + $0x88] sm:$0xff]
    %v1086 = vld [vmem:[#allocation2 + $0x90] sm:$0xff]
    %v1087 = vld [vmem:[#allocation2 + $0x98] sm:$0xff]
    %v1088 = vpack.c.bf16 %v1083, %v1083
    %1089 = vmatprep.subr.bf16.mxu0 %v830
    %1090 = vmatpush1.bf16.msra.mxu0 %v829
    %1091 = vmatprep.subr.bf16.mxu0 %v826
    %1092 = vmatpush1.bf16.msra.mxu0 %v825
    %1093 = vmatprep.subr.bf16.mxu0 %v822
    %1094 = vmatpush1.bf16.msra.mxu0 %v821
    %1095 = vmatprep.subr.bf16.mxu0 %v818
    %1096 = vmatpush1.bf16.msra.mxu0 %v817
    %1097 = vmatprep.subr.bf16.mxu0 %v814
    %1098 = vmatpush1.bf16.msra.mxu0 %v813
    %1099 = vmatprep.subr.bf16.mxu0 %v810
    %1100 = vmatpush1.bf16.msra.mxu0 %v809
    %1101 = vmatprep.subr.bf16.mxu0 %v806
    %1102 = vmatpush1.bf16.msra.mxu0 %v805
    %1103 = vmatprep.subr.bf16.mxu0 %v802
    %1104 = vmatpush1.bf16.msra.mxu0 %v801
    %1105 = vmatprep.subr.bf16.mxu0 0
    %1106 = vmatpush2.bf16.msra.mxu0 0
    %1107 = vmatprep.subr.bf16.mxu0 0
    %1108 = vmatpush2.bf16.msra.mxu0 0
    %1109 = vmatprep.subr.bf16.mxu0 0
    %1110 = vmatpush2.bf16.msra.mxu0 0
    %1111 = vmatprep.subr.bf16.mxu0 0
    %1112 = vmatpush2.bf16.msra.mxu0 0
    %1113 = vmatprep.subr.bf16.mxu0 0
    %1114 = vmatpush2.bf16.msra.mxu0 0
    %1115 = vmatprep.subr.bf16.mxu0 0
    %1116 = vmatpush2.bf16.msra.mxu0 0
    %1117 = vmatprep.subr.bf16.mxu0 0
    %1118 = vmatpush2.bf16.msra.mxu0 0
    %1119 = vmatprep.subr.bf16.mxu0 0
    %1120 = vmatpush2.bf16.msra.mxu0 0
    %1121 = vmatprep.mubr.bf16.mxu0 0
    %1122 = vmatmul.mubr.bf16.gmra.mxu0 %v1088
    %v1123 = vpop.f32.mrf.mxu0
    %v1124 = vadd.f32 0.0, %v1123
    %v1125 = vpop.f32.mrf.mxu0
    %v1126 = vadd.f32 0.0, %v1125
    %v1127 = vpop.f32.mrf.mxu0
    %v1128 = vpop.f32.mrf.mxu0
    %1129 = vdwg.mxu0
    %1130 = vmatprep.subr.bf16.mxu0 %v832
    %1131 = vmatpush1.bf16.msra.mxu0 %v831
    %1132 = vmatprep.subr.bf16.mxu0 %v828
    %1133 = vmatpush1.bf16.msra.mxu0 %v827
    %1134 = vmatprep.subr.bf16.mxu0 %v824
    %1135 = vmatpush1.bf16.msra.mxu0 %v823
    %1136 = vmatprep.subr.bf16.mxu0 %v820
    %1137 = vmatpush1.bf16.msra.mxu0 %v819
    %1138 = vmatprep.subr.bf16.mxu0 %v816
    %1139 = vmatpush1.bf16.msra.mxu0 %v815
    %1140 = vmatprep.subr.bf16.mxu0 %v812
    %1141 = vmatpush1.bf16.msra.mxu0 %v811
    %1142 = vmatprep.subr.bf16.mxu0 %v808
    %1143 = vmatpush1.bf16.msra.mxu0 %v807
    %1144 = vmatprep.subr.bf16.mxu0 %v804
    %1145 = vmatpush1.bf16.msra.mxu0 %v803
    %1146 = vmatprep.subr.bf16.mxu0 0
    %1147 = vmatpush2.bf16.msra.mxu0 0
    %1148 = vmatprep.subr.bf16.mxu0 0
    %1149 = vmatpush2.bf16.msra.mxu0 0
    %1150 = vmatprep.subr.bf16.mxu0 0
    %1151 = vmatpush2.bf16.msra.mxu0 0
    %1152 = vmatprep.subr.bf16.mxu0 0
    %1153 = vmatpush2.bf16.msra.mxu0 0
    %1154 = vmatprep.subr.bf16.mxu0 0
    %1155 = vmatpush2.bf16.msra.mxu0 0
    %1156 = vmatprep.subr.bf16.mxu0 0
    %1157 = vmatpush2.bf16.msra.mxu0 0
    %1158 = vmatprep.subr.bf16.mxu0 0
    %1159 = vmatpush2.bf16.msra.mxu0 0
    %1160 = vmatprep.subr.bf16.mxu0 0
    %1161 = vmatpush2.bf16.msra.mxu0 0
    %1162 = vmatprep.mubr.bf16.mxu0 0
    %1163 = vmatmul.mubr.bf16.gmra.mxu0 %v1088
    %v1164 = vpop.f32.mrf.mxu0
    %v1165 = vadd.f32 0.0, %v1164
    %v1166 = vpop.f32.mrf.mxu0
    %v1167 = vadd.f32 0.0, %v1166
    %v1168 = vpop.f32.mrf.mxu0
    %v1169 = vpop.f32.mrf.mxu0
    %1170 = vdwg.mxu0
    %v1171 = vadd.f32 %v1084, %v1124
    %v1172 = vadd.f32 %v1085, %v1126
    %v1173 = vadd.f32 %v1086, %v1165
    %v1174 = vadd.f32 %v1087, %v1167
    %v1175 = vsub.f32 0.0, %v1171
    %v1176 = vmul.f32 %v1175, 1.442695
    %v1177 = vpow.pop %v1176
    %v1178 = vadd.f32 %v1177, 1.0
    %v1179 = vrcp.pop %v1178
    %v1180 = vsub.f32 0.0, %v1172
    %v1181 = vmul.f32 %v1180, 1.442695
    %v1182 = vpow.pop %v1181
    %v1183 = vadd.f32 %v1182, 1.0
    %v1184 = vrcp.pop %v1183
    %v1185 = vtanh.pop %v1173
    %v1186 = vsub.f32 0.0, %v1174
    %v1187 = vmul.f32 %v1186, 1.442695
    %v1188 = vpow.pop %v1187
    %v1189 = vadd.f32 %v1188, 1.0
    %v1190 = vrcp.pop %v1189
    %v1191 = vmul.f32 %v1184, %v1081
    %v1192 = vmul.f32 %v1179, %v1185
    %v1193 = vadd.f32 %v1191, %v1192
    %v1194 = vtanh.pop %v1193
    %v1195 = vmul.f32 %v1190, %v1194
    %v1196 = vld [vmem:[#allocation2 + $0xc0] sm:$0xff]
    %v1197 = vld [vmem:[#allocation2 + $0xc8] sm:$0xff]
    %v1198 = vld [vmem:[#allocation2 + $0xd0] sm:$0xff]
    %v1199 = vld [vmem:[#allocation2 + $0xd8] sm:$0xff]
    %v1200 = vpack.c.bf16 %v1195, %v1195
    %1201 = vmatprep.subr.bf16.mxu0 %v830
    %1202 = vmatpush1.bf16.msra.mxu0 %v829
    %1203 = vmatprep.subr.bf16.mxu0 %v826
    %1204 = vmatpush1.bf16.msra.mxu0 %v825
    %1205 = vmatprep.subr.bf16.mxu0 %v822
    %1206 = vmatpush1.bf16.msra.mxu0 %v821
    %1207 = vmatprep.subr.bf16.mxu0 %v818
    %1208 = vmatpush1.bf16.msra.mxu0 %v817
    %1209 = vmatprep.subr.bf16.mxu0 %v814
    %1210 = vmatpush1.bf16.msra.mxu0 %v813
    %1211 = vmatprep.subr.bf16.mxu0 %v810
    %1212 = vmatpush1.bf16.msra.mxu0 %v809
    %1213 = vmatprep.subr.bf16.mxu0 %v806
    %1214 = vmatpush1.bf16.msra.mxu0 %v805
    %1215 = vmatprep.subr.bf16.mxu0 %v802
    %1216 = vmatpush1.bf16.msra.mxu0 %v801
    %1217 = vmatprep.subr.bf16.mxu0 0
    %1218 = vmatpush2.bf16.msra.mxu0 0
    %1219 = vmatprep.subr.bf16.mxu0 0
    %1220 = vmatpush2.bf16.msra.mxu0 0
    %1221 = vmatprep.subr.bf16.mxu0 0
    %1222 = vmatpush2.bf16.msra.mxu0 0
    %1223 = vmatprep.subr.bf16.mxu0 0
    %1224 = vmatpush2.bf16.msra.mxu0 0
    %1225 = vmatprep.subr.bf16.mxu0 0
    %1226 = vmatpush2.bf16.msra.mxu0 0
    %1227 = vmatprep.subr.bf16.mxu0 0
    %1228 = vmatpush2.bf16.msra.mxu0 0
    %1229 = vmatprep.subr.bf16.mxu0 0
    %1230 = vmatpush2.bf16.msra.mxu0 0
    %1231 = vmatprep.subr.bf16.mxu0 0
    %1232 = vmatpush2.bf16.msra.mxu0 0
    %1233 = vmatprep.mubr.bf16.mxu0 0
    %1234 = vmatmul.mubr.bf16.gmra.mxu0 %v1200
    %v1235 = vpop.f32.mrf.mxu0
    %v1236 = vadd.f32 0.0, %v1235
    %v1237 = vpop.f32.mrf.mxu0
    %v1238 = vadd.f32 0.0, %v1237
    %v1239 = vpop.f32.mrf.mxu0
    %v1240 = vpop.f32.mrf.mxu0
    %1241 = vdwg.mxu0
    %1242 = vmatprep.subr.bf16.mxu0 %v832
    %1243 = vmatpush1.bf16.msra.mxu0 %v831
    %1244 = vmatprep.subr.bf16.mxu0 %v828
    %1245 = vmatpush1.bf16.msra.mxu0 %v827
    %1246 = vmatprep.subr.bf16.mxu0 %v824
    %1247 = vmatpush1.bf16.msra.mxu0 %v823
    %1248 = vmatprep.subr.bf16.mxu0 %v820
    %1249 = vmatpush1.bf16.msra.mxu0 %v819
    %1250 = vmatprep.subr.bf16.mxu0 %v816
    %1251 = vmatpush1.bf16.msra.mxu0 %v815
    %1252 = vmatprep.subr.bf16.mxu0 %v812
    %1253 = vmatpush1.bf16.msra.mxu0 %v811
    %1254 = vmatprep.subr.bf16.mxu0 %v808
    %1255 = vmatpush1.bf16.msra.mxu0 %v807
    %1256 = vmatprep.subr.bf16.mxu0 %v804
    %1257 = vmatpush1.bf16.msra.mxu0 %v803
    %1258 = vmatprep.subr.bf16.mxu0 0
    %1259 = vmatpush2.bf16.msra.mxu0 0
    %1260 = vmatprep.subr.bf16.mxu0 0
    %1261 = vmatpush2.bf16.msra.mxu0 0
    %1262 = vmatprep.subr.bf16.mxu0 0
    %1263 = vmatpush2.bf16.msra.mxu0 0
    %1264 = vmatprep.subr.bf16.mxu0 0
    %1265 = vmatpush2.bf16.msra.mxu0 0
    %1266 = vmatprep.subr.bf16.mxu0 0
    %1267 = vmatpush2.bf16.msra.mxu0 0
    %1268 = vmatprep.subr.bf16.mxu0 0
    %1269 = vmatpush2.bf16.msra.mxu0 0
    %1270 = vmatprep.subr.bf16.mxu0 0
    %1271 = vmatpush2.bf16.msra.mxu0 0
    %1272 = vmatprep.subr.bf16.mxu0 0
    %1273 = vmatpush2.bf16.msra.mxu0 0
    %1274 = vmatprep.mubr.bf16.mxu0 0
    %1275 = vmatmul.mubr.bf16.gmra.mxu0 %v1200
    %v1276 = vpop.f32.mrf.mxu0
    %v1277 = vadd.f32 0.0, %v1276
    %v1278 = vpop.f32.mrf.mxu0
    %v1279 = vadd.f32 0.0, %v1278
    %v1280 = vpop.f32.mrf.mxu0
    %v1281 = vpop.f32.mrf.mxu0
    %1282 = vdwg.mxu0
    %v1283 = vadd.f32 %v1196, %v1236
    %v1284 = vadd.f32 %v1197, %v1238
    %v1285 = vadd.f32 %v1198, %v1277
    %v1286 = vadd.f32 %v1199, %v1279
    %v1287 = vsub.f32 0.0, %v1283
    %v1288 = vmul.f32 %v1287, 1.442695
    %v1289 = vpow.pop %v1288
    %v1290 = vadd.f32 %v1289, 1.0
    %v1291 = vrcp.pop %v1290
    %v1292 = vsub.f32 0.0, %v1284
    %v1293 = vmul.f32 %v1292, 1.442695
    %v1294 = vpow.pop %v1293
    %v1295 = vadd.f32 %v1294, 1.0
    %v1296 = vrcp.pop %v1295
    %v1297 = vtanh.pop %v1285
    %v1298 = vsub.f32 0.0, %v1286
    %v1299 = vmul.f32 %v1298, 1.442695
    %v1300 = vpow.pop %v1299
    %v1301 = vadd.f32 %v1300, 1.0
    %v1302 = vrcp.pop %v1301
    %v1303 = vmul.f32 %v1296, %v1193
    %v1304 = vmul.f32 %v1291, %v1297
    %v1305 = vadd.f32 %v1303, %v1304
    %v1306 = vtanh.pop %v1305
    %v1307 = vmul.f32 %v1302, %v1306
    %v1308 = vld [vmem:[#allocation2 + $0x100] sm:$0xff]
    %v1309 = vld [vmem:[#allocation2 + $0x108] sm:$0xff]
    %v1310 = vld [vmem:[#allocation2 + $0x110] sm:$0xff]
    %v1311 = vld [vmem:[#allocation2 + $0x118] sm:$0xff]
    %v1312 = vpack.c.bf16 %v1307, %v1307
    %1313 = vmatprep.subr.bf16.mxu0 %v830
    %1314 = vmatpush1.bf16.msra.mxu0 %v829
    %1315 = vmatprep.subr.bf16.mxu0 %v826
    %1316 = vmatpush1.bf16.msra.mxu0 %v825
    %1317 = vmatprep.subr.bf16.mxu0 %v822
    %1318 = vmatpush1.bf16.msra.mxu0 %v821
    %1319 = vmatprep.subr.bf16.mxu0 %v818
    %1320 = vmatpush1.bf16.msra.mxu0 %v817
    %1321 = vmatprep.subr.bf16.mxu0 %v814
    %1322 = vmatpush1.bf16.msra.mxu0 %v813
    %1323 = vmatprep.subr.bf16.mxu0 %v810
    %1324 = vmatpush1.bf16.msra.mxu0 %v809
    %1325 = vmatprep.subr.bf16.mxu0 %v806
    %1326 = vmatpush1.bf16.msra.mxu0 %v805
    %1327 = vmatprep.subr.bf16.mxu0 %v802
    %1328 = vmatpush1.bf16.msra.mxu0 %v801
    %1329 = vmatprep.subr.bf16.mxu0 0
    %1330 = vmatpush2.bf16.msra.mxu0 0
    %1331 = vmatprep.subr.bf16.mxu0 0
    %1332 = vmatpush2.bf16.msra.mxu0 0
    %1333 = vmatprep.subr.bf16.mxu0 0
    %1334 = vmatpush2.bf16.msra.mxu0 0
    %1335 = vmatprep.subr.bf16.mxu0 0
    %1336 = vmatpush2.bf16.msra.mxu0 0
    %1337 = vmatprep.subr.bf16.mxu0 0
    %1338 = vmatpush2.bf16.msra.mxu0 0
    %1339 = vmatprep.subr.bf16.mxu0 0
    %1340 = vmatpush2.bf16.msra.mxu0 0
    %1341 = vmatprep.subr.bf16.mxu0 0
    %1342 = vmatpush2.bf16.msra.mxu0 0
    %1343 = vmatprep.subr.bf16.mxu0 0
    %1344 = vmatpush2.bf16.msra.mxu0 0
    %1345 = vmatprep.mubr.bf16.mxu0 0
    %1346 = vmatmul.mubr.bf16.gmra.mxu0 %v1312
    %v1347 = vpop.f32.mrf.mxu0
    %v1348 = vadd.f32 0.0, %v1347
    %v1349 = vpop.f32.mrf.mxu0
    %v1350 = vadd.f32 0.0, %v1349
    %v1351 = vpop.f32.mrf.mxu0
    %v1352 = vpop.f32.mrf.mxu0
    %1353 = vdwg.mxu0
    %1354 = vmatprep.subr.bf16.mxu0 %v832
    %1355 = vmatpush1.bf16.msra.mxu0 %v831
    %1356 = vmatprep.subr.bf16.mxu0 %v828
    %1357 = vmatpush1.bf16.msra.mxu0 %v827
    %1358 = vmatprep.subr.bf16.mxu0 %v824
    %1359 = vmatpush1.bf16.msra.mxu0 %v823
    %1360 = vmatprep.subr.bf16.mxu0 %v820
    %1361 = vmatpush1.bf16.msra.mxu0 %v819
    %1362 = vmatprep.subr.bf16.mxu0 %v816
    %1363 = vmatpush1.bf16.msra.mxu0 %v815
    %1364 = vmatprep.subr.bf16.mxu0 %v812
    %1365 = vmatpush1.bf16.msra.mxu0 %v811
    %1366 = vmatprep.subr.bf16.mxu0 %v808
    %1367 = vmatpush1.bf16.msra.mxu0 %v807
    %1368 = vmatprep.subr.bf16.mxu0 %v804
    %1369 = vmatpush1.bf16.msra.mxu0 %v803
    %1370 = vmatprep.subr.bf16.mxu0 0
    %1371 = vmatpush2.bf16.msra.mxu0 0
    %1372 = vmatprep.subr.bf16.mxu0 0
    %1373 = vmatpush2.bf16.msra.mxu0 0
    %1374 = vmatprep.subr.bf16.mxu0 0
    %1375 = vmatpush2.bf16.msra.mxu0 0
    %1376 = vmatprep.subr.bf16.mxu0 0
    %1377 = vmatpush2.bf16.msra.mxu0 0
    %1378 = vmatprep.subr.bf16.mxu0 0
    %1379 = vmatpush2.bf16.msra.mxu0 0
    %1380 = vmatprep.subr.bf16.mxu0 0
    %1381 = vmatpush2.bf16.msra.mxu0 0
    %1382 = vmatprep.subr.bf16.mxu0 0
    %1383 = vmatpush2.bf16.msra.mxu0 0
    %1384 = vmatprep.subr.bf16.mxu0 0
    %1385 = vmatpush2.bf16.msra.mxu0 0
    %1386 = vmatprep.mubr.bf16.mxu0 0
    %1387 = vmatmul.mubr.bf16.gmra.mxu0 %v1312
    %v1388 = vpop.f32.mrf.mxu0
    %v1389 = vadd.f32 0.0, %v1388
    %v1390 = vpop.f32.mrf.mxu0
    %v1391 = vadd.f32 0.0, %v1390
    %v1392 = vpop.f32.mrf.mxu0
    %v1393 = vpop.f32.mrf.mxu0
    %1394 = vdwg.mxu0
    %v1395 = vadd.f32 %v1308, %v1348
    %v1396 = vadd.f32 %v1309, %v1350
    %v1397 = vadd.f32 %v1310, %v1389
    %v1398 = vadd.f32 %v1311, %v1391
    %v1399 = vsub.f32 0.0, %v1395
    %v1400 = vmul.f32 %v1399, 1.442695
    %v1401 = vpow.pop %v1400
    %v1402 = vadd.f32 %v1401, 1.0
    %v1403 = vrcp.pop %v1402
    %v1404 = vsub.f32 0.0, %v1396
    %v1405 = vmul.f32 %v1404, 1.442695
    %v1406 = vpow.pop %v1405
    %v1407 = vadd.f32 %v1406, 1.0
    %v1408 = vrcp.pop %v1407
    %v1409 = vtanh.pop %v1397
    %v1410 = vsub.f32 0.0, %v1398
    %v1411 = vmul.f32 %v1410, 1.442695
    %v1412 = vpow.pop %v1411
    %v1413 = vadd.f32 %v1412, 1.0
    %v1414 = vrcp.pop %v1413
    %v1415 = vmul.f32 %v1408, %v1305
    %v1416 = vmul.f32 %v1403, %v1409
    %v1417 = vadd.f32 %v1415, %v1416
    %v1418 = vtanh.pop %v1417
    %v1419 = vmul.f32 %v1414, %v1418
    %v1420 = vld [vmem:[#allocation2 + $0x140] sm:$0xff]
    %v1421 = vld [vmem:[#allocation2 + $0x148] sm:$0xff]
    %v1422 = vld [vmem:[#allocation2 + $0x150] sm:$0xff]
    %v1423 = vld [vmem:[#allocation2 + $0x158] sm:$0xff]
    %v1424 = vpack.c.bf16 %v1419, %v1419
    %1425 = vmatprep.subr.bf16.mxu0 %v830
    %1426 = vmatpush1.bf16.msra.mxu0 %v829
    %1427 = vmatprep.subr.bf16.mxu0 %v826
    %1428 = vmatpush1.bf16.msra.mxu0 %v825
    %1429 = vmatprep.subr.bf16.mxu0 %v822
    %1430 = vmatpush1.bf16.msra.mxu0 %v821
    %1431 = vmatprep.subr.bf16.mxu0 %v818
    %1432 = vmatpush1.bf16.msra.mxu0 %v817
    %1433 = vmatprep.subr.bf16.mxu0 %v814
    %1434 = vmatpush1.bf16.msra.mxu0 %v813
    %1435 = vmatprep.subr.bf16.mxu0 %v810
    %1436 = vmatpush1.bf16.msra.mxu0 %v809
    %1437 = vmatprep.subr.bf16.mxu0 %v806
    %1438 = vmatpush1.bf16.msra.mxu0 %v805
    %1439 = vmatprep.subr.bf16.mxu0 %v802
    %1440 = vmatpush1.bf16.msra.mxu0 %v801
    %1441 = vmatprep.subr.bf16.mxu0 0
    %1442 = vmatpush2.bf16.msra.mxu0 0
    %1443 = vmatprep.subr.bf16.mxu0 0
    %1444 = vmatpush2.bf16.msra.mxu0 0
    %1445 = vmatprep.subr.bf16.mxu0 0
    %1446 = vmatpush2.bf16.msra.mxu0 0
    %1447 = vmatprep.subr.bf16.mxu0 0
    %1448 = vmatpush2.bf16.msra.mxu0 0
    %1449 = vmatprep.subr.bf16.mxu0 0
    %1450 = vmatpush2.bf16.msra.mxu0 0
    %1451 = vmatprep.subr.bf16.mxu0 0
    %1452 = vmatpush2.bf16.msra.mxu0 0
    %1453 = vmatprep.subr.bf16.mxu0 0
    %1454 = vmatpush2.bf16.msra.mxu0 0
    %1455 = vmatprep.subr.bf16.mxu0 0
    %1456 = vmatpush2.bf16.msra.mxu0 0
    %1457 = vmatprep.mubr.bf16.mxu0 0
    %1458 = vmatmul.mubr.bf16.gmra.mxu0 %v1424
    %v1459 = vpop.f32.mrf.mxu0
    %v1460 = vadd.f32 0.0, %v1459
    %v1461 = vpop.f32.mrf.mxu0
    %v1462 = vadd.f32 0.0, %v1461
    %v1463 = vpop.f32.mrf.mxu0
    %v1464 = vpop.f32.mrf.mxu0
    %1465 = vdwg.mxu0
    %1466 = vmatprep.subr.bf16.mxu0 %v832
    %1467 = vmatpush1.bf16.msra.mxu0 %v831
    %1468 = vmatprep.subr.bf16.mxu0 %v828
    %1469 = vmatpush1.bf16.msra.mxu0 %v827
    %1470 = vmatprep.subr.bf16.mxu0 %v824
    %1471 = vmatpush1.bf16.msra.mxu0 %v823
    %1472 = vmatprep.subr.bf16.mxu0 %v820
    %1473 = vmatpush1.bf16.msra.mxu0 %v819
    %1474 = vmatprep.subr.bf16.mxu0 %v816
    %1475 = vmatpush1.bf16.msra.mxu0 %v815
    %1476 = vmatprep.subr.bf16.mxu0 %v812
    %1477 = vmatpush1.bf16.msra.mxu0 %v811
    %1478 = vmatprep.subr.bf16.mxu0 %v808
    %1479 = vmatpush1.bf16.msra.mxu0 %v807
    %1480 = vmatprep.subr.bf16.mxu0 %v804
    %1481 = vmatpush1.bf16.msra.mxu0 %v803
    %1482 = vmatprep.subr.bf16.mxu0 0
    %1483 = vmatpush2.bf16.msra.mxu0 0
    %1484 = vmatprep.subr.bf16.mxu0 0
    %1485 = vmatpush2.bf16.msra.mxu0 0
    %1486 = vmatprep.subr.bf16.mxu0 0
    %1487 = vmatpush2.bf16.msra.mxu0 0
    %1488 = vmatprep.subr.bf16.mxu0 0
    %1489 = vmatpush2.bf16.msra.mxu0 0
    %1490 = vmatprep.subr.bf16.mxu0 0
    %1491 = vmatpush2.bf16.msra.mxu0 0
    %1492 = vmatprep.subr.bf16.mxu0 0
    %1493 = vmatpush2.bf16.msra.mxu0 0
    %1494 = vmatprep.subr.bf16.mxu0 0
    %1495 = vmatpush2.bf16.msra.mxu0 0
    %1496 = vmatprep.subr.bf16.mxu0 0
    %1497 = vmatpush2.bf16.msra.mxu0 0
    %1498 = vmatprep.mubr.bf16.mxu0 0
    %1499 = vmatmul.mubr.bf16.gmra.mxu0 %v1424
    %v1500 = vpop.f32.mrf.mxu0
    %v1501 = vadd.f32 0.0, %v1500
    %v1502 = vpop.f32.mrf.mxu0
    %v1503 = vadd.f32 0.0, %v1502
    %v1504 = vpop.f32.mrf.mxu0
    %v1505 = vpop.f32.mrf.mxu0
    %1506 = vdwg.mxu0
    %v1507 = vadd.f32 %v1420, %v1460
    %v1508 = vadd.f32 %v1421, %v1462
    %v1509 = vadd.f32 %v1422, %v1501
    %v1510 = vadd.f32 %v1423, %v1503
    %v1511 = vsub.f32 0.0, %v1507
    %v1512 = vmul.f32 %v1511, 1.442695
    %v1513 = vpow.pop %v1512
    %v1514 = vadd.f32 %v1513, 1.0
    %v1515 = vrcp.pop %v1514
    %v1516 = vsub.f32 0.0, %v1508
    %v1517 = vmul.f32 %v1516, 1.442695
    %v1518 = vpow.pop %v1517
    %v1519 = vadd.f32 %v1518, 1.0
    %v1520 = vrcp.pop %v1519
    %v1521 = vtanh.pop %v1509
    %v1522 = vsub.f32 0.0, %v1510
    %v1523 = vmul.f32 %v1522, 1.442695
    %v1524 = vpow.pop %v1523
    %v1525 = vadd.f32 %v1524, 1.0
    %v1526 = vrcp.pop %v1525
    %v1527 = vmul.f32 %v1520, %v1417
    %v1528 = vmul.f32 %v1515, %v1521
    %v1529 = vadd.f32 %v1527, %v1528
    %v1530 = vtanh.pop %v1529
    %v1531 = vmul.f32 %v1526, %v1530
    %v1532 = vld [vmem:[#allocation2 + $0x180] sm:$0xff]
    %v1533 = vld [vmem:[#allocation2 + $0x188] sm:$0xff]
    %v1534 = vld [vmem:[#allocation2 + $0x190] sm:$0xff]
    %v1535 = vld [vmem:[#allocation2 + $0x198] sm:$0xff]
    %v1536 = vpack.c.bf16 %v1531, %v1531
    %1537 = vmatprep.subr.bf16.mxu0 %v830
    %1538 = vmatpush1.bf16.msra.mxu0 %v829
    %1539 = vmatprep.subr.bf16.mxu0 %v826
    %1540 = vmatpush1.bf16.msra.mxu0 %v825
    %1541 = vmatprep.subr.bf16.mxu0 %v822
    %1542 = vmatpush1.bf16.msra.mxu0 %v821
    %1543 = vmatprep.subr.bf16.mxu0 %v818
    %1544 = vmatpush1.bf16.msra.mxu0 %v817
    %1545 = vmatprep.subr.bf16.mxu0 %v814
    %1546 = vmatpush1.bf16.msra.mxu0 %v813
    %1547 = vmatprep.subr.bf16.mxu0 %v810
    %1548 = vmatpush1.bf16.msra.mxu0 %v809
    %1549 = vmatprep.subr.bf16.mxu0 %v806
    %1550 = vmatpush1.bf16.msra.mxu0 %v805
    %1551 = vmatprep.subr.bf16.mxu0 %v802
    %1552 = vmatpush1.bf16.msra.mxu0 %v801
    %1553 = vmatprep.subr.bf16.mxu0 0
    %1554 = vmatpush2.bf16.msra.mxu0 0
    %1555 = vmatprep.subr.bf16.mxu0 0
    %1556 = vmatpush2.bf16.msra.mxu0 0
    %1557 = vmatprep.subr.bf16.mxu0 0
    %1558 = vmatpush2.bf16.msra.mxu0 0
    %1559 = vmatprep.subr.bf16.mxu0 0
    %1560 = vmatpush2.bf16.msra.mxu0 0
    %1561 = vmatprep.subr.bf16.mxu0 0
    %1562 = vmatpush2.bf16.msra.mxu0 0
    %1563 = vmatprep.subr.bf16.mxu0 0
    %1564 = vmatpush2.bf16.msra.mxu0 0
    %1565 = vmatprep.subr.bf16.mxu0 0
    %1566 = vmatpush2.bf16.msra.mxu0 0
    %1567 = vmatprep.subr.bf16.mxu0 0
    %1568 = vmatpush2.bf16.msra.mxu0 0
    %1569 = vmatprep.mubr.bf16.mxu0 0
    %1570 = vmatmul.mubr.bf16.gmra.mxu0 %v1536
    %v1571 = vpop.f32.mrf.mxu0
    %v1572 = vadd.f32 0.0, %v1571
    %v1573 = vpop.f32.mrf.mxu0
    %v1574 = vadd.f32 0.0, %v1573
    %v1575 = vpop.f32.mrf.mxu0
    %v1576 = vpop.f32.mrf.mxu0
    %1577 = vdwg.mxu0
    %1578 = vmatprep.subr.bf16.mxu0 %v832
    %1579 = vmatpush1.bf16.msra.mxu0 %v831
    %1580 = vmatprep.subr.bf16.mxu0 %v828
    %1581 = vmatpush1.bf16.msra.mxu0 %v827
    %1582 = vmatprep.subr.bf16.mxu0 %v824
    %1583 = vmatpush1.bf16.msra.mxu0 %v823
    %1584 = vmatprep.subr.bf16.mxu0 %v820
    %1585 = vmatpush1.bf16.msra.mxu0 %v819
    %1586 = vmatprep.subr.bf16.mxu0 %v816
    %1587 = vmatpush1.bf16.msra.mxu0 %v815
    %1588 = vmatprep.subr.bf16.mxu0 %v812
    %1589 = vmatpush1.bf16.msra.mxu0 %v811
    %1590 = vmatprep.subr.bf16.mxu0 %v808
    %1591 = vmatpush1.bf16.msra.mxu0 %v807
    %1592 = vmatprep.subr.bf16.mxu0 %v804
    %1593 = vmatpush1.bf16.msra.mxu0 %v803
    %1594 = vmatprep.subr.bf16.mxu0 0
    %1595 = vmatpush2.bf16.msra.mxu0 0
    %1596 = vmatprep.subr.bf16.mxu0 0
    %1597 = vmatpush2.bf16.msra.mxu0 0
    %1598 = vmatprep.subr.bf16.mxu0 0
    %1599 = vmatpush2.bf16.msra.mxu0 0
    %1600 = vmatprep.subr.bf16.mxu0 0
    %1601 = vmatpush2.bf16.msra.mxu0 0
    %1602 = vmatprep.subr.bf16.mxu0 0
    %1603 = vmatpush2.bf16.msra.mxu0 0
    %1604 = vmatprep.subr.bf16.mxu0 0
    %1605 = vmatpush2.bf16.msra.mxu0 0
    %1606 = vmatprep.subr.bf16.mxu0 0
    %1607 = vmatpush2.bf16.msra.mxu0 0
    %1608 = vmatprep.subr.bf16.mxu0 0
    %1609 = vmatpush2.bf16.msra.mxu0 0
    %1610 = vmatprep.mubr.bf16.mxu0 0
    %1611 = vmatmul.mubr.bf16.gmra.mxu0 %v1536
    %v1612 = vpop.f32.mrf.mxu0
    %v1613 = vadd.f32 0.0, %v1612
    %v1614 = vpop.f32.mrf.mxu0
    %v1615 = vadd.f32 0.0, %v1614
    %v1616 = vpop.f32.mrf.mxu0
    %v1617 = vpop.f32.mrf.mxu0
    %1618 = vdwg.mxu0
    %v1619 = vadd.f32 %v1532, %v1572
    %v1620 = vadd.f32 %v1533, %v1574
    %v1621 = vadd.f32 %v1534, %v1613
    %v1622 = vadd.f32 %v1535, %v1615
    %v1623 = vsub.f32 0.0, %v1619
    %v1624 = vmul.f32 %v1623, 1.442695
    %v1625 = vpow.pop %v1624
    %v1626 = vadd.f32 %v1625, 1.0
    %v1627 = vrcp.pop %v1626
    %v1628 = vsub.f32 0.0, %v1620
    %v1629 = vmul.f32 %v1628, 1.442695
    %v1630 = vpow.pop %v1629
    %v1631 = vadd.f32 %v1630, 1.0
    %v1632 = vrcp.pop %v1631
    %v1633 = vtanh.pop %v1621
    %v1634 = vsub.f32 0.0, %v1622
    %v1635 = vmul.f32 %v1634, 1.442695
    %v1636 = vpow.pop %v1635
    %v1637 = vadd.f32 %v1636, 1.0
    %v1638 = vrcp.pop %v1637
    %v1639 = vmul.f32 %v1632, %v1529
    %v1640 = vmul.f32 %v1627, %v1633
    %v1641 = vadd.f32 %v1639, %v1640
    %v1642 = vtanh.pop %v1641
    %v1643 = vmul.f32 %v1638, %v1642
    %v1644 = vld [vmem:[#allocation2 + $0x1c0] sm:$0xff]
    %v1645 = vld [vmem:[#allocation2 + $0x1c8] sm:$0xff]
    %v1646 = vld [vmem:[#allocation2 + $0x1d0] sm:$0xff]
    %v1647 = vld [vmem:[#allocation2 + $0x1d8] sm:$0xff]
    %v1648 = vpack.c.bf16 %v1643, %v1643
    %1649 = vmatprep.subr.bf16.mxu0 %v830
    %1650 = vmatpush1.bf16.msra.mxu0 %v829
    %1651 = vmatprep.subr.bf16.mxu0 %v826
    %1652 = vmatpush1.bf16.msra.mxu0 %v825
    %1653 = vmatprep.subr.bf16.mxu0 %v822
    %1654 = vmatpush1.bf16.msra.mxu0 %v821
    %1655 = vmatprep.subr.bf16.mxu0 %v818
    %1656 = vmatpush1.bf16.msra.mxu0 %v817
    %1657 = vmatprep.subr.bf16.mxu0 %v814
    %1658 = vmatpush1.bf16.msra.mxu0 %v813
    %1659 = vmatprep.subr.bf16.mxu0 %v810
    %1660 = vmatpush1.bf16.msra.mxu0 %v809
    %1661 = vmatprep.subr.bf16.mxu0 %v806
    %1662 = vmatpush1.bf16.msra.mxu0 %v805
    %1663 = vmatprep.subr.bf16.mxu0 %v802
    %1664 = vmatpush1.bf16.msra.mxu0 %v801
    %1665 = vmatprep.subr.bf16.mxu0 0
    %1666 = vmatpush2.bf16.msra.mxu0 0
    %1667 = vmatprep.subr.bf16.mxu0 0
    %1668 = vmatpush2.bf16.msra.mxu0 0
    %1669 = vmatprep.subr.bf16.mxu0 0
    %1670 = vmatpush2.bf16.msra.mxu0 0
    %1671 = vmatprep.subr.bf16.mxu0 0
    %1672 = vmatpush2.bf16.msra.mxu0 0
    %1673 = vmatprep.subr.bf16.mxu0 0
    %1674 = vmatpush2.bf16.msra.mxu0 0
    %1675 = vmatprep.subr.bf16.mxu0 0
    %1676 = vmatpush2.bf16.msra.mxu0 0
    %1677 = vmatprep.subr.bf16.mxu0 0
    %1678 = vmatpush2.bf16.msra.mxu0 0
    %1679 = vmatprep.subr.bf16.mxu0 0
    %1680 = vmatpush2.bf16.msra.mxu0 0
    %1681 = vmatprep.mubr.bf16.mxu0 0
    %1682 = vmatmul.mubr.bf16.gmra.mxu0 %v1648
    %v1683 = vpop.f32.mrf.mxu0
    %v1684 = vadd.f32 0.0, %v1683
    %v1685 = vpop.f32.mrf.mxu0
    %v1686 = vadd.f32 0.0, %v1685
    %v1687 = vpop.f32.mrf.mxu0
    %v1688 = vpop.f32.mrf.mxu0
    %1689 = vdwg.mxu0
    %1690 = vmatprep.subr.bf16.mxu0 %v832
    %1691 = vmatpush1.bf16.msra.mxu0 %v831
    %1692 = vmatprep.subr.bf16.mxu0 %v828
    %1693 = vmatpush1.bf16.msra.mxu0 %v827
    %1694 = vmatprep.subr.bf16.mxu0 %v824
    %1695 = vmatpush1.bf16.msra.mxu0 %v823
    %1696 = vmatprep.subr.bf16.mxu0 %v820
    %1697 = vmatpush1.bf16.msra.mxu0 %v819
    %1698 = vmatprep.subr.bf16.mxu0 %v816
    %1699 = vmatpush1.bf16.msra.mxu0 %v815
    %1700 = vmatprep.subr.bf16.mxu0 %v812
    %1701 = vmatpush1.bf16.msra.mxu0 %v811
    %1702 = vmatprep.subr.bf16.mxu0 %v808
    %1703 = vmatpush1.bf16.msra.mxu0 %v807
    %1704 = vmatprep.subr.bf16.mxu0 %v804
    %1705 = vmatpush1.bf16.msra.mxu0 %v803
    %1706 = vmatprep.subr.bf16.mxu0 0
    %1707 = vmatpush2.bf16.msra.mxu0 0
    %1708 = vmatprep.subr.bf16.mxu0 0
    %1709 = vmatpush2.bf16.msra.mxu0 0
    %1710 = vmatprep.subr.bf16.mxu0 0
    %1711 = vmatpush2.bf16.msra.mxu0 0
    %1712 = vmatprep.subr.bf16.mxu0 0
    %1713 = vmatpush2.bf16.msra.mxu0 0
    %1714 = vmatprep.subr.bf16.mxu0 0
    %1715 = vmatpush2.bf16.msra.mxu0 0
    %1716 = vmatprep.subr.bf16.mxu0 0
    %1717 = vmatpush2.bf16.msra.mxu0 0
    %1718 = vmatprep.subr.bf16.mxu0 0
    %1719 = vmatpush2.bf16.msra.mxu0 0
    %1720 = vmatprep.subr.bf16.mxu0 0
    %1721 = vmatpush2.bf16.msra.mxu0 0
    %1722 = vmatprep.mubr.bf16.mxu0 0
    %1723 = vmatmul.mubr.bf16.gmra.mxu0 %v1648
    %v1724 = vpop.f32.mrf.mxu0
    %v1725 = vadd.f32 0.0, %v1724
    %v1726 = vpop.f32.mrf.mxu0
    %v1727 = vadd.f32 0.0, %v1726
    %v1728 = vpop.f32.mrf.mxu0
    %v1729 = vpop.f32.mrf.mxu0
    %1730 = vdwg.mxu0
    %v1731 = vadd.f32 %v1644, %v1684
    %v1732 = vadd.f32 %v1645, %v1686
    %v1733 = vadd.f32 %v1646, %v1725
    %v1734 = vadd.f32 %v1647, %v1727
    %v1735 = vsub.f32 0.0, %v1731
    %v1736 = vmul.f32 %v1735, 1.442695
    %v1737 = vpow.pop %v1736
    %v1738 = vadd.f32 %v1737, 1.0
    %v1739 = vrcp.pop %v1738
    %v1740 = vsub.f32 0.0, %v1732
    %v1741 = vmul.f32 %v1740, 1.442695
    %v1742 = vpow.pop %v1741
    %v1743 = vadd.f32 %v1742, 1.0
    %v1744 = vrcp.pop %v1743
    %v1745 = vtanh.pop %v1733
    %v1746 = vsub.f32 0.0, %v1734
    %v1747 = vmul.f32 %v1746, 1.442695
    %v1748 = vpow.pop %v1747
    %v1749 = vadd.f32 %v1748, 1.0
    %v1750 = vrcp.pop %v1749
    %v1751 = vmul.f32 %v1744, %v1641
    %v1752 = vmul.f32 %v1739, %v1745
    %v1753 = vadd.f32 %v1751, %v1752
    %v1754 = vtanh.pop %v1753
    %v1755 = vmul.f32 %v1750, %v1754
    %v1756 = vld [vmem:[#allocation2 + $0x20] sm:$0xff]
    %v1757 = vld [vmem:[#allocation2 + $0x28] sm:$0xff]
    %v1758 = vld [vmem:[#allocation2 + $0x30] sm:$0xff]
    %v1759 = vld [vmem:[#allocation2 + $0x38] sm:$0xff]
    %v1760 = vpack.c.bf16 %v1755, %v1755
    %v1793 = vunpack.c.l.b16 %v669
    %v1794 = vunpack.c.h.b16 %v669
    %v1795 = vunpack.c.l.b16 %v670
    %v1796 = vunpack.c.h.b16 %v670
    %v1797 = vunpack.c.l.b16 %v671
    %v1798 = vunpack.c.h.b16 %v671
    %v1799 = vunpack.c.l.b16 %v672
    %v1800 = vunpack.c.h.b16 %v672
    %v1801 = vunpack.c.l.b16 %v673
    %v1802 = vunpack.c.h.b16 %v673
    %v1803 = vunpack.c.l.b16 %v674
    %v1804 = vunpack.c.h.b16 %v674
    %v1805 = vunpack.c.l.b16 %v675
    %v1806 = vunpack.c.h.b16 %v675
    %v1807 = vunpack.c.l.b16 %v676
    %v1808 = vunpack.c.h.b16 %v676
    %v1809 = vunpack.c.l.b16 %v677
    %v1810 = vunpack.c.h.b16 %v677
    %v1811 = vunpack.c.l.b16 %v678
    %v1812 = vunpack.c.h.b16 %v678
    %v1813 = vunpack.c.l.b16 %v679
    %v1814 = vunpack.c.h.b16 %v679
    %v1815 = vunpack.c.l.b16 %v680
    %v1816 = vunpack.c.h.b16 %v680
    %v1817 = vunpack.c.l.b16 %v681
    %v1818 = vunpack.c.h.b16 %v681
    %v1819 = vunpack.c.l.b16 %v682
    %v1820 = vunpack.c.h.b16 %v682
    %v1821 = vunpack.c.l.b16 %v683
    %v1822 = vunpack.c.h.b16 %v683
    %v1823 = vunpack.c.l.b16 %v684
    %v1824 = vunpack.c.h.b16 %v684
    %v1825 = vunpack.c.l.b16 %v685
    %v1826 = vunpack.c.h.b16 %v685
    %v1827 = vunpack.c.l.b16 %v686
    %v1828 = vunpack.c.h.b16 %v686
    %v1829 = vunpack.c.l.b16 %v687
    %v1830 = vunpack.c.h.b16 %v687
    %v1831 = vunpack.c.l.b16 %v688
    %v1832 = vunpack.c.h.b16 %v688
    %v1833 = vunpack.c.l.b16 %v689
    %v1834 = vunpack.c.h.b16 %v689
    %v1835 = vunpack.c.l.b16 %v690
    %v1836 = vunpack.c.h.b16 %v690
    %v1837 = vunpack.c.l.b16 %v691
    %v1838 = vunpack.c.h.b16 %v691
    %v1839 = vunpack.c.l.b16 %v692
    %v1840 = vunpack.c.h.b16 %v692
    %v1841 = vunpack.c.l.b16 %v693
    %v1842 = vunpack.c.h.b16 %v693
    %v1843 = vunpack.c.l.b16 %v694
    %v1844 = vunpack.c.h.b16 %v694
    %v1845 = vunpack.c.l.b16 %v695
    %v1846 = vunpack.c.h.b16 %v695
    %v1847 = vunpack.c.l.b16 %v696
    %v1848 = vunpack.c.h.b16 %v696
    %v1849 = vunpack.c.l.b16 %v697
    %v1850 = vunpack.c.h.b16 %v697
    %v1851 = vunpack.c.l.b16 %v698
    %v1852 = vunpack.c.h.b16 %v698
    %v1853 = vunpack.c.l.b16 %v699
    %v1854 = vunpack.c.h.b16 %v699
    %v1855 = vunpack.c.l.b16 %v700
    %v1856 = vunpack.c.h.b16 %v700
    %v1857 = vpack.c.b16 %v1797, %v1793
    %v1858 = vpack.c.b16 %v1798, %v1794
    %v1859 = vpack.c.b16 %v1799, %v1795
    %v1860 = vpack.c.b16 %v1800, %v1796
    %v1861 = vpack.c.b16 %v1805, %v1801
    %v1862 = vpack.c.b16 %v1806, %v1802
    %v1863 = vpack.c.b16 %v1807, %v1803
    %v1864 = vpack.c.b16 %v1808, %v1804
    %v1865 = vpack.c.b16 %v1813, %v1809
    %v1866 = vpack.c.b16 %v1814, %v1810
    %v1867 = vpack.c.b16 %v1815, %v1811
    %v1868 = vpack.c.b16 %v1816, %v1812
    %v1869 = vpack.c.b16 %v1821, %v1817
    %v1870 = vpack.c.b16 %v1822, %v1818
    %v1871 = vpack.c.b16 %v1823, %v1819
    %v1872 = vpack.c.b16 %v1824, %v1820
    %v1873 = vpack.c.b16 %v1829, %v1825
    %v1874 = vpack.c.b16 %v1830, %v1826
    %v1875 = vpack.c.b16 %v1831, %v1827
    %v1876 = vpack.c.b16 %v1832, %v1828
    %v1877 = vpack.c.b16 %v1837, %v1833
    %v1878 = vpack.c.b16 %v1838, %v1834
    %v1879 = vpack.c.b16 %v1839, %v1835
    %v1880 = vpack.c.b16 %v1840, %v1836
    %v1881 = vpack.c.b16 %v1845, %v1841
    %v1882 = vpack.c.b16 %v1846, %v1842
    %v1883 = vpack.c.b16 %v1847, %v1843
    %v1884 = vpack.c.b16 %v1848, %v1844
    %v1885 = vpack.c.b16 %v1853, %v1849
    %v1886 = vpack.c.b16 %v1854, %v1850
    %v1887 = vpack.c.b16 %v1855, %v1851
    %v1888 = vpack.c.b16 %v1856, %v1852
    %1921 = vmatprep.subr.bf16.mxu0 %v1886
    %1922 = vmatpush1.bf16.msra.mxu0 %v1885
    %1923 = vmatprep.subr.bf16.mxu0 %v1882
    %1924 = vmatpush1.bf16.msra.mxu0 %v1881
    %1925 = vmatprep.subr.bf16.mxu0 %v1878
    %1926 = vmatpush1.bf16.msra.mxu0 %v1877
    %1927 = vmatprep.subr.bf16.mxu0 %v1874
    %1928 = vmatpush1.bf16.msra.mxu0 %v1873
    %1929 = vmatprep.subr.bf16.mxu0 %v1870
    %1930 = vmatpush1.bf16.msra.mxu0 %v1869
    %1931 = vmatprep.subr.bf16.mxu0 %v1866
    %1932 = vmatpush1.bf16.msra.mxu0 %v1865
    %1933 = vmatprep.subr.bf16.mxu0 %v1862
    %1934 = vmatpush1.bf16.msra.mxu0 %v1861
    %1935 = vmatprep.subr.bf16.mxu0 %v1858
    %1936 = vmatpush1.bf16.msra.mxu0 %v1857
    %1937 = vmatprep.subr.bf16.mxu0 0
    %1938 = vmatpush2.bf16.msra.mxu0 0
    %1939 = vmatprep.subr.bf16.mxu0 0
    %1940 = vmatpush2.bf16.msra.mxu0 0
    %1941 = vmatprep.subr.bf16.mxu0 0
    %1942 = vmatpush2.bf16.msra.mxu0 0
    %1943 = vmatprep.subr.bf16.mxu0 0
    %1944 = vmatpush2.bf16.msra.mxu0 0
    %1945 = vmatprep.subr.bf16.mxu0 0
    %1946 = vmatpush2.bf16.msra.mxu0 0
    %1947 = vmatprep.subr.bf16.mxu0 0
    %1948 = vmatpush2.bf16.msra.mxu0 0
    %1949 = vmatprep.subr.bf16.mxu0 0
    %1950 = vmatpush2.bf16.msra.mxu0 0
    %1951 = vmatprep.subr.bf16.mxu0 0
    %1952 = vmatpush2.bf16.msra.mxu0 0
    %1953 = vmatprep.mubr.bf16.mxu0 0
    %1954 = vmatmul.mubr.bf16.gmra.mxu0 %v1760
    %v1955 = vpop.f32.mrf.mxu0
    %v1956 = vadd.f32 0.0, %v1955
    %v1957 = vpop.f32.mrf.mxu0
    %v1958 = vadd.f32 0.0, %v1957
    %v1959 = vpop.f32.mrf.mxu0
    %v1960 = vpop.f32.mrf.mxu0
    %1961 = vdwg.mxu0
    %1962 = vmatprep.subr.bf16.mxu0 %v1888
    %1963 = vmatpush1.bf16.msra.mxu0 %v1887
    %1964 = vmatprep.subr.bf16.mxu0 %v1884
    %1965 = vmatpush1.bf16.msra.mxu0 %v1883
    %1966 = vmatprep.subr.bf16.mxu0 %v1880
    %1967 = vmatpush1.bf16.msra.mxu0 %v1879
    %1968 = vmatprep.subr.bf16.mxu0 %v1876
    %1969 = vmatpush1.bf16.msra.mxu0 %v1875
    %1970 = vmatprep.subr.bf16.mxu0 %v1872
    %1971 = vmatpush1.bf16.msra.mxu0 %v1871
    %1972 = vmatprep.subr.bf16.mxu0 %v1868
    %1973 = vmatpush1.bf16.msra.mxu0 %v1867
    %1974 = vmatprep.subr.bf16.mxu0 %v1864
    %1975 = vmatpush1.bf16.msra.mxu0 %v1863
    %1976 = vmatprep.subr.bf16.mxu0 %v1860
    %1977 = vmatpush1.bf16.msra.mxu0 %v1859
    %1978 = vmatprep.subr.bf16.mxu0 0
    %1979 = vmatpush2.bf16.msra.mxu0 0
    %1980 = vmatprep.subr.bf16.mxu0 0
    %1981 = vmatpush2.bf16.msra.mxu0 0
    %1982 = vmatprep.subr.bf16.mxu0 0
    %1983 = vmatpush2.bf16.msra.mxu0 0
    %1984 = vmatprep.subr.bf16.mxu0 0
    %1985 = vmatpush2.bf16.msra.mxu0 0
    %1986 = vmatprep.subr.bf16.mxu0 0
    %1987 = vmatpush2.bf16.msra.mxu0 0
    %1988 = vmatprep.subr.bf16.mxu0 0
    %1989 = vmatpush2.bf16.msra.mxu0 0
    %1990 = vmatprep.subr.bf16.mxu0 0
    %1991 = vmatpush2.bf16.msra.mxu0 0
    %1992 = vmatprep.subr.bf16.mxu0 0
    %1993 = vmatpush2.bf16.msra.mxu0 0
    %1994 = vmatprep.mubr.bf16.mxu0 0
    %1995 = vmatmul.mubr.bf16.gmra.mxu0 %v1760
    %v1996 = vpop.f32.mrf.mxu0
    %v1997 = vadd.f32 0.0, %v1996
    %v1998 = vpop.f32.mrf.mxu0
    %v1999 = vadd.f32 0.0, %v1998
    %v2000 = vpop.f32.mrf.mxu0
    %v2001 = vpop.f32.mrf.mxu0
    %2002 = vdwg.mxu0
    %v2003 = vadd.f32 %v1756, %v1956
    %v2004 = vadd.f32 %v1757, %v1958
    %v2005 = vadd.f32 %v1758, %v1997
    %v2006 = vadd.f32 %v1759, %v1999
    %v2007 = vsub.f32 0.0, %v2003
    %v2008 = vmul.f32 %v2007, 1.442695
    %v2009 = vpow.pop %v2008
    %v2010 = vadd.f32 %v2009, 1.0
    %v2011 = vrcp.pop %v2010
    %v2012 = vsub.f32 0.0, %v2004
    %v2013 = vmul.f32 %v2012, 1.442695
    %v2014 = vpow.pop %v2013
    %v2015 = vadd.f32 %v2014, 1.0
    %v2016 = vrcp.pop %v2015
    %v2017 = vtanh.pop %v2005
    %v2018 = vsub.f32 0.0, %v2006
    %v2019 = vmul.f32 %v2018, 1.442695
    %v2020 = vpow.pop %v2019
    %v2021 = vadd.f32 %v2020, 1.0
    %v2022 = vrcp.pop %v2021
    %v2023 = vmul.f32 %v2016, %v1753
    %v2024 = vmul.f32 %v2011, %v2017
    %v2025 = vadd.f32 %v2023, %v2024
    %v2026 = vtanh.pop %v2025
    %v2027 = vmul.f32 %v2022, %v2026
    %v2028 = vld [vmem:[#allocation2 + $0x60] sm:$0xff]
    %v2029 = vld [vmem:[#allocation2 + $0x68] sm:$0xff]
    %v2030 = vld [vmem:[#allocation2 + $0x70] sm:$0xff]
    %v2031 = vld [vmem:[#allocation2 + $0x78] sm:$0xff]
    %v2032 = vpack.c.bf16 %v2027, %v2027
    %2033 = vmatprep.subr.bf16.mxu0 %v1886
    %2034 = vmatpush1.bf16.msra.mxu0 %v1885
    %2035 = vmatprep.subr.bf16.mxu0 %v1882
    %2036 = vmatpush1.bf16.msra.mxu0 %v1881
    %2037 = vmatprep.subr.bf16.mxu0 %v1878
    %2038 = vmatpush1.bf16.msra.mxu0 %v1877
    %2039 = vmatprep.subr.bf16.mxu0 %v1874
    %2040 = vmatpush1.bf16.msra.mxu0 %v1873
    %2041 = vmatprep.subr.bf16.mxu0 %v1870
    %2042 = vmatpush1.bf16.msra.mxu0 %v1869
    %2043 = vmatprep.subr.bf16.mxu0 %v1866
    %2044 = vmatpush1.bf16.msra.mxu0 %v1865
    %2045 = vmatprep.subr.bf16.mxu0 %v1862
    %2046 = vmatpush1.bf16.msra.mxu0 %v1861
    %2047 = vmatprep.subr.bf16.mxu0 %v1858
    %2048 = vmatpush1.bf16.msra.mxu0 %v1857
    %2049 = vmatprep.subr.bf16.mxu0 0
    %2050 = vmatpush2.bf16.msra.mxu0 0
    %2051 = vmatprep.subr.bf16.mxu0 0
    %2052 = vmatpush2.bf16.msra.mxu0 0
    %2053 = vmatprep.subr.bf16.mxu0 0
    %2054 = vmatpush2.bf16.msra.mxu0 0
    %2055 = vmatprep.subr.bf16.mxu0 0
    %2056 = vmatpush2.bf16.msra.mxu0 0
    %2057 = vmatprep.subr.bf16.mxu0 0
    %2058 = vmatpush2.bf16.msra.mxu0 0
    %2059 = vmatprep.subr.bf16.mxu0 0
    %2060 = vmatpush2.bf16.msra.mxu0 0
    %2061 = vmatprep.subr.bf16.mxu0 0
    %2062 = vmatpush2.bf16.msra.mxu0 0
    %2063 = vmatprep.subr.bf16.mxu0 0
    %2064 = vmatpush2.bf16.msra.mxu0 0
    %2065 = vmatprep.mubr.bf16.mxu0 0
    %2066 = vmatmul.mubr.bf16.gmra.mxu0 %v2032
    %v2067 = vpop.f32.mrf.mxu0
    %v2068 = vadd.f32 0.0, %v2067
    %v2069 = vpop.f32.mrf.mxu0
    %v2070 = vadd.f32 0.0, %v2069
    %v2071 = vpop.f32.mrf.mxu0
    %v2072 = vpop.f32.mrf.mxu0
    %2073 = vdwg.mxu0
    %2074 = vmatprep.subr.bf16.mxu0 %v1888
    %2075 = vmatpush1.bf16.msra.mxu0 %v1887
    %2076 = vmatprep.subr.bf16.mxu0 %v1884
    %2077 = vmatpush1.bf16.msra.mxu0 %v1883
    %2078 = vmatprep.subr.bf16.mxu0 %v1880
    %2079 = vmatpush1.bf16.msra.mxu0 %v1879
    %2080 = vmatprep.subr.bf16.mxu0 %v1876
    %2081 = vmatpush1.bf16.msra.mxu0 %v1875
    %2082 = vmatprep.subr.bf16.mxu0 %v1872
    %2083 = vmatpush1.bf16.msra.mxu0 %v1871
    %2084 = vmatprep.subr.bf16.mxu0 %v1868
    %2085 = vmatpush1.bf16.msra.mxu0 %v1867
    %2086 = vmatprep.subr.bf16.mxu0 %v1864
    %2087 = vmatpush1.bf16.msra.mxu0 %v1863
    %2088 = vmatprep.subr.bf16.mxu0 %v1860
    %2089 = vmatpush1.bf16.msra.mxu0 %v1859
    %2090 = vmatprep.subr.bf16.mxu0 0
    %2091 = vmatpush2.bf16.msra.mxu0 0
    %2092 = vmatprep.subr.bf16.mxu0 0
    %2093 = vmatpush2.bf16.msra.mxu0 0
    %2094 = vmatprep.subr.bf16.mxu0 0
    %2095 = vmatpush2.bf16.msra.mxu0 0
    %2096 = vmatprep.subr.bf16.mxu0 0
    %2097 = vmatpush2.bf16.msra.mxu0 0
    %2098 = vmatprep.subr.bf16.mxu0 0
    %2099 = vmatpush2.bf16.msra.mxu0 0
    %2100 = vmatprep.subr.bf16.mxu0 0
    %2101 = vmatpush2.bf16.msra.mxu0 0
    %2102 = vmatprep.subr.bf16.mxu0 0
    %2103 = vmatpush2.bf16.msra.mxu0 0
    %2104 = vmatprep.subr.bf16.mxu0 0
    %2105 = vmatpush2.bf16.msra.mxu0 0
    %2106 = vmatprep.mubr.bf16.mxu0 0
    %2107 = vmatmul.mubr.bf16.gmra.mxu0 %v2032
    %v2108 = vpop.f32.mrf.mxu0
    %v2109 = vadd.f32 0.0, %v2108
    %v2110 = vpop.f32.mrf.mxu0
    %v2111 = vadd.f32 0.0, %v2110
    %v2112 = vpop.f32.mrf.mxu0
    %v2113 = vpop.f32.mrf.mxu0
    %2114 = vdwg.mxu0
    %v2115 = vadd.f32 %v2028, %v2068
    %v2116 = vadd.f32 %v2029, %v2070
    %v2117 = vadd.f32 %v2030, %v2109
    %v2118 = vadd.f32 %v2031, %v2111
    %v2119 = vsub.f32 0.0, %v2115
    %v2120 = vmul.f32 %v2119, 1.442695
    %v2121 = vpow.pop %v2120
    %v2122 = vadd.f32 %v2121, 1.0
    %v2123 = vrcp.pop %v2122
    %v2124 = vsub.f32 0.0, %v2116
    %v2125 = vmul.f32 %v2124, 1.442695
    %v2126 = vpow.pop %v2125
    %v2127 = vadd.f32 %v2126, 1.0
    %v2128 = vrcp.pop %v2127
    %v2129 = vtanh.pop %v2117
    %v2130 = vsub.f32 0.0, %v2118
    %v2131 = vmul.f32 %v2130, 1.442695
    %v2132 = vpow.pop %v2131
    %v2133 = vadd.f32 %v2132, 1.0
    %v2134 = vrcp.pop %v2133
    %v2135 = vmul.f32 %v2128, %v2025
    %v2136 = vmul.f32 %v2123, %v2129
    %v2137 = vadd.f32 %v2135, %v2136
    %v2138 = vtanh.pop %v2137
    %v2139 = vmul.f32 %v2134, %v2138
    %v2140 = vld [vmem:[#allocation2 + $0xa0] sm:$0xff]
    %v2141 = vld [vmem:[#allocation2 + $0xa8] sm:$0xff]
    %v2142 = vld [vmem:[#allocation2 + $0xb0] sm:$0xff]
    %v2143 = vld [vmem:[#allocation2 + $0xb8] sm:$0xff]
    %v2144 = vpack.c.bf16 %v2139, %v2139
    %2145 = vmatprep.subr.bf16.mxu0 %v1886
    %2146 = vmatpush1.bf16.msra.mxu0 %v1885
    %2147 = vmatprep.subr.bf16.mxu0 %v1882
    %2148 = vmatpush1.bf16.msra.mxu0 %v1881
    %2149 = vmatprep.subr.bf16.mxu0 %v1878
    %2150 = vmatpush1.bf16.msra.mxu0 %v1877
    %2151 = vmatprep.subr.bf16.mxu0 %v1874
    %2152 = vmatpush1.bf16.msra.mxu0 %v1873
    %2153 = vmatprep.subr.bf16.mxu0 %v1870
    %2154 = vmatpush1.bf16.msra.mxu0 %v1869
    %2155 = vmatprep.subr.bf16.mxu0 %v1866
    %2156 = vmatpush1.bf16.msra.mxu0 %v1865
    %2157 = vmatprep.subr.bf16.mxu0 %v1862
    %2158 = vmatpush1.bf16.msra.mxu0 %v1861
    %2159 = vmatprep.subr.bf16.mxu0 %v1858
    %2160 = vmatpush1.bf16.msra.mxu0 %v1857
    %2161 = vmatprep.subr.bf16.mxu0 0
    %2162 = vmatpush2.bf16.msra.mxu0 0
    %2163 = vmatprep.subr.bf16.mxu0 0
    %2164 = vmatpush2.bf16.msra.mxu0 0
    %2165 = vmatprep.subr.bf16.mxu0 0
    %2166 = vmatpush2.bf16.msra.mxu0 0
    %2167 = vmatprep.subr.bf16.mxu0 0
    %2168 = vmatpush2.bf16.msra.mxu0 0
    %2169 = vmatprep.subr.bf16.mxu0 0
    %2170 = vmatpush2.bf16.msra.mxu0 0
    %2171 = vmatprep.subr.bf16.mxu0 0
    %2172 = vmatpush2.bf16.msra.mxu0 0
    %2173 = vmatprep.subr.bf16.mxu0 0
    %2174 = vmatpush2.bf16.msra.mxu0 0
    %2175 = vmatprep.subr.bf16.mxu0 0
    %2176 = vmatpush2.bf16.msra.mxu0 0
    %2177 = vmatprep.mubr.bf16.mxu0 0
    %2178 = vmatmul.mubr.bf16.gmra.mxu0 %v2144
    %v2179 = vpop.f32.mrf.mxu0
    %v2180 = vadd.f32 0.0, %v2179
    %v2181 = vpop.f32.mrf.mxu0
    %v2182 = vadd.f32 0.0, %v2181
    %v2183 = vpop.f32.mrf.mxu0
    %v2184 = vpop.f32.mrf.mxu0
    %2185 = vdwg.mxu0
    %2186 = vmatprep.subr.bf16.mxu0 %v1888
    %2187 = vmatpush1.bf16.msra.mxu0 %v1887
    %2188 = vmatprep.subr.bf16.mxu0 %v1884
    %2189 = vmatpush1.bf16.msra.mxu0 %v1883
    %2190 = vmatprep.subr.bf16.mxu0 %v1880
    %2191 = vmatpush1.bf16.msra.mxu0 %v1879
    %2192 = vmatprep.subr.bf16.mxu0 %v1876
    %2193 = vmatpush1.bf16.msra.mxu0 %v1875
    %2194 = vmatprep.subr.bf16.mxu0 %v1872
    %2195 = vmatpush1.bf16.msra.mxu0 %v1871
    %2196 = vmatprep.subr.bf16.mxu0 %v1868
    %2197 = vmatpush1.bf16.msra.mxu0 %v1867
    %2198 = vmatprep.subr.bf16.mxu0 %v1864
    %2199 = vmatpush1.bf16.msra.mxu0 %v1863
    %2200 = vmatprep.subr.bf16.mxu0 %v1860
    %2201 = vmatpush1.bf16.msra.mxu0 %v1859
    %2202 = vmatprep.subr.bf16.mxu0 0
    %2203 = vmatpush2.bf16.msra.mxu0 0
    %2204 = vmatprep.subr.bf16.mxu0 0
    %2205 = vmatpush2.bf16.msra.mxu0 0
    %2206 = vmatprep.subr.bf16.mxu0 0
    %2207 = vmatpush2.bf16.msra.mxu0 0
    %2208 = vmatprep.subr.bf16.mxu0 0
    %2209 = vmatpush2.bf16.msra.mxu0 0
    %2210 = vmatprep.subr.bf16.mxu0 0
    %2211 = vmatpush2.bf16.msra.mxu0 0
    %2212 = vmatprep.subr.bf16.mxu0 0
    %2213 = vmatpush2.bf16.msra.mxu0 0
    %2214 = vmatprep.subr.bf16.mxu0 0
    %2215 = vmatpush2.bf16.msra.mxu0 0
    %2216 = vmatprep.subr.bf16.mxu0 0
    %2217 = vmatpush2.bf16.msra.mxu0 0
    %2218 = vmatprep.mubr.bf16.mxu0 0
    %2219 = vmatmul.mubr.bf16.gmra.mxu0 %v2144
    %v2220 = vpop.f32.mrf.mxu0
    %v2221 = vadd.f32 0.0, %v2220
    %v2222 = vpop.f32.mrf.mxu0
    %v2223 = vadd.f32 0.0, %v2222
    %v2224 = vpop.f32.mrf.mxu0
    %v2225 = vpop.f32.mrf.mxu0
    %2226 = vdwg.mxu0
    %v2227 = vadd.f32 %v2140, %v2180
    %v2228 = vadd.f32 %v2141, %v2182
    %v2229 = vadd.f32 %v2142, %v2221
    %v2230 = vadd.f32 %v2143, %v2223
    %v2231 = vsub.f32 0.0, %v2227
    %v2232 = vmul.f32 %v2231, 1.442695
    %v2233 = vpow.pop %v2232
    %v2234 = vadd.f32 %v2233, 1.0
    %v2235 = vrcp.pop %v2234
    %v2236 = vsub.f32 0.0, %v2228
    %v2237 = vmul.f32 %v2236, 1.442695
    %v2238 = vpow.pop %v2237
    %v2239 = vadd.f32 %v2238, 1.0
    %v2240 = vrcp.pop %v2239
    %v2241 = vtanh.pop %v2229
    %v2242 = vsub.f32 0.0, %v2230
    %v2243 = vmul.f32 %v2242, 1.442695
    %v2244 = vpow.pop %v2243
    %v2245 = vadd.f32 %v2244, 1.0
    %v2246 = vrcp.pop %v2245
    %v2247 = vmul.f32 %v2240, %v2137
    %v2248 = vmul.f32 %v2235, %v2241
    %v2249 = vadd.f32 %v2247, %v2248
    %v2250 = vtanh.pop %v2249
    %v2251 = vmul.f32 %v2246, %v2250
    %v2252 = vld [vmem:[#allocation2 + $0xe0] sm:$0xff]
    %v2253 = vld [vmem:[#allocation2 + $0xe8] sm:$0xff]
    %v2254 = vld [vmem:[#allocation2 + $0xf0] sm:$0xff]
    %v2255 = vld [vmem:[#allocation2 + $0xf8] sm:$0xff]
    %v2256 = vpack.c.bf16 %v2251, %v2251
    %2257 = vmatprep.subr.bf16.mxu0 %v1886
    %2258 = vmatpush1.bf16.msra.mxu0 %v1885
    %2259 = vmatprep.subr.bf16.mxu0 %v1882
    %2260 = vmatpush1.bf16.msra.mxu0 %v1881
    %2261 = vmatprep.subr.bf16.mxu0 %v1878
    %2262 = vmatpush1.bf16.msra.mxu0 %v1877
    %2263 = vmatprep.subr.bf16.mxu0 %v1874
    %2264 = vmatpush1.bf16.msra.mxu0 %v1873
    %2265 = vmatprep.subr.bf16.mxu0 %v1870
    %2266 = vmatpush1.bf16.msra.mxu0 %v1869
    %2267 = vmatprep.subr.bf16.mxu0 %v1866
    %2268 = vmatpush1.bf16.msra.mxu0 %v1865
    %2269 = vmatprep.subr.bf16.mxu0 %v1862
    %2270 = vmatpush1.bf16.msra.mxu0 %v1861
    %2271 = vmatprep.subr.bf16.mxu0 %v1858
    %2272 = vmatpush1.bf16.msra.mxu0 %v1857
    %2273 = vmatprep.subr.bf16.mxu0 0
    %2274 = vmatpush2.bf16.msra.mxu0 0
    %2275 = vmatprep.subr.bf16.mxu0 0
    %2276 = vmatpush2.bf16.msra.mxu0 0
    %2277 = vmatprep.subr.bf16.mxu0 0
    %2278 = vmatpush2.bf16.msra.mxu0 0
    %2279 = vmatprep.subr.bf16.mxu0 0
    %2280 = vmatpush2.bf16.msra.mxu0 0
    %2281 = vmatprep.subr.bf16.mxu0 0
    %2282 = vmatpush2.bf16.msra.mxu0 0
    %2283 = vmatprep.subr.bf16.mxu0 0
    %2284 = vmatpush2.bf16.msra.mxu0 0
    %2285 = vmatprep.subr.bf16.mxu0 0
    %2286 = vmatpush2.bf16.msra.mxu0 0
    %2287 = vmatprep.subr.bf16.mxu0 0
    %2288 = vmatpush2.bf16.msra.mxu0 0
    %2289 = vmatprep.mubr.bf16.mxu0 0
    %2290 = vmatmul.mubr.bf16.gmra.mxu0 %v2256
    %v2291 = vpop.f32.mrf.mxu0
    %v2292 = vadd.f32 0.0, %v2291
    %v2293 = vpop.f32.mrf.mxu0
    %v2294 = vadd.f32 0.0, %v2293
    %v2295 = vpop.f32.mrf.mxu0
    %v2296 = vpop.f32.mrf.mxu0
    %2297 = vdwg.mxu0
    %2298 = vmatprep.subr.bf16.mxu0 %v1888
    %2299 = vmatpush1.bf16.msra.mxu0 %v1887
    %2300 = vmatprep.subr.bf16.mxu0 %v1884
    %2301 = vmatpush1.bf16.msra.mxu0 %v1883
    %2302 = vmatprep.subr.bf16.mxu0 %v1880
    %2303 = vmatpush1.bf16.msra.mxu0 %v1879
    %2304 = vmatprep.subr.bf16.mxu0 %v1876
    %2305 = vmatpush1.bf16.msra.mxu0 %v1875
    %2306 = vmatprep.subr.bf16.mxu0 %v1872
    %2307 = vmatpush1.bf16.msra.mxu0 %v1871
    %2308 = vmatprep.subr.bf16.mxu0 %v1868
    %2309 = vmatpush1.bf16.msra.mxu0 %v1867
    %2310 = vmatprep.subr.bf16.mxu0 %v1864
    %2311 = vmatpush1.bf16.msra.mxu0 %v1863
    %2312 = vmatprep.subr.bf16.mxu0 %v1860
    %2313 = vmatpush1.bf16.msra.mxu0 %v1859
    %2314 = vmatprep.subr.bf16.mxu0 0
    %2315 = vmatpush2.bf16.msra.mxu0 0
    %2316 = vmatprep.subr.bf16.mxu0 0
    %2317 = vmatpush2.bf16.msra.mxu0 0
    %2318 = vmatprep.subr.bf16.mxu0 0
    %2319 = vmatpush2.bf16.msra.mxu0 0
    %2320 = vmatprep.subr.bf16.mxu0 0
    %2321 = vmatpush2.bf16.msra.mxu0 0
    %2322 = vmatprep.subr.bf16.mxu0 0
    %2323 = vmatpush2.bf16.msra.mxu0 0
    %2324 = vmatprep.subr.bf16.mxu0 0
    %2325 = vmatpush2.bf16.msra.mxu0 0
    %2326 = vmatprep.subr.bf16.mxu0 0
    %2327 = vmatpush2.bf16.msra.mxu0 0
    %2328 = vmatprep.subr.bf16.mxu0 0
    %2329 = vmatpush2.bf16.msra.mxu0 0
    %2330 = vmatprep.mubr.bf16.mxu0 0
    %2331 = vmatmul.mubr.bf16.gmra.mxu0 %v2256
    %v2332 = vpop.f32.mrf.mxu0
    %v2333 = vadd.f32 0.0, %v2332
    %v2334 = vpop.f32.mrf.mxu0
    %v2335 = vadd.f32 0.0, %v2334
    %v2336 = vpop.f32.mrf.mxu0
    %v2337 = vpop.f32.mrf.mxu0
    %2338 = vdwg.mxu0
    %v2339 = vadd.f32 %v2252, %v2292
    %v2340 = vadd.f32 %v2253, %v2294
    %v2341 = vadd.f32 %v2254, %v2333
    %v2342 = vadd.f32 %v2255, %v2335
    %v2343 = vsub.f32 0.0, %v2339
    %v2344 = vmul.f32 %v2343, 1.442695
    %v2345 = vpow.pop %v2344
    %v2346 = vadd.f32 %v2345, 1.0
    %v2347 = vrcp.pop %v2346
    %v2348 = vsub.f32 0.0, %v2340
    %v2349 = vmul.f32 %v2348, 1.442695
    %v2350 = vpow.pop %v2349
    %v2351 = vadd.f32 %v2350, 1.0
    %v2352 = vrcp.pop %v2351
    %v2353 = vtanh.pop %v2341
    %v2354 = vsub.f32 0.0, %v2342
    %v2355 = vmul.f32 %v2354, 1.442695
    %v2356 = vpow.pop %v2355
    %v2357 = vadd.f32 %v2356, 1.0
    %v2358 = vrcp.pop %v2357
    %v2359 = vmul.f32 %v2352, %v2249
    %v2360 = vmul.f32 %v2347, %v2353
    %v2361 = vadd.f32 %v2359, %v2360
    %v2362 = vtanh.pop %v2361
    %v2363 = vmul.f32 %v2358, %v2362
    %v2364 = vld [vmem:[#allocation2 + $0x120] sm:$0xff]
    %v2365 = vld [vmem:[#allocation2 + $0x128] sm:$0xff]
    %v2366 = vld [vmem:[#allocation2 + $0x130] sm:$0xff]
    %v2367 = vld [vmem:[#allocation2 + $0x138] sm:$0xff]
    %v2368 = vpack.c.bf16 %v2363, %v2363
    %2369 = vmatprep.subr.bf16.mxu0 %v1886
    %2370 = vmatpush1.bf16.msra.mxu0 %v1885
    %2371 = vmatprep.subr.bf16.mxu0 %v1882
    %2372 = vmatpush1.bf16.msra.mxu0 %v1881
    %2373 = vmatprep.subr.bf16.mxu0 %v1878
    %2374 = vmatpush1.bf16.msra.mxu0 %v1877
    %2375 = vmatprep.subr.bf16.mxu0 %v1874
    %2376 = vmatpush1.bf16.msra.mxu0 %v1873
    %2377 = vmatprep.subr.bf16.mxu0 %v1870
    %2378 = vmatpush1.bf16.msra.mxu0 %v1869
    %2379 = vmatprep.subr.bf16.mxu0 %v1866
    %2380 = vmatpush1.bf16.msra.mxu0 %v1865
    %2381 = vmatprep.subr.bf16.mxu0 %v1862
    %2382 = vmatpush1.bf16.msra.mxu0 %v1861
    %2383 = vmatprep.subr.bf16.mxu0 %v1858
    %2384 = vmatpush1.bf16.msra.mxu0 %v1857
    %2385 = vmatprep.subr.bf16.mxu0 0
    %2386 = vmatpush2.bf16.msra.mxu0 0
    %2387 = vmatprep.subr.bf16.mxu0 0
    %2388 = vmatpush2.bf16.msra.mxu0 0
    %2389 = vmatprep.subr.bf16.mxu0 0
    %2390 = vmatpush2.bf16.msra.mxu0 0
    %2391 = vmatprep.subr.bf16.mxu0 0
    %2392 = vmatpush2.bf16.msra.mxu0 0
    %2393 = vmatprep.subr.bf16.mxu0 0
    %2394 = vmatpush2.bf16.msra.mxu0 0
    %2395 = vmatprep.subr.bf16.mxu0 0
    %2396 = vmatpush2.bf16.msra.mxu0 0
    %2397 = vmatprep.subr.bf16.mxu0 0
    %2398 = vmatpush2.bf16.msra.mxu0 0
    %2399 = vmatprep.subr.bf16.mxu0 0
    %2400 = vmatpush2.bf16.msra.mxu0 0
    %2401 = vmatprep.mubr.bf16.mxu0 0
    %2402 = vmatmul.mubr.bf16.gmra.mxu0 %v2368
    %v2403 = vpop.f32.mrf.mxu0
    %v2404 = vadd.f32 0.0, %v2403
    %v2405 = vpop.f32.mrf.mxu0
    %v2406 = vadd.f32 0.0, %v2405
    %v2407 = vpop.f32.mrf.mxu0
    %v2408 = vpop.f32.mrf.mxu0
    %2409 = vdwg.mxu0
    %2410 = vmatprep.subr.bf16.mxu0 %v1888
    %2411 = vmatpush1.bf16.msra.mxu0 %v1887
    %2412 = vmatprep.subr.bf16.mxu0 %v1884
    %2413 = vmatpush1.bf16.msra.mxu0 %v1883
    %2414 = vmatprep.subr.bf16.mxu0 %v1880
    %2415 = vmatpush1.bf16.msra.mxu0 %v1879
    %2416 = vmatprep.subr.bf16.mxu0 %v1876
    %2417 = vmatpush1.bf16.msra.mxu0 %v1875
    %2418 = vmatprep.subr.bf16.mxu0 %v1872
    %2419 = vmatpush1.bf16.msra.mxu0 %v1871
    %2420 = vmatprep.subr.bf16.mxu0 %v1868
    %2421 = vmatpush1.bf16.msra.mxu0 %v1867
    %2422 = vmatprep.subr.bf16.mxu0 %v1864
    %2423 = vmatpush1.bf16.msra.mxu0 %v1863
    %2424 = vmatprep.subr.bf16.mxu0 %v1860
    %2425 = vmatpush1.bf16.msra.mxu0 %v1859
    %2426 = vmatprep.subr.bf16.mxu0 0
    %2427 = vmatpush2.bf16.msra.mxu0 0
    %2428 = vmatprep.subr.bf16.mxu0 0
    %2429 = vmatpush2.bf16.msra.mxu0 0
    %2430 = vmatprep.subr.bf16.mxu0 0
    %2431 = vmatpush2.bf16.msra.mxu0 0
    %2432 = vmatprep.subr.bf16.mxu0 0
    %2433 = vmatpush2.bf16.msra.mxu0 0
    %2434 = vmatprep.subr.bf16.mxu0 0
    %2435 = vmatpush2.bf16.msra.mxu0 0
    %2436 = vmatprep.subr.bf16.mxu0 0
    %2437 = vmatpush2.bf16.msra.mxu0 0
    %2438 = vmatprep.subr.bf16.mxu0 0
    %2439 = vmatpush2.bf16.msra.mxu0 0
    %2440 = vmatprep.subr.bf16.mxu0 0
    %2441 = vmatpush2.bf16.msra.mxu0 0
    %2442 = vmatprep.mubr.bf16.mxu0 0
    %2443 = vmatmul.mubr.bf16.gmra.mxu0 %v2368
    %v2444 = vpop.f32.mrf.mxu0
    %v2445 = vadd.f32 0.0, %v2444
    %v2446 = vpop.f32.mrf.mxu0
    %v2447 = vadd.f32 0.0, %v2446
    %v2448 = vpop.f32.mrf.mxu0
    %v2449 = vpop.f32.mrf.mxu0
    %2450 = vdwg.mxu0
    %v2451 = vadd.f32 %v2364, %v2404
    %v2452 = vadd.f32 %v2365, %v2406
    %v2453 = vadd.f32 %v2366, %v2445
    %v2454 = vadd.f32 %v2367, %v2447
    %v2455 = vsub.f32 0.0, %v2451
    %v2456 = vmul.f32 %v2455, 1.442695
    %v2457 = vpow.pop %v2456
    %v2458 = vadd.f32 %v2457, 1.0
    %v2459 = vrcp.pop %v2458
    %v2460 = vsub.f32 0.0, %v2452
    %v2461 = vmul.f32 %v2460, 1.442695
    %v2462 = vpow.pop %v2461
    %v2463 = vadd.f32 %v2462, 1.0
    %v2464 = vrcp.pop %v2463
    %v2465 = vtanh.pop %v2453
    %v2466 = vsub.f32 0.0, %v2454
    %v2467 = vmul.f32 %v2466, 1.442695
    %v2468 = vpow.pop %v2467
    %v2469 = vadd.f32 %v2468, 1.0
    %v2470 = vrcp.pop %v2469
    %v2471 = vmul.f32 %v2464, %v2361
    %v2472 = vmul.f32 %v2459, %v2465
    %v2473 = vadd.f32 %v2471, %v2472
    %v2474 = vtanh.pop %v2473
    %v2475 = vmul.f32 %v2470, %v2474
    %v2476 = vld [vmem:[#allocation2 + $0x160] sm:$0xff]
    %v2477 = vld [vmem:[#allocation2 + $0x168] sm:$0xff]
    %v2478 = vld [vmem:[#allocation2 + $0x170] sm:$0xff]
    %v2479 = vld [vmem:[#allocation2 + $0x178] sm:$0xff]
    %v2480 = vpack.c.bf16 %v2475, %v2475
    %2481 = vmatprep.subr.bf16.mxu0 %v1886
    %2482 = vmatpush1.bf16.msra.mxu0 %v1885
    %2483 = vmatprep.subr.bf16.mxu0 %v1882
    %2484 = vmatpush1.bf16.msra.mxu0 %v1881
    %2485 = vmatprep.subr.bf16.mxu0 %v1878
    %2486 = vmatpush1.bf16.msra.mxu0 %v1877
    %2487 = vmatprep.subr.bf16.mxu0 %v1874
    %2488 = vmatpush1.bf16.msra.mxu0 %v1873
    %2489 = vmatprep.subr.bf16.mxu0 %v1870
    %2490 = vmatpush1.bf16.msra.mxu0 %v1869
    %2491 = vmatprep.subr.bf16.mxu0 %v1866
    %2492 = vmatpush1.bf16.msra.mxu0 %v1865
    %2493 = vmatprep.subr.bf16.mxu0 %v1862
    %2494 = vmatpush1.bf16.msra.mxu0 %v1861
    %2495 = vmatprep.subr.bf16.mxu0 %v1858
    %2496 = vmatpush1.bf16.msra.mxu0 %v1857
    %2497 = vmatprep.subr.bf16.mxu0 0
    %2498 = vmatpush2.bf16.msra.mxu0 0
    %2499 = vmatprep.subr.bf16.mxu0 0
    %2500 = vmatpush2.bf16.msra.mxu0 0
    %2501 = vmatprep.subr.bf16.mxu0 0
    %2502 = vmatpush2.bf16.msra.mxu0 0
    %2503 = vmatprep.subr.bf16.mxu0 0
    %2504 = vmatpush2.bf16.msra.mxu0 0
    %2505 = vmatprep.subr.bf16.mxu0 0
    %2506 = vmatpush2.bf16.msra.mxu0 0
    %2507 = vmatprep.subr.bf16.mxu0 0
    %2508 = vmatpush2.bf16.msra.mxu0 0
    %2509 = vmatprep.subr.bf16.mxu0 0
    %2510 = vmatpush2.bf16.msra.mxu0 0
    %2511 = vmatprep.subr.bf16.mxu0 0
    %2512 = vmatpush2.bf16.msra.mxu0 0
    %2513 = vmatprep.mubr.bf16.mxu0 0
    %2514 = vmatmul.mubr.bf16.gmra.mxu0 %v2480
    %v2515 = vpop.f32.mrf.mxu0
    %v2516 = vadd.f32 0.0, %v2515
    %v2517 = vpop.f32.mrf.mxu0
    %v2518 = vadd.f32 0.0, %v2517
    %v2519 = vpop.f32.mrf.mxu0
    %v2520 = vpop.f32.mrf.mxu0
    %2521 = vdwg.mxu0
    %2522 = vmatprep.subr.bf16.mxu0 %v1888
    %2523 = vmatpush1.bf16.msra.mxu0 %v1887
    %2524 = vmatprep.subr.bf16.mxu0 %v1884
    %2525 = vmatpush1.bf16.msra.mxu0 %v1883
    %2526 = vmatprep.subr.bf16.mxu0 %v1880
    %2527 = vmatpush1.bf16.msra.mxu0 %v1879
    %2528 = vmatprep.subr.bf16.mxu0 %v1876
    %2529 = vmatpush1.bf16.msra.mxu0 %v1875
    %2530 = vmatprep.subr.bf16.mxu0 %v1872
    %2531 = vmatpush1.bf16.msra.mxu0 %v1871
    %2532 = vmatprep.subr.bf16.mxu0 %v1868
    %2533 = vmatpush1.bf16.msra.mxu0 %v1867
    %2534 = vmatprep.subr.bf16.mxu0 %v1864
    %2535 = vmatpush1.bf16.msra.mxu0 %v1863
    %2536 = vmatprep.subr.bf16.mxu0 %v1860
    %2537 = vmatpush1.bf16.msra.mxu0 %v1859
    %2538 = vmatprep.subr.bf16.mxu0 0
    %2539 = vmatpush2.bf16.msra.mxu0 0
    %2540 = vmatprep.subr.bf16.mxu0 0
    %2541 = vmatpush2.bf16.msra.mxu0 0
    %2542 = vmatprep.subr.bf16.mxu0 0
    %2543 = vmatpush2.bf16.msra.mxu0 0
    %2544 = vmatprep.subr.bf16.mxu0 0
    %2545 = vmatpush2.bf16.msra.mxu0 0
    %2546 = vmatprep.subr.bf16.mxu0 0
    %2547 = vmatpush2.bf16.msra.mxu0 0
    %2548 = vmatprep.subr.bf16.mxu0 0
    %2549 = vmatpush2.bf16.msra.mxu0 0
    %2550 = vmatprep.subr.bf16.mxu0 0
    %2551 = vmatpush2.bf16.msra.mxu0 0
    %2552 = vmatprep.subr.bf16.mxu0 0
    %2553 = vmatpush2.bf16.msra.mxu0 0
    %2554 = vmatprep.mubr.bf16.mxu0 0
    %2555 = vmatmul.mubr.bf16.gmra.mxu0 %v2480
    %v2556 = vpop.f32.mrf.mxu0
    %v2557 = vadd.f32 0.0, %v2556
    %v2558 = vpop.f32.mrf.mxu0
    %v2559 = vadd.f32 0.0, %v2558
    %v2560 = vpop.f32.mrf.mxu0
    %v2561 = vpop.f32.mrf.mxu0
    %2562 = vdwg.mxu0
    %v2563 = vadd.f32 %v2476, %v2516
    %v2564 = vadd.f32 %v2477, %v2518
    %v2565 = vadd.f32 %v2478, %v2557
    %v2566 = vadd.f32 %v2479, %v2559
    %v2567 = vsub.f32 0.0, %v2563
    %v2568 = vmul.f32 %v2567, 1.442695
    %v2569 = vpow.pop %v2568
    %v2570 = vadd.f32 %v2569, 1.0
    %v2571 = vrcp.pop %v2570
    %v2572 = vsub.f32 0.0, %v2564
    %v2573 = vmul.f32 %v2572, 1.442695
    %v2574 = vpow.pop %v2573
    %v2575 = vadd.f32 %v2574, 1.0
    %v2576 = vrcp.pop %v2575
    %v2577 = vtanh.pop %v2565
    %v2578 = vsub.f32 0.0, %v2566
    %v2579 = vmul.f32 %v2578, 1.442695
    %v2580 = vpow.pop %v2579
    %v2581 = vadd.f32 %v2580, 1.0
    %v2582 = vrcp.pop %v2581
    %v2583 = vmul.f32 %v2576, %v2473
    %v2584 = vmul.f32 %v2571, %v2577
    %v2585 = vadd.f32 %v2583, %v2584
    %v2586 = vtanh.pop %v2585
    %v2587 = vmul.f32 %v2582, %v2586
    %v2588 = vld [vmem:[#allocation2 + $0x1a0] sm:$0xff]
    %v2589 = vld [vmem:[#allocation2 + $0x1a8] sm:$0xff]
    %v2590 = vld [vmem:[#allocation2 + $0x1b0] sm:$0xff]
    %v2591 = vld [vmem:[#allocation2 + $0x1b8] sm:$0xff]
    %v2592 = vpack.c.bf16 %v2587, %v2587
    %2593 = vmatprep.subr.bf16.mxu0 %v1886
    %2594 = vmatpush1.bf16.msra.mxu0 %v1885
    %2595 = vmatprep.subr.bf16.mxu0 %v1882
    %2596 = vmatpush1.bf16.msra.mxu0 %v1881
    %2597 = vmatprep.subr.bf16.mxu0 %v1878
    %2598 = vmatpush1.bf16.msra.mxu0 %v1877
    %2599 = vmatprep.subr.bf16.mxu0 %v1874
    %2600 = vmatpush1.bf16.msra.mxu0 %v1873
    %2601 = vmatprep.subr.bf16.mxu0 %v1870
    %2602 = vmatpush1.bf16.msra.mxu0 %v1869
    %2603 = vmatprep.subr.bf16.mxu0 %v1866
    %2604 = vmatpush1.bf16.msra.mxu0 %v1865
    %2605 = vmatprep.subr.bf16.mxu0 %v1862
    %2606 = vmatpush1.bf16.msra.mxu0 %v1861
    %2607 = vmatprep.subr.bf16.mxu0 %v1858
    %2608 = vmatpush1.bf16.msra.mxu0 %v1857
    %2609 = vmatprep.subr.bf16.mxu0 0
    %2610 = vmatpush2.bf16.msra.mxu0 0
    %2611 = vmatprep.subr.bf16.mxu0 0
    %2612 = vmatpush2.bf16.msra.mxu0 0
    %2613 = vmatprep.subr.bf16.mxu0 0
    %2614 = vmatpush2.bf16.msra.mxu0 0
    %2615 = vmatprep.subr.bf16.mxu0 0
    %2616 = vmatpush2.bf16.msra.mxu0 0
    %2617 = vmatprep.subr.bf16.mxu0 0
    %2618 = vmatpush2.bf16.msra.mxu0 0
    %2619 = vmatprep.subr.bf16.mxu0 0
    %2620 = vmatpush2.bf16.msra.mxu0 0
    %2621 = vmatprep.subr.bf16.mxu0 0
    %2622 = vmatpush2.bf16.msra.mxu0 0
    %2623 = vmatprep.subr.bf16.mxu0 0
    %2624 = vmatpush2.bf16.msra.mxu0 0
    %2625 = vmatprep.mubr.bf16.mxu0 0
    %2626 = vmatmul.mubr.bf16.gmra.mxu0 %v2592
    %v2627 = vpop.f32.mrf.mxu0
    %v2628 = vadd.f32 0.0, %v2627
    %v2629 = vpop.f32.mrf.mxu0
    %v2630 = vadd.f32 0.0, %v2629
    %v2631 = vpop.f32.mrf.mxu0
    %v2632 = vpop.f32.mrf.mxu0
    %2633 = vdwg.mxu0
    %2634 = vmatprep.subr.bf16.mxu0 %v1888
    %2635 = vmatpush1.bf16.msra.mxu0 %v1887
    %2636 = vmatprep.subr.bf16.mxu0 %v1884
    %2637 = vmatpush1.bf16.msra.mxu0 %v1883
    %2638 = vmatprep.subr.bf16.mxu0 %v1880
    %2639 = vmatpush1.bf16.msra.mxu0 %v1879
    %2640 = vmatprep.subr.bf16.mxu0 %v1876
    %2641 = vmatpush1.bf16.msra.mxu0 %v1875
    %2642 = vmatprep.subr.bf16.mxu0 %v1872
    %2643 = vmatpush1.bf16.msra.mxu0 %v1871
    %2644 = vmatprep.subr.bf16.mxu0 %v1868
    %2645 = vmatpush1.bf16.msra.mxu0 %v1867
    %2646 = vmatprep.subr.bf16.mxu0 %v1864
    %2647 = vmatpush1.bf16.msra.mxu0 %v1863
    %2648 = vmatprep.subr.bf16.mxu0 %v1860
    %2649 = vmatpush1.bf16.msra.mxu0 %v1859
    %2650 = vmatprep.subr.bf16.mxu0 0
    %2651 = vmatpush2.bf16.msra.mxu0 0
    %2652 = vmatprep.subr.bf16.mxu0 0
    %2653 = vmatpush2.bf16.msra.mxu0 0
    %2654 = vmatprep.subr.bf16.mxu0 0
    %2655 = vmatpush2.bf16.msra.mxu0 0
    %2656 = vmatprep.subr.bf16.mxu0 0
    %2657 = vmatpush2.bf16.msra.mxu0 0
    %2658 = vmatprep.subr.bf16.mxu0 0
    %2659 = vmatpush2.bf16.msra.mxu0 0
    %2660 = vmatprep.subr.bf16.mxu0 0
    %2661 = vmatpush2.bf16.msra.mxu0 0
    %2662 = vmatprep.subr.bf16.mxu0 0
    %2663 = vmatpush2.bf16.msra.mxu0 0
    %2664 = vmatprep.subr.bf16.mxu0 0
    %2665 = vmatpush2.bf16.msra.mxu0 0
    %2666 = vmatprep.mubr.bf16.mxu0 0
    %2667 = vmatmul.mubr.bf16.gmra.mxu0 %v2592
    %v2668 = vpop.f32.mrf.mxu0
    %v2669 = vadd.f32 0.0, %v2668
    %v2670 = vpop.f32.mrf.mxu0
    %v2671 = vadd.f32 0.0, %v2670
    %v2672 = vpop.f32.mrf.mxu0
    %v2673 = vpop.f32.mrf.mxu0
    %2674 = vdwg.mxu0
    %v2675 = vadd.f32 %v2588, %v2628
    %v2676 = vadd.f32 %v2589, %v2630
    %v2677 = vadd.f32 %v2590, %v2669
    %v2678 = vadd.f32 %v2591, %v2671
    %v2679 = vsub.f32 0.0, %v2675
    %v2680 = vmul.f32 %v2679, 1.442695
    %v2681 = vpow.pop %v2680
    %v2682 = vadd.f32 %v2681, 1.0
    %v2683 = vrcp.pop %v2682
    %v2684 = vsub.f32 0.0, %v2676
    %v2685 = vmul.f32 %v2684, 1.442695
    %v2686 = vpow.pop %v2685
    %v2687 = vadd.f32 %v2686, 1.0
    %v2688 = vrcp.pop %v2687
    %v2689 = vtanh.pop %v2677
    %v2690 = vsub.f32 0.0, %v2678
    %v2691 = vmul.f32 %v2690, 1.442695
    %v2692 = vpow.pop %v2691
    %v2693 = vadd.f32 %v2692, 1.0
    %v2694 = vrcp.pop %v2693
    %v2695 = vmul.f32 %v2688, %v2585
    %v2696 = vmul.f32 %v2683, %v2689
    %v2697 = vadd.f32 %v2695, %v2696
    %v2698 = vtanh.pop %v2697
    %v2699 = vmul.f32 %v2694, %v2698
    %v2700 = vld [vmem:[#allocation2 + $0x1e0] sm:$0xff]
    %v2701 = vld [vmem:[#allocation2 + $0x1e8] sm:$0xff]
    %v2702 = vld [vmem:[#allocation2 + $0x1f0] sm:$0xff]
    %v2703 = vld [vmem:[#allocation2 + $0x1f8] sm:$0xff]
    %v2704 = vpack.c.bf16 %v2699, %v2699
    %2705 = vmatprep.subr.bf16.mxu0 %v1886
    %2706 = vmatpush1.bf16.msra.mxu0 %v1885
    %2707 = vmatprep.subr.bf16.mxu0 %v1882
    %2708 = vmatpush1.bf16.msra.mxu0 %v1881
    %2709 = vmatprep.subr.bf16.mxu0 %v1878
    %2710 = vmatpush1.bf16.msra.mxu0 %v1877
    %2711 = vmatprep.subr.bf16.mxu0 %v1874
    %2712 = vmatpush1.bf16.msra.mxu0 %v1873
    %2713 = vmatprep.subr.bf16.mxu0 %v1870
    %2714 = vmatpush1.bf16.msra.mxu0 %v1869
    %2715 = vmatprep.subr.bf16.mxu0 %v1866
    %2716 = vmatpush1.bf16.msra.mxu0 %v1865
    %2717 = vmatprep.subr.bf16.mxu0 %v1862
    %2718 = vmatpush1.bf16.msra.mxu0 %v1861
    %2719 = vmatprep.subr.bf16.mxu0 %v1858
    %2720 = vmatpush1.bf16.msra.mxu0 %v1857
    %2721 = vmatprep.subr.bf16.mxu0 0
    %2722 = vmatpush2.bf16.msra.mxu0 0
    %2723 = vmatprep.subr.bf16.mxu0 0
    %2724 = vmatpush2.bf16.msra.mxu0 0
    %2725 = vmatprep.subr.bf16.mxu0 0
    %2726 = vmatpush2.bf16.msra.mxu0 0
    %2727 = vmatprep.subr.bf16.mxu0 0
    %2728 = vmatpush2.bf16.msra.mxu0 0
    %2729 = vmatprep.subr.bf16.mxu0 0
    %2730 = vmatpush2.bf16.msra.mxu0 0
    %2731 = vmatprep.subr.bf16.mxu0 0
    %2732 = vmatpush2.bf16.msra.mxu0 0
    %2733 = vmatprep.subr.bf16.mxu0 0
    %2734 = vmatpush2.bf16.msra.mxu0 0
    %2735 = vmatprep.subr.bf16.mxu0 0
    %2736 = vmatpush2.bf16.msra.mxu0 0
    %2737 = vmatprep.mubr.bf16.mxu0 0
    %2738 = vmatmul.mubr.bf16.gmra.mxu0 %v2704
    %v2739 = vpop.f32.mrf.mxu0
    %v2740 = vadd.f32 0.0, %v2739
    %v2741 = vpop.f32.mrf.mxu0
    %v2742 = vadd.f32 0.0, %v2741
    %v2743 = vpop.f32.mrf.mxu0
    %v2744 = vpop.f32.mrf.mxu0
    %2745 = vdwg.mxu0
    %2746 = vmatprep.subr.bf16.mxu0 %v1888
    %2747 = vmatpush1.bf16.msra.mxu0 %v1887
    %2748 = vmatprep.subr.bf16.mxu0 %v1884
    %2749 = vmatpush1.bf16.msra.mxu0 %v1883
    %2750 = vmatprep.subr.bf16.mxu0 %v1880
    %2751 = vmatpush1.bf16.msra.mxu0 %v1879
    %2752 = vmatprep.subr.bf16.mxu0 %v1876
    %2753 = vmatpush1.bf16.msra.mxu0 %v1875
    %2754 = vmatprep.subr.bf16.mxu0 %v1872
    %2755 = vmatpush1.bf16.msra.mxu0 %v1871
    %2756 = vmatprep.subr.bf16.mxu0 %v1868
    %2757 = vmatpush1.bf16.msra.mxu0 %v1867
    %2758 = vmatprep.subr.bf16.mxu0 %v1864
    %2759 = vmatpush1.bf16.msra.mxu0 %v1863
    %2760 = vmatprep.subr.bf16.mxu0 %v1860
    %2761 = vmatpush1.bf16.msra.mxu0 %v1859
    %2762 = vmatprep.subr.bf16.mxu0 0
    %2763 = vmatpush2.bf16.msra.mxu0 0
    %2764 = vmatprep.subr.bf16.mxu0 0
    %2765 = vmatpush2.bf16.msra.mxu0 0
    %2766 = vmatprep.subr.bf16.mxu0 0
    %2767 = vmatpush2.bf16.msra.mxu0 0
    %2768 = vmatprep.subr.bf16.mxu0 0
    %2769 = vmatpush2.bf16.msra.mxu0 0
    %2770 = vmatprep.subr.bf16.mxu0 0
    %2771 = vmatpush2.bf16.msra.mxu0 0
    %2772 = vmatprep.subr.bf16.mxu0 0
    %2773 = vmatpush2.bf16.msra.mxu0 0
    %2774 = vmatprep.subr.bf16.mxu0 0
    %2775 = vmatpush2.bf16.msra.mxu0 0
    %2776 = vmatprep.subr.bf16.mxu0 0
    %2777 = vmatpush2.bf16.msra.mxu0 0
    %2778 = vmatprep.mubr.bf16.mxu0 0
    %2779 = vmatmul.mubr.bf16.gmra.mxu0 %v2704
    %v2780 = vpop.f32.mrf.mxu0
    %v2781 = vadd.f32 0.0, %v2780
    %v2782 = vpop.f32.mrf.mxu0
    %v2783 = vadd.f32 0.0, %v2782
    %v2784 = vpop.f32.mrf.mxu0
    %v2785 = vpop.f32.mrf.mxu0
    %2786 = vdwg.mxu0
    %v2787 = vadd.f32 %v2700, %v2740
    %v2788 = vadd.f32 %v2701, %v2742
    %v2789 = vadd.f32 %v2702, %v2781
    %v2790 = vadd.f32 %v2703, %v2783
    %v2791 = vsub.f32 0.0, %v2787
    %v2792 = vmul.f32 %v2791, 1.442695
    %v2793 = vpow.pop %v2792
    %v2794 = vadd.f32 %v2793, 1.0
    %v2795 = vrcp.pop %v2794
    %v2796 = vsub.f32 0.0, %v2788
    %v2797 = vmul.f32 %v2796, 1.442695
    %v2798 = vpow.pop %v2797
    %v2799 = vadd.f32 %v2798, 1.0
    %v2800 = vrcp.pop %v2799
    %v2801 = vtanh.pop %v2789
    %v2802 = vsub.f32 0.0, %v2790
    %v2803 = vmul.f32 %v2802, 1.442695
    %v2804 = vpow.pop %v2803
    %v2805 = vadd.f32 %v2804, 1.0
    %v2806 = vrcp.pop %v2805
    %v2807 = vmul.f32 %v2800, %v2697
    %v2808 = vmul.f32 %v2795, %v2801
    %v2809 = vadd.f32 %v2807, %v2808
    %v2810 = vtanh.pop %v2809
    %v2811 = vmul.f32 %v2806, %v2810
    %v2812 = vpack.c.bf16 %v2811, %v2811
    %v2813 = vld [vmem:[%s5] sm:$0xf]
    %v2814 = vld [vmem:[%s5 + $0x4] sm:$0xf]
    %v2815 = vld [vmem:[%s5 + $0x8] sm:$0xf]
    %v2816 = vld [vmem:[%s5 + $0xc] sm:$0xf]
    %v2817 = vld [vmem:[%s5 + $0x10] sm:$0xf]
    %v2818 = vld [vmem:[%s5 + $0x14] sm:$0xf]
    %v2819 = vld [vmem:[%s5 + $0x18] sm:$0xf]
    %v2820 = vld [vmem:[%s5 + $0x1c] sm:$0xf]
    %v2821 = vld [vmem:[%s5 + $0x20] sm:$0xf]
    %v2822 = vld [vmem:[%s5 + $0x24] sm:$0xf]
    %v2823 = vld [vmem:[%s5 + $0x28] sm:$0xf]
    %v2824 = vld [vmem:[%s5 + $0x2c] sm:$0xf]
    %v2825 = vld [vmem:[%s5 + $0x30] sm:$0xf]
    %v2826 = vld [vmem:[%s5 + $0x34] sm:$0xf]
    %v2827 = vld [vmem:[%s5 + $0x38] sm:$0xf]
    %v2828 = vld [vmem:[%s5 + $0x3c] sm:$0xf]
    %v2829 = vld [vmem:[#allocation9] sm:$0x1]
    %v2831 = vlaneseq
    %v2832 = vshrl.u32 %v2831, 7
    %v2833 = vsub.s32 0, %v2832
    %v2834 = vrot.slane %v2829, %v2833
    %v2852 = vunpack.c.l.b16 %v2813
    %v2853 = vunpack.c.l.b16 %v2814
    %v2854 = vunpack.c.l.b16 %v2815
    %v2855 = vunpack.c.l.b16 %v2816
    %v2856 = vunpack.c.l.b16 %v2817
    %v2857 = vunpack.c.l.b16 %v2818
    %v2858 = vunpack.c.l.b16 %v2819
    %v2859 = vunpack.c.l.b16 %v2820
    %v2860 = vunpack.c.l.b16 %v2821
    %v2861 = vunpack.c.l.b16 %v2822
    %v2862 = vunpack.c.l.b16 %v2823
    %v2863 = vunpack.c.l.b16 %v2824
    %v2864 = vunpack.c.l.b16 %v2825
    %v2865 = vunpack.c.l.b16 %v2826
    %v2866 = vunpack.c.l.b16 %v2827
    %v2867 = vunpack.c.l.b16 %v2828
    %v2868 = vpack.c.b16 %v2853, %v2852
    %v2869 = vpack.c.b16 %v2855, %v2854
    %v2870 = vpack.c.b16 %v2857, %v2856
    %v2871 = vpack.c.b16 %v2859, %v2858
    %v2872 = vpack.c.b16 %v2861, %v2860
    %v2873 = vpack.c.b16 %v2863, %v2862
    %v2874 = vpack.c.b16 %v2865, %v2864
    %v2875 = vpack.c.b16 %v2867, %v2866
    %2884 = vmatprep.subr.bf16.mxu0 0
    %2885 = vmatpush1.bf16.msra.mxu0 %v2875
    %2886 = vmatprep.subr.bf16.mxu0 0
    %2887 = vmatpush1.bf16.msra.mxu0 %v2874
    %2888 = vmatprep.subr.bf16.mxu0 0
    %2889 = vmatpush1.bf16.msra.mxu0 %v2873
    %2890 = vmatprep.subr.bf16.mxu0 0
    %2891 = vmatpush1.bf16.msra.mxu0 %v2872
    %2892 = vmatprep.subr.bf16.mxu0 0
    %2893 = vmatpush1.bf16.msra.mxu0 %v2871
    %2894 = vmatprep.subr.bf16.mxu0 0
    %2895 = vmatpush1.bf16.msra.mxu0 %v2870
    %2896 = vmatprep.subr.bf16.mxu0 0
    %2897 = vmatpush1.bf16.msra.mxu0 %v2869
    %2898 = vmatprep.subr.bf16.mxu0 0
    %2899 = vmatpush1.bf16.msra.mxu0 %v2868
    %2900 = vmatprep.subr.bf16.mxu0 0
    %2901 = vmatpush2.bf16.msra.mxu0 0
    %2902 = vmatprep.subr.bf16.mxu0 0
    %2903 = vmatpush2.bf16.msra.mxu0 0
    %2904 = vmatprep.subr.bf16.mxu0 0
    %2905 = vmatpush2.bf16.msra.mxu0 0
    %2906 = vmatprep.subr.bf16.mxu0 0
    %2907 = vmatpush2.bf16.msra.mxu0 0
    %2908 = vmatprep.subr.bf16.mxu0 0
    %2909 = vmatpush2.bf16.msra.mxu0 0
    %2910 = vmatprep.subr.bf16.mxu0 0
    %2911 = vmatpush2.bf16.msra.mxu0 0
    %2912 = vmatprep.subr.bf16.mxu0 0
    %2913 = vmatpush2.bf16.msra.mxu0 0
    %2914 = vmatprep.subr.bf16.mxu0 0
    %2915 = vmatpush2.bf16.msra.mxu0 0
    %2916 = vmatprep.mubr.bf16.mxu0 0
    %2917 = vmatmul.mubr.bf16.gmra.mxu0 %v2812
    %v2918 = vpop.f32.mrf.mxu0
    %v2919 = vadd.f32 %v2834, %v2918
    %v2920 = vpop.f32.mrf.mxu0
    %v2921 = vpop.f32.mrf.mxu0
    %v2922 = vpop.f32.mrf.mxu0
    %2923 = vdwg.mxu0
    %v2924 = vxor.u32 %v2919, 2147483648
    %v2925 = vmul.f32 %v2924, 1.442695
    %v2926 = vpow.pop %v2925
    %v2927 = vadd.f32 %v2926, 1.0
    %v2928 = vrcp.pop %v2927
    %v2929 = vmul.f32 1.0, %v2928
    %v2930 = vpack.c.bf16 %v2929, %v2929
    %v2931 = vld [vmem:[%s7] sm:$0xf]
    %v2932 = vld [vmem:[%s7 + $0x4] sm:$0xf]
    %v2933 = vld [vmem:[%s7 + $0x8] sm:$0xf]
    %v2934 = vld [vmem:[%s7 + $0xc] sm:$0xf]
    %v2935 = vld [vmem:[%s7 + $0x10] sm:$0xf]
    %v2936 = vld [vmem:[%s7 + $0x14] sm:$0xf]
    %v2937 = vld [vmem:[%s7 + $0x18] sm:$0xf]
    %v2938 = vld [vmem:[%s7 + $0x1c] sm:$0xf]
    %v2939 = vld [vmem:[#allocation11] sm:$0x1]
    %v2941 = vlaneseq
    %v2942 = vshrl.u32 %v2941, 7
    %v2943 = vsub.s32 0, %v2942
    %v2944 = vrot.slane %v2939, %v2943
    %v2954 = vunpack.c.l.b16 %v2931
    %v2955 = vunpack.c.l.b16 %v2932
    %v2956 = vunpack.c.l.b16 %v2933
    %v2957 = vunpack.c.l.b16 %v2934
    %v2958 = vunpack.c.l.b16 %v2935
    %v2959 = vunpack.c.l.b16 %v2936
    %v2960 = vunpack.c.l.b16 %v2937
    %v2961 = vunpack.c.l.b16 %v2938
    %v2962 = vpack.c.b16 %v2955, %v2954
    %v2963 = vpack.c.b16 %v2957, %v2956
    %v2964 = vpack.c.b16 %v2959, %v2958
    %v2965 = vpack.c.b16 %v2961, %v2960
    %vm2970 = vcmask 523264
    %v2972 = vsel %vm2970, %v2930, 0
    %2974 = vmatprep.subr.bf16.mxu0 0
    %2975 = vmatpush1.bf16.msra.mxu0 0
    %2976 = vmatprep.subr.bf16.mxu0 0
    %2977 = vmatpush1.bf16.msra.mxu0 0
    %2978 = vmatprep.subr.bf16.mxu0 0
    %2979 = vmatpush1.bf16.msra.mxu0 0
    %2980 = vmatprep.subr.bf16.mxu0 0
    %2981 = vmatpush1.bf16.msra.mxu0 0
    %2982 = vmatprep.subr.bf16.mxu0 0
    %2983 = vmatpush1.bf16.msra.mxu0 %v2965
    %2984 = vmatprep.subr.bf16.mxu0 0
    %2985 = vmatpush1.bf16.msra.mxu0 %v2964
    %2986 = vmatprep.subr.bf16.mxu0 0
    %2987 = vmatpush1.bf16.msra.mxu0 %v2963
    %2988 = vmatprep.subr.bf16.mxu0 0
    %2989 = vmatpush1.bf16.msra.mxu0 %v2962
    %2990 = vmatprep.subr.bf16.mxu0 0
    %2991 = vmatpush2.bf16.msra.mxu0 0
    %2992 = vmatprep.subr.bf16.mxu0 0
    %2993 = vmatpush2.bf16.msra.mxu0 0
    %2994 = vmatprep.subr.bf16.mxu0 0
    %2995 = vmatpush2.bf16.msra.mxu0 0
    %2996 = vmatprep.subr.bf16.mxu0 0
    %2997 = vmatpush2.bf16.msra.mxu0 0
    %2998 = vmatprep.subr.bf16.mxu0 0
    %2999 = vmatpush2.bf16.msra.mxu0 0
    %3000 = vmatprep.subr.bf16.mxu0 0
    %3001 = vmatpush2.bf16.msra.mxu0 0
    %3002 = vmatprep.subr.bf16.mxu0 0
    %3003 = vmatpush2.bf16.msra.mxu0 0
    %3004 = vmatprep.subr.bf16.mxu0 0
    %3005 = vmatpush2.bf16.msra.mxu0 0
    %3006 = vmatprep.mubr.bf16.mxu0 0
    %3007 = vmatmul.mubr.bf16.gmra.mxu0 %v2972
    %v3008 = vpop.f32.mrf.mxu0
    %v3009 = vadd.f32 %v2944, %v3008
    %v3010 = vpop.f32.mrf.mxu0
    %v3011 = vpop.f32.mrf.mxu0
    %v3012 = vpop.f32.mrf.mxu0
    %3013 = vdwg.mxu0
    %v3014 = vtanh.pop %v3009
    %v3015 = vpack.c.bf16 %v3014, %v3014
    %v3016 = vld [vmem:[%s9] sm:$0xf]
    %v3017 = vld [vmem:[%s9 + $0x4] sm:$0xf]
    %v3018 = vld [vmem:[%s9 + $0x8] sm:$0xf]
    %v3019 = vld [vmem:[%s9 + $0xc] sm:$0xf]
    %v3020 = vld [vmem:[%s9 + $0x10] sm:$0xf]
    %v3021 = vld [vmem:[%s9 + $0x14] sm:$0xf]
    %v3022 = vld [vmem:[%s9 + $0x18] sm:$0xf]
    %v3023 = vld [vmem:[%s9 + $0x1c] sm:$0xf]
    %v3024 = vld [vmem:[%s10] sm:$0x1]
    %v3026 = vlaneseq
    %v3027 = vshrl.u32 %v3026, 7
    %v3028 = vsub.s32 0, %v3027
    %v3029 = vrot.slane %v3024, %v3028
    %v3039 = vunpack.c.l.b16 %v3016
    %v3040 = vunpack.c.l.b16 %v3017
    %v3041 = vunpack.c.l.b16 %v3018
    %v3042 = vunpack.c.l.b16 %v3019
    %v3043 = vunpack.c.l.b16 %v3020
    %v3044 = vunpack.c.l.b16 %v3021
    %v3045 = vunpack.c.l.b16 %v3022
    %v3046 = vunpack.c.l.b16 %v3023
    %v3047 = vpack.c.b16 %v3040, %v3039
    %v3048 = vpack.c.b16 %v3042, %v3041
    %v3049 = vpack.c.b16 %v3044, %v3043
    %v3050 = vpack.c.b16 %v3046, %v3045
    %v3056 = vsel %vm2970, %v3015, 0
    %3058 = vmatprep.subr.bf16.mxu0 0
    %3059 = vmatpush1.bf16.msra.mxu0 0
    %3060 = vmatprep.subr.bf16.mxu0 0
    %3061 = vmatpush1.bf16.msra.mxu0 0
    %3062 = vmatprep.subr.bf16.mxu0 0
    %3063 = vmatpush1.bf16.msra.mxu0 0
    %3064 = vmatprep.subr.bf16.mxu0 0
    %3065 = vmatpush1.bf16.msra.mxu0 0
    %3066 = vmatprep.subr.bf16.mxu0 0
    %3067 = vmatpush1.bf16.msra.mxu0 %v3050
    %3068 = vmatprep.subr.bf16.mxu0 0
    %3069 = vmatpush1.bf16.msra.mxu0 %v3049
    %3070 = vmatprep.subr.bf16.mxu0 0
    %3071 = vmatpush1.bf16.msra.mxu0 %v3048
    %3072 = vmatprep.subr.bf16.mxu0 0
    %3073 = vmatpush1.bf16.msra.mxu0 %v3047
    %3074 = vmatprep.subr.bf16.mxu0 0
    %3075 = vmatpush2.bf16.msra.mxu0 0
    %3076 = vmatprep.subr.bf16.mxu0 0
    %3077 = vmatpush2.bf16.msra.mxu0 0
    %3078 = vmatprep.subr.bf16.mxu0 0
    %3079 = vmatpush2.bf16.msra.mxu0 0
    %3080 = vmatprep.subr.bf16.mxu0 0
    %3081 = vmatpush2.bf16.msra.mxu0 0
    %3082 = vmatprep.subr.bf16.mxu0 0
    %3083 = vmatpush2.bf16.msra.mxu0 0
    %3084 = vmatprep.subr.bf16.mxu0 0
    %3085 = vmatpush2.bf16.msra.mxu0 0
    %3086 = vmatprep.subr.bf16.mxu0 0
    %3087 = vmatpush2.bf16.msra.mxu0 0
    %3088 = vmatprep.subr.bf16.mxu0 0
    %3089 = vmatpush2.bf16.msra.mxu0 0
    %3090 = vmatprep.mubr.bf16.mxu0 0
    %3091 = vmatmul.mubr.bf16.gmra.mxu0 %v3056
    %v3092 = vpop.f32.mrf.mxu0
    %v3093 = vadd.f32 %v3029, %v3092
    %v3094 = vpop.f32.mrf.mxu0
    %v3095 = vpop.f32.mrf.mxu0
    %v3096 = vpop.f32.mrf.mxu0
    %3097 = vdwg.mxu0
    %v3098 = vxor.u32 %v3093, 2147483648
    %v3099 = vmul.f32 %v3098, 1.442695
    %v3100 = vpow.pop %v3099
    %v3101 = vadd.f32 %v3100, 1.0
    %v3102 = vrcp.pop %v3101
    %v3103 = vmul.f32 1.0, %v3102
    %3104 = vst.msk [vmem:[#allocation12] sm:$0xff] %vm268, %v3103
    // Predicated region
    $region66: #{tpu_custom_call.1} parent=1 // pred_check
      _
    $region67: #{tpu_custom_call.1} parent=1 // pred_check_branch
      %3106 = sbr.rel (0) target = $region69
    $region68: #{tpu_custom_call.1} parent=1 // pred_region
      %s3108 = ssub.s32 128, 128
      %3109 = vsyncadd [#allocation5], %s3108
      %s3111 = sshll.u32 [#allocation12], 4
      %s3112 = int_to_ptr.vmem [resolvable:$true] %s3111
      %3114 = dma.vmem_to_hbm [thread:$0]  %s3112, 128, %s11, [#allocation5]
    $region69: #{tpu_custom_call.1} parent=1 // pred_fallthru
      _
    // Predicated region
    $region70: #{tpu_custom_call.1} parent=1 // pred_check
      _
    $region71: #{tpu_custom_call.1} parent=1 // pred_check_branch
      %3116 = sbr.rel (0) target = $region73
    $region72: #{tpu_custom_call.1} parent=1 // pred_region
      %3117 = dma.done [#allocation5], 128
    $region73: #{tpu_custom_call.1} parent=1 // pred_fallthru
      _
    %3118 = vsyncpa [#allocation4], 1
    %3119 = vsyncpa [#allocation7], 1
    %3120 = vsyncpa [#allocation10], 1
    %3121 = vsyncpa [#allocation5], 1

</llo_original>
